<compile_context>
chip_gen: v5e
topology: v5e:2x2
jax: 0.10.0
libtpu: 0.0.40
codegen_flags: <defaults>
</compile_context>

<pallas_src>
import functools

import numpy as np

import jax
import jax.numpy as jnp
from jax.experimental import pallas as pl
from jax.experimental.pallas import tpu as pltpu

_HI = jax.lax.Precision.HIGHEST


def _round_up(x, m):
    return (x + m - 1) // m * m


class ConvSE3FuseLevel:
    FULL = 2
    PARTIAL = 1
    NONE = 0


# -----------------------------------------------------------------------------
# Fused kernels
# -----------------------------------------------------------------------------
def _radial_mlp(x_ref, w1_ref, b1_ref, w2_ref, b2_ref, w3r_ref, *, edge_dim, cdt):
    """RadialProfile MLP (use_layer_norm=False).  The last (bias-free) layer's
    weight columns are pre-replicated (w3_rep), so the returned value is the
    radial weights already laid out for the fused per-edge contraction."""
    f32 = jnp.float32
    x = x_ref[...].astype(f32)
    if edge_dim <= 4:
        # K = edge_dim is tiny (usually 1): VPU broadcast-FMA instead of a
        # degenerate MXU matmul.  TODO(synk): crossover vs. jnp.dot for
        # 4 < edge_dim < 16 picked heuristically, not measured.
        h = x[:, 0:1] * w1_ref[0:1, :]
        for d in range(1, edge_dim):
            h = h + x[:, d:d + 1] * w1_ref[d:d + 1, :]
    else:
        h = jnp.dot(x, w1_ref[...], preferred_element_type=f32)
    h = jnp.maximum(h + b1_ref[...], 0.0).astype(cdt)
    h = jnp.dot(h, w2_ref[...], preferred_element_type=f32) + b2_ref[...]
    h = jnp.maximum(h, 0.0).astype(cdt)
    return jnp.dot(h, w3r_ref[...], preferred_element_type=f32).astype(cdt)


def _fused_basis_kernel(x_ref, feat_ref, basis_ref,
                        w1_ref, b1_ref, w2_ref, b2_ref, w3r_ref,
                        r1_ref, r2_ref, c1_ref, c2_ref, o_ref,
                        *, edge_dim, compute_dtype):
    """out[e,o,p] = sum_{c,f,d} rw[e,o,(c,f)] * feat[e,c,d] * basis[e,d,f,p].

    All per-edge structure is expressed as matmuls against constant 0/1
    matrices so the MXU does the work with the edge axis on sublanes."""
    cdt = compute_dtype
    f32 = jnp.float32

    # Radial weights, already replicated over p:  rw_rep[e, (o,k,p)] = rw[e,(o,k)]
    rw_rep = _radial_mlp(x_ref, w1_ref, b1_ref, w2_ref, b2_ref, w3r_ref,
                         edge_dim=edge_dim, cdt=cdt)                  # (T, co*ci*F*P)

    # Stage 1: tmp[e,(c,f),p] = sum_d feat[e,c,d] * basis[e,d,f,p]
    feat_rep = jnp.dot(feat_ref[...].astype(cdt), r1_ref[...],
                       preferred_element_type=f32).astype(cdt)        # (T, ci*D*F*P)
    basis_rep = jnp.dot(basis_ref[...].astype(cdt), r2_ref[...],
                        preferred_element_type=f32).astype(cdt)       # (T, ci*D*F*P)
    # c1 also carries the (k,p) -> (o,k,p) replication needed by stage 2.
    tmp_rep = jnp.dot(feat_rep * basis_rep, c1_ref[...],
                      preferred_element_type=f32).astype(cdt)         # (T, co*ci*F*P)

    # Stage 2: out[e,o,p] = sum_k rw[e,o,k] * tmp[e,k,p]   (p < out_dim kept by c2)
    o_ref[...] = jnp.dot(rw_rep * tmp_rep, c2_ref[...],
                         preferred_element_type=f32).astype(o_ref.dtype)


def _fused_nobasis_kernel(x_ref, feat_ref,
                          w1_ref, b1_ref, w2_ref, b2_ref, w3r_ref,
                          r1_ref, c2_ref, o_ref,
                          *, edge_dim, compute_dtype):
    """out[e,o,d] = sum_k rw[e,o,k] * feat[e,k,d]   (basis=None path)."""
    cdt = compute_dtype
    f32 = jnp.float32
    rw_rep = _radial_mlp(x_ref, w1_ref, b1_ref, w2_ref, b2_ref, w3r_ref,
                         edge_dim=edge_dim, cdt=cdt)                  # (T, co*ci*F*D)
    feat_rep = jnp.dot(feat_ref[...].astype(cdt), r1_ref[...],
                       preferred_element_type=f32).astype(cdt)        # (T, co*ci*F*D)
    o_ref[...] = jnp.dot(rw_rep * feat_rep, c2_ref[...],
                         preferred_element_type=f32).astype(o_ref.dtype)


# -----------------------------------------------------------------------------
# One-time parameter preparation (hoisted out of the per-call path)
# -----------------------------------------------------------------------------
def _repeat_cols(n, r):
    # maps (E, n) -> (E, n*r) with out[:, i*r + j] = in[:, i]
    return np.kron(np.eye(n, dtype=np.float32), np.ones((1, r), np.float32))


def _tile_cols(n, r):
    # maps (E, n) -> (E, r*n) with out[:, j*n + i] = in[:, i]
    return np.tile(np.eye(n, dtype=np.float32), (1, r))


def _pad_mlp_params(params, edge_dim, mid_dim, cdt):
    f32 = jnp.float32
    mid_p = _round_up(mid_dim, 128)
    w1 = jnp.asarray(params["w1"], f32)
    b1 = jnp.asarray(params["b1"], f32).reshape(1, -1)
    w2 = jnp.asarray(params["w2"], f32)
    b2 = jnp.asarray(params["b2"], f32).reshape(1, -1)
    # Zero padding: padded lanes stay exactly zero through every ReLU/matmul.
    w1p = jnp.zeros((edge_dim, mid_p), f32).at[:, :mid_dim].set(w1)
    b1p = jnp.zeros((1, mid_p), f32).at[:, :mid_dim].set(b1)
    w2p = jnp.zeros((mid_p, mid_p), f32).at[:mid_dim, :mid_dim].set(w2).astype(cdt)
    b2p = jnp.zeros((1, mid_p), f32).at[:, :mid_dim].set(b2)
    return w1p, b1p, w2p, b2p, mid_p


def _pad_w3_rep(params, mid_dim, mid_p, repeat, cdt):
    # Fusing the "(o,k) -> (o,k,inner)" lane replication into the last MLP
    # layer: replicating output columns of a matmul == replicating the columns
    # of its weight matrix (exact copies, zero runtime cost).
    f32 = jnp.float32
    w3 = jnp.asarray(params["w3"], f32)                    # (mid, co*ci*F)
    w3r = jnp.repeat(w3, repeat, axis=1)                   # (mid, co*ci*F*repeat)
    return jnp.zeros((mid_p, w3r.shape[1]), f32).at[:mid_dim, :].set(w3r).astype(cdt)


def make_fused_basis_params(params, *, channels_in, channels_out, freq_sum,
                            in_dim, basis_last,
                            fuse_level=ConvSE3FuseLevel.FULL, use_bf16=True):
    ci, co, F, D, P = channels_in, channels_out, freq_sum, in_dim, basis_last
    edge_dim, mid_dim = params["w1"].shape
    out_dim = P if fuse_level == ConvSE3FuseLevel.FULL else P + P % 2 - 1
    cdt = jnp.bfloat16 if use_bf16 else jnp.float32

    w1p, b1p, w2p, b2p, mid_p = _pad_mlp_params(params, edge_dim, mid_dim, cdt)
    w3rp = _pad_w3_rep(params, mid_dim, mid_p, P, cdt)     # rw columns repeated P times

    FP = F * P
    # stage-1 expansion onto the joint index (c, d, f, p):
    R1 = _repeat_cols(ci * D, FP)                          # feat (c,d)   -> (c,d,f,p)
    R2 = _tile_cols(D * FP, ci)                            # basis (d,f,p)-> (c,d,f,p)
    # contraction over d, pre-fused with the (k,p) -> (o,k,p) replication:
    C1 = np.kron(np.eye(ci, dtype=np.float32),
                 np.kron(np.ones((D, 1), np.float32),
                         np.eye(FP, dtype=np.float32)))    # (ci*D*F*P, ci*F*P)
    R4 = _tile_cols(ci * FP, co)                           # (ci*F*P, co*ci*F*P)
    C1R4 = C1 @ R4
    # stage-2 contraction over k=(c,f), keeping only p < out_dim:
    C2 = np.kron(np.eye(co, dtype=np.float32),
                 np.kron(np.ones((ci * F, 1), np.float32),
                         np.eye(P, dtype=np.float32)[:, :out_dim]))

    consts = (w1p, b1p, w2p, b2p, w3rp,
              jnp.asarray(R1, cdt), jnp.asarray(R2, cdt),
              jnp.asarray(C1R4, cdt), jnp.asarray(C2, cdt))
    return dict(kind="basis", consts=consts, edge_dim=int(edge_dim),
                ci=ci, co=co, F=F, D=D, P=P, out_dim=out_dim,
                expand_cols=ci * D * FP, compute_dtype=cdt)


def make_fused_nobasis_params(params, *, channels_in, channels_out, freq_sum,
                              in_dim, use_bf16=True):
    ci, co, F, D = channels_in, channels_out, freq_sum, in_dim
    edge_dim, mid_dim = params["w1"].shape
    cdt = jnp.bfloat16 if use_bf16 else jnp.float32

    w1p, b1p, w2p, b2p, mid_p = _pad_mlp_params(params, edge_dim, mid_dim, cdt)
    w3rp = _pad_w3_rep(params, mid_dim, mid_p, D, cdt)     # rw columns repeated D times
    R1 = _tile_cols(ci * F * D, co)                        # feat (k,d) -> (o,k,d)
    C2 = np.kron(np.eye(co, dtype=np.float32),
                 np.kron(np.ones((ci * F, 1), np.float32),
                         np.eye(D, dtype=np.float32)))     # sum over k

    consts = (w1p, b1p, w2p, b2p, w3rp, jnp.asarray(R1, cdt), jnp.asarray(C2, cdt))
    return dict(kind="nobasis", consts=consts, edge_dim=int(edge_dim),
                ci=ci, co=co, F=F, D=D, out_dim=D,
                expand_cols=co * ci * F * D, compute_dtype=cdt)


# -----------------------------------------------------------------------------
# Launcher
# -----------------------------------------------------------------------------
def _pick_tile_e(E, tile_e):
    t = max(8, (min(int(tile_e), _round_up(E, 8)) // 8) * 8)
    ncores = 1
    try:
        ncores = int(getattr(jax.devices()[0], "num_cores", 1) or 1)
    except Exception:  # pragma: no cover - defensive
        ncores = 1
    if ncores > 1:
        # Multi-TensorCore chip: keep >= ncores grid steps so the "parallel"
        # axis can be sharded across cores.  Single-TC parts keep full tiles.
        t = min(t, max(8, _round_up(-(-E // ncores), 8)))
    return t


def _vmem_limit_bytes(tile_e, in_cols, out_cols, expand_cols, const_bytes):
    stream = 2 * tile_e * (in_cols + out_cols) * 4                 # double-buffered blocks
    temps = 8 * tile_e * max(_round_up(max(expand_cols, 1), 128), 256) * 4
    total = stream + temps + int(const_bytes) + (4 << 20)
    return int(min(max(total, 32 << 20), 56 << 20))


def _launch_fused(kernel, data_arrays, const_arrays, *, E, out_cols, out_dtype,
                  tile_e, expand_cols):
    tile_e = _pick_tile_e(E, tile_e)
    grid = (pl.cdiv(E, tile_e),)          # ragged E: last block is clipped on store
    in_cols = sum(int(a.shape[1]) for a in data_arrays)
    const_bytes = sum(int(np.prod(c.shape)) * c.dtype.itemsize for c in const_arrays)

    data_specs = [pl.BlockSpec((tile_e, int(a.shape[1])), lambda i: (i, 0))
                  for a in data_arrays]
    # Constant-index blocks: fetched once, stay resident in VMEM across steps.
    const_specs = [pl.BlockSpec(tuple(int(s) for s in c.shape), lambda i: (0, 0))
                   for c in const_arrays]

    return pl.pallas_call(
        kernel,
        out_shape=jax.ShapeDtypeStruct((E, out_cols), out_dtype),
        grid_spec=pltpu.PrefetchScalarGridSpec(
            num_scalar_prefetch=0,
            grid=grid,
            in_specs=data_specs + const_specs,
            out_specs=pl.BlockSpec((tile_e, out_cols), lambda i: (i, 0)),
        ),
        compiler_params=pltpu.CompilerParams(
            dimension_semantics=("parallel",),
            vmem_limit_bytes=_vmem_limit_bytes(tile_e, in_cols, out_cols,
                                               expand_cols, const_bytes),
        ),
    )(*data_arrays, *const_arrays)


# -----------------------------------------------------------------------------
# VersatileConvSE3 forward (fully fused)
# -----------------------------------------------------------------------------
def versatile_conv_se3(features, invariant_edge_feats, basis, prepared, *, tile_e=512):
    """JAX/Pallas port of VersatileConvSE3.forward.

    features:             (E, ci, in_dim)   [or (E, ci*freq_sum, in_dim) if basis is None]
    invariant_edge_feats: (E, edge_dim)
    basis:                (E, in_dim, freq_sum, basis_last) or None
    prepared:             output of make_fused_basis_params / make_fused_nobasis_params
    """
    E = features.shape[0]
    cfg = prepared
    out_dtype = features.dtype

    if basis is not None:
        assert cfg["kind"] == "basis", "prepared params were built for basis=None"
        ci, co, D = cfg["ci"], cfg["co"], cfg["D"]
        F, P, out_dim = cfg["F"], cfg["P"], cfg["out_dim"]
        feat2d = features.reshape(E, ci * D)
        basis2d = basis.reshape(E, D * F * P)
        kernel = functools.partial(_fused_basis_kernel, edge_dim=cfg["edge_dim"],
                                   compute_dtype=cfg["compute_dtype"])
        out2d = _launch_fused(kernel, [invariant_edge_feats, feat2d, basis2d],
                              cfg["consts"], E=E, out_cols=co * out_dim,
                              out_dtype=out_dtype, tile_e=tile_e,
                              expand_cols=cfg["expand_cols"])
        return out2d.reshape(E, co, out_dim)
    else:
        assert cfg["kind"] == "nobasis", "prepared params were built for a basis"
        ci, co, F, D = cfg["ci"], cfg["co"], cfg["F"], cfg["D"]
        feat2d = features.reshape(E, ci * F * D)
        kernel = functools.partial(_fused_nobasis_kernel, edge_dim=cfg["edge_dim"],
                                   compute_dtype=cfg["compute_dtype"])
        out2d = _launch_fused(kernel, [invariant_edge_feats, feat2d],
                              cfg["consts"], E=E, out_cols=co * D,
                              out_dtype=out_dtype, tile_e=tile_e,
                              expand_cols=cfg["expand_cols"])
        return out2d.reshape(E, co, D)


# -----------------------------------------------------------------------------
# Pure-JAX references & init
# -----------------------------------------------------------------------------
def radial_profile_ref(features, p):
    h = jnp.maximum(jnp.dot(features, p["w1"], precision=_HI) + p["b1"].reshape(1, -1), 0.0)
    h = jnp.maximum(jnp.dot(h, p["w2"], precision=_HI) + p["b2"].reshape(1, -1), 0.0)
    return jnp.dot(h, p["w3"], precision=_HI)


def versatile_conv_se3_ref(features, invariant_edge_feats, basis, params, *,
                           freq_sum, channels_in, channels_out,
                           fuse_level=ConvSE3FuseLevel.FULL):
    E = features.shape[0]
    in_dim = features.shape[2]
    rw = radial_profile_ref(invariant_edge_feats, params).reshape(
        E, channels_out, channels_in * freq_sum)
    if basis is not None:
        P = basis.shape[-1]
        out_dim = P if fuse_level == ConvSE3FuseLevel.FULL else P + P % 2 - 1
        bv = basis.reshape(E, in_dim, -1)
        tmp = jnp.einsum('ecd,edk->eck', features, bv,
                         precision=_HI).reshape(E, -1, P)
        return jnp.einsum('eoc,ecp->eop', rw, tmp, precision=_HI)[:, :, :out_dim]
    return jnp.einsum('eoc,ecd->eod', rw, features, precision=_HI)


def init_params(key, edge_dim, mid_dim, out_dim):
    """Mimics PyTorch nn.Linear default init: U[-1/sqrt(fan_in), +1/sqrt(fan_in)]."""
    ks = jax.random.split(key, 5)

    def unif(k, shape, fan_in):
        bound = 1.0 / jnp.sqrt(jnp.float32(fan_in))
        return jax.random.uniform(k, shape, jnp.float32, -bound, bound)

    return {
        "w1": unif(ks[0], (edge_dim, mid_dim), edge_dim),
        "b1": unif(ks[1], (1, mid_dim), edge_dim),
        "w2": unif(ks[2], (mid_dim, mid_dim), mid_dim),
        "b2": unif(ks[3], (1, mid_dim), mid_dim),
        "w3": unif(ks[4], (mid_dim, out_dim), mid_dim),  # bias=False in PyTorch
    }


if __name__ == "__main__":
    # Small config consistent with VersatileConvSE3.__init__ defaults.
    freq_sum, channels_in, channels_out = 3, 4, 4
    edge_dim, mid_dim = 1, 32
    rad_out_dim = freq_sum * channels_in * channels_out    # 48

    E = 1000         # deliberately NOT a multiple of the tile (ragged-E path)
    in_dim = 5       # 2*l + 1 for l = 2
    basis_last = 4   # even basis width; PARTIAL fuse level slices back to 3

    key = jax.random.PRNGKey(0)
    k_f, k_e, k_b, k_p, k_f0 = jax.random.split(key, 5)
    features = jax.random.normal(k_f, (E, channels_in, in_dim), jnp.float32)
    invariant_edge_feats = jax.random.uniform(k_e, (E, edge_dim), jnp.float32)
    basis = jax.random.normal(k_b, (E, in_dim, freq_sum, basis_last), jnp.float32)
    params = init_params(k_p, edge_dim, mid_dim, rad_out_dim)

    out_ref = versatile_conv_se3_ref(
        features, invariant_edge_feats, basis, params,
        freq_sum=freq_sum, channels_in=channels_in, channels_out=channels_out,
        fuse_level=ConvSE3FuseLevel.PARTIAL)

    # 1) Exact f32 mode (validates the fused structure), small tile so the grid
    #    has several steps including a ragged last block.
    prep_f32 = make_fused_basis_params(
        params, channels_in=channels_in, channels_out=channels_out,
        freq_sum=freq_sum, in_dim=in_dim, basis_last=basis_last,
        fuse_level=ConvSE3FuseLevel.PARTIAL, use_bf16=False)
    conv_f32 = jax.jit(
        lambda f, e, b: versatile_conv_se3(f, e, b, prep_f32, tile_e=256))
    out_f32 = jax.block_until_ready(conv_f32(features, invariant_edge_feats, basis))
    assert out_f32.shape == (E, channels_out, basis_last - 1)
    assert jnp.allclose(out_f32, out_ref, atol=2e-4, rtol=2e-4)

    # 2) Default bf16-MXU mode (f32 accumulation).
    prep_bf16 = make_fused_basis_params(
        params, channels_in=channels_in, channels_out=channels_out,
        freq_sum=freq_sum, in_dim=in_dim, basis_last=basis_last,
        fuse_level=ConvSE3FuseLevel.PARTIAL, use_bf16=True)
    conv_bf16 = jax.jit(lambda f, e, b: versatile_conv_se3(f, e, b, prep_bf16))
    out_bf16 = jax.block_until_ready(conv_bf16(features, invariant_edge_feats, basis))
    assert out_bf16.shape == (E, channels_out, basis_last - 1)
    rel = jnp.linalg.norm(out_bf16 - out_ref) / jnp.linalg.norm(out_ref)
    assert float(rel) < 4e-2

    # 3) basis=None path (features carry ci*freq_sum rows), exact f32 mode.
    features0 = jax.random.normal(
        k_f0, (E, channels_in * freq_sum, in_dim), jnp.float32)
    out0_ref = versatile_conv_se3_ref(
        features0, invariant_edge_feats, None, params,
        freq_sum=freq_sum, channels_in=channels_in, channels_out=channels_out)
    prep0_f32 = make_fused_nobasis_params(
        params, channels_in=channels_in, channels_out=channels_out,
        freq_sum=freq_sum, in_dim=in_dim, use_bf16=False)
    out0 = jax.block_until_ready(
        versatile_conv_se3(features0, invariant_edge_feats, None, prep0_f32))
    assert out0.shape == (E, channels_out, in_dim)
    assert jnp.allclose(out0, out0_ref, atol=2e-4, rtol=2e-4)

    # 4) basis=None path, default bf16 mode.
    prep0_bf16 = make_fused_nobasis_params(
        params, channels_in=channels_in, channels_out=channels_out,
        freq_sum=freq_sum, in_dim=in_dim, use_bf16=True)
    out0_b = jax.block_until_ready(
        versatile_conv_se3(features0, invariant_edge_feats, None, prep0_bf16))
    rel0 = jnp.linalg.norm(out0_b - out0_ref) / jnp.linalg.norm(out0_ref)
    assert float(rel0) < 4e-2

    print("KERNEL_OK")
</pallas_src>

<mosaic_0001>
module attributes {stable_mosaic.version = 11 : i64} {
  func.func @_fused_basis_kernel(%arg0: i32, %arg1: memref<256x1xf32, #tpu.memory_space<vmem>>, %arg2: memref<256x20xf32, #tpu.memory_space<vmem>>, %arg3: memref<256x60xf32, #tpu.memory_space<vmem>>, %arg4: memref<1x128xf32, #tpu.memory_space<vmem>>, %arg5: memref<1x128xf32, #tpu.memory_space<vmem>>, %arg6: memref<128x128xf32, #tpu.memory_space<vmem>>, %arg7: memref<1x128xf32, #tpu.memory_space<vmem>>, %arg8: memref<128x192xf32, #tpu.memory_space<vmem>>, %arg9: memref<20x240xf32, #tpu.memory_space<vmem>>, %arg10: memref<60x240xf32, #tpu.memory_space<vmem>>, %arg11: memref<240x192xf32, #tpu.memory_space<vmem>>, %arg12: memref<192x12xf32, #tpu.memory_space<vmem>>, %arg13: memref<256x12xf32, #tpu.memory_space<vmem>>) attributes {dimension_semantics = [#tpu.dimension_semantics<parallel>], iteration_bounds = array<i64: 4>, scalar_prefetch = 0 : i64, scratch_operands = 0 : i64, tpu.core_type = #tpu.core_type<tc>, window_params = [{transform_indices = @transform_0, window_bounds = array<i64: 256, 1>}, {transform_indices = @transform_1, window_bounds = array<i64: 256, 20>}, {transform_indices = @transform_2, window_bounds = array<i64: 256, 60>}, {pipeline_mode = #tpu.pipeline_mode<synchronous>, transform_indices = @transform_3, window_bounds = array<i64: 1, 128>}, {pipeline_mode = #tpu.pipeline_mode<synchronous>, transform_indices = @transform_4, window_bounds = array<i64: 1, 128>}, {pipeline_mode = #tpu.pipeline_mode<synchronous>, transform_indices = @transform_5, window_bounds = array<i64: 128, 128>}, {pipeline_mode = #tpu.pipeline_mode<synchronous>, transform_indices = @transform_6, window_bounds = array<i64: 1, 128>}, {pipeline_mode = #tpu.pipeline_mode<synchronous>, transform_indices = @transform_7, window_bounds = array<i64: 128, 192>}, {pipeline_mode = #tpu.pipeline_mode<synchronous>, transform_indices = @transform_8, window_bounds = array<i64: 20, 240>}, {pipeline_mode = #tpu.pipeline_mode<synchronous>, transform_indices = @transform_9, window_bounds = array<i64: 60, 240>}, {pipeline_mode = #tpu.pipeline_mode<synchronous>, transform_indices = @transform_10, window_bounds = array<i64: 240, 192>}, {pipeline_mode = #tpu.pipeline_mode<synchronous>, transform_indices = @transform_11, window_bounds = array<i64: 192, 12>}, {transform_indices = @transform_12, window_bounds = array<i64: 256, 12>}]} {
    %c0 = arith.constant 0 : index
    %c0_0 = arith.constant 0 : index
    %0 = vector.load %arg1[%c0, %c0_0] : memref<256x1xf32, #tpu.memory_space<vmem>>, vector<256x1xf32>
    %c0_1 = arith.constant 0 : index
    %c0_2 = arith.constant 0 : index
    %1 = vector.load %arg4[%c0_1, %c0_2] : memref<1x128xf32, #tpu.memory_space<vmem>>, vector<1x128xf32>
    %2 = vector.broadcast %0 : vector<256x1xf32> to vector<256x128xf32>
    %3 = vector.broadcast %1 : vector<1x128xf32> to vector<256x128xf32>
    %4 = arith.mulf %2, %3 : vector<256x128xf32>
    %c0_3 = arith.constant 0 : index
    %c0_4 = arith.constant 0 : index
    %5 = vector.load %arg5[%c0_3, %c0_4] : memref<1x128xf32, #tpu.memory_space<vmem>>, vector<1x128xf32>
    %6 = vector.broadcast %5 : vector<1x128xf32> to vector<256x128xf32>
    %7 = arith.addf %4, %6 : vector<256x128xf32>
    %cst = arith.constant 0.000000e+00 : f32
    %8 = vector.broadcast %cst : f32 to vector<256x128xf32>
    %9 = arith.maximumf %7, %8 : vector<256x128xf32>
    %c0_5 = arith.constant 0 : index
    %c0_6 = arith.constant 0 : index
    %10 = vector.load %arg6[%c0_5, %c0_6] : memref<128x128xf32, #tpu.memory_space<vmem>>, vector<128x128xf32>
    %cst_7 = arith.constant dense<0.000000e+00> : vector<256x128xf32>
    %11 = tpu.matmul %9, %10, %cst_7 {dimension_numbers = #tpu.dot_dimension_numbers<[1], [0], [0], [1], [0, 0, 1, 1], [], []>} : vector<256x128xf32>, vector<128x128xf32>, vector<256x128xf32> -> vector<256x128xf32>
    %c0_8 = arith.constant 0 : index
    %c0_9 = arith.constant 0 : index
    %12 = vector.load %arg7[%c0_8, %c0_9] : memref<1x128xf32, #tpu.memory_space<vmem>>, vector<1x128xf32>
    %13 = vector.broadcast %12 : vector<1x128xf32> to vector<256x128xf32>
    %14 = arith.addf %11, %13 : vector<256x128xf32>
    %cst_10 = arith.constant 0.000000e+00 : f32
    %15 = vector.broadcast %cst_10 : f32 to vector<256x128xf32>
    %16 = arith.maximumf %14, %15 : vector<256x128xf32>
    %c0_11 = arith.constant 0 : index
    %c0_12 = arith.constant 0 : index
    %17 = vector.load %arg8[%c0_11, %c0_12] : memref<128x192xf32, #tpu.memory_space<vmem>>, vector<128x192xf32>
    %cst_13 = arith.constant dense<0.000000e+00> : vector<256x192xf32>
    %18 = tpu.matmul %16, %17, %cst_13 {dimension_numbers = #tpu.dot_dimension_numbers<[1], [0], [0], [1], [0, 0, 1, 1], [], []>} : vector<256x128xf32>, vector<128x192xf32>, vector<256x192xf32> -> vector<256x192xf32>
    %c0_14 = arith.constant 0 : index
    %c0_15 = arith.constant 0 : index
    %19 = vector.load %arg2[%c0_14, %c0_15] : memref<256x20xf32, #tpu.memory_space<vmem>>, vector<256x20xf32>
    %c0_16 = arith.constant 0 : index
    %c0_17 = arith.constant 0 : index
    %20 = vector.load %arg9[%c0_16, %c0_17] : memref<20x240xf32, #tpu.memory_space<vmem>>, vector<20x240xf32>
    %cst_18 = arith.constant dense<0.000000e+00> : vector<256x240xf32>
    %21 = tpu.matmul %19, %20, %cst_18 {dimension_numbers = #tpu.dot_dimension_numbers<[1], [0], [0], [1], [0, 0, 1, 1], [], []>} : vector<256x20xf32>, vector<20x240xf32>, vector<256x240xf32> -> vector<256x240xf32>
    %c0_19 = arith.constant 0 : index
    %c0_20 = arith.constant 0 : index
    %22 = vector.load %arg3[%c0_19, %c0_20] : memref<256x60xf32, #tpu.memory_space<vmem>>, vector<256x60xf32>
    %c0_21 = arith.constant 0 : index
    %c0_22 = arith.constant 0 : index
    %23 = vector.load %arg10[%c0_21, %c0_22] : memref<60x240xf32, #tpu.memory_space<vmem>>, vector<60x240xf32>
    %cst_23 = arith.constant dense<0.000000e+00> : vector<256x240xf32>
    %24 = tpu.matmul %22, %23, %cst_23 {dimension_numbers = #tpu.dot_dimension_numbers<[1], [0], [0], [1], [0, 0, 1, 1], [], []>} : vector<256x60xf32>, vector<60x240xf32>, vector<256x240xf32> -> vector<256x240xf32>
    %25 = arith.mulf %21, %24 : vector<256x240xf32>
    %c0_24 = arith.constant 0 : index
    %c0_25 = arith.constant 0 : index
    %26 = vector.load %arg11[%c0_24, %c0_25] : memref<240x192xf32, #tpu.memory_space<vmem>>, vector<240x192xf32>
    %cst_26 = arith.constant dense<0.000000e+00> : vector<256x192xf32>
    %27 = tpu.matmul %25, %26, %cst_26 {dimension_numbers = #tpu.dot_dimension_numbers<[1], [0], [0], [1], [0, 0, 1, 1], [], []>} : vector<256x240xf32>, vector<240x192xf32>, vector<256x192xf32> -> vector<256x192xf32>
    %28 = arith.mulf %18, %27 : vector<256x192xf32>
    %c0_27 = arith.constant 0 : index
    %c0_28 = arith.constant 0 : index
    %29 = vector.load %arg12[%c0_27, %c0_28] : memref<192x12xf32, #tpu.memory_space<vmem>>, vector<192x12xf32>
    %cst_29 = arith.constant dense<0.000000e+00> : vector<256x12xf32>
    %30 = tpu.matmul %28, %29, %cst_29 {dimension_numbers = #tpu.dot_dimension_numbers<[1], [0], [0], [1], [0, 0, 1, 1], [], []>} : vector<256x192xf32>, vector<192x12xf32>, vector<256x12xf32> -> vector<256x12xf32>
    %c0_30 = arith.constant 0 : index
    %c0_31 = arith.constant 0 : index
    %31 = vector.load %arg13[%c0_30, %c0_31] : memref<256x12xf32, #tpu.memory_space<vmem>>, vector<256x12xf32>
    tpu.vector_store %arg13[%c0_30, %c0_31], %30 {strides = array<i32>} : memref<256x12xf32, #tpu.memory_space<vmem>>, vector<256x12xf32>,
    return
  }
  func.func @transform_0(%arg0: i32) -> (i32, i32) {
    %c0_i32 = arith.constant 0 : i32
    %c0_i32_0 = arith.constant 0 : i32
    return %arg0, %c0_i32 : i32, i32
  }
  func.func @transform_1(%arg0: i32) -> (i32, i32) {
    %c0_i32 = arith.constant 0 : i32
    %c0_i32_0 = arith.constant 0 : i32
    return %arg0, %c0_i32 : i32, i32
  }
  func.func @transform_2(%arg0: i32) -> (i32, i32) {
    %c0_i32 = arith.constant 0 : i32
    %c0_i32_0 = arith.constant 0 : i32
    return %arg0, %c0_i32 : i32, i32
  }
  func.func @transform_3(%arg0: i32) -> (i32, i32) {
    %c0_i32 = arith.constant 0 : i32
    %c0_i32_0 = arith.constant 0 : i32
    %c0_i32_1 = arith.constant 0 : i32
    return %c0_i32, %c0_i32_0 : i32, i32
  }
  func.func @transform_4(%arg0: i32) -> (i32, i32) {
    %c0_i32 = arith.constant 0 : i32
    %c0_i32_0 = arith.constant 0 : i32
    %c0_i32_1 = arith.constant 0 : i32
    return %c0_i32, %c0_i32_0 : i32, i32
  }
  func.func @transform_5(%arg0: i32) -> (i32, i32) {
    %c0_i32 = arith.constant 0 : i32
    %c0_i32_0 = arith.constant 0 : i32
    %c0_i32_1 = arith.constant 0 : i32
    return %c0_i32, %c0_i32_0 : i32, i32
  }
  func.func @transform_6(%arg0: i32) -> (i32, i32) {
    %c0_i32 = arith.constant 0 : i32
    %c0_i32_0 = arith.constant 0 : i32
    %c0_i32_1 = arith.constant 0 : i32
    return %c0_i32, %c0_i32_0 : i32, i32
  }
  func.func @transform_7(%arg0: i32) -> (i32, i32) {
    %c0_i32 = arith.constant 0 : i32
    %c0_i32_0 = arith.constant 0 : i32
    %c0_i32_1 = arith.constant 0 : i32
    return %c0_i32, %c0_i32_0 : i32, i32
  }
  func.func @transform_8(%arg0: i32) -> (i32, i32) {
    %c0_i32 = arith.constant 0 : i32
    %c0_i32_0 = arith.constant 0 : i32
    %c0_i32_1 = arith.constant 0 : i32
    return %c0_i32, %c0_i32_0 : i32, i32
  }
  func.func @transform_9(%arg0: i32) -> (i32, i32) {
    %c0_i32 = arith.constant 0 : i32
    %c0_i32_0 = arith.constant 0 : i32
    %c0_i32_1 = arith.constant 0 : i32
    return %c0_i32, %c0_i32_0 : i32, i32
  }
  func.func @transform_10(%arg0: i32) -> (i32, i32) {
    %c0_i32 = arith.constant 0 : i32
    %c0_i32_0 = arith.constant 0 : i32
    %c0_i32_1 = arith.constant 0 : i32
    return %c0_i32, %c0_i32_0 : i32, i32
  }
  func.func @transform_11(%arg0: i32) -> (i32, i32) {
    %c0_i32 = arith.constant 0 : i32
    %c0_i32_0 = arith.constant 0 : i32
    %c0_i32_1 = arith.constant 0 : i32
    return %c0_i32, %c0_i32_0 : i32, i32
  }
  func.func @transform_12(%arg0: i32) -> (i32, i32) {
    %c0_i32 = arith.constant 0 : i32
    %c0_i32_0 = arith.constant 0 : i32
    return %arg0, %c0_i32 : i32, i32
  }
}

</mosaic_0001>

<llo_original>
// kernel: _lambda_.1
$region0: #{_lambda_.1}
  #allocation0 [shape = 'u32[]', space=smem, size = 0x4, offset = 0x4, fixed_abs, tag = 'smem constant byte address 0x4 - core index']
  #allocation1 [shape = 'u32[72,128]{1,0:T(1,128)}', space=vmem, size = 0x9000, scoped, tag = 'internal scratch']
  %s0 = inlined_call_operand.vmem [shape: f32[1000,1], index: 0, kind: input, shape index: {}]
  %s1 = inlined_call_operand.vmem [shape: f32[1000,20], index: 1, kind: input, shape index: {}]
  %s2 = inlined_call_operand.vmem [shape: f32[1000,60], index: 2, kind: input, shape index: {}]
  %s3 = inlined_call_operand.vmem [shape: f32[1,128], index: 3, kind: input, shape index: {}]
  %s4 = inlined_call_operand.vmem [shape: f32[1,128], index: 4, kind: input, shape index: {}]
  %s5 = inlined_call_operand.vmem [shape: f32[128,128], index: 5, kind: input, shape index: {}]
  %s6 = inlined_call_operand.vmem [shape: f32[1,128], index: 6, kind: input, shape index: {}]
  %s7 = inlined_call_operand.vmem [shape: f32[128,192], index: 7, kind: input, shape index: {}]
  %s8 = inlined_call_operand.vmem [shape: f32[20,240], index: 8, kind: input, shape index: {}]
  %s9 = inlined_call_operand.vmem [shape: f32[60,240], index: 9, kind: input, shape index: {}]
  %s10 = inlined_call_operand.vmem [shape: f32[240,192], index: 10, kind: input, shape index: {}]
  %s11 = inlined_call_operand.vmem [shape: f32[192,12], index: 11, kind: input, shape index: {}]
  %s12 = inlined_call_operand.vmem [shape: f32[1000,12], index: 12, kind: output, shape index: {}]
  %s13 = sld [smem:[#allocation0]]
  $region129: #{_lambda_.1} parent=0
    _
  %s15 = ssub.s32 1, %s13
  %s16 = scalar_select 0, %s15, %s13
  $region1: #{_lambda_.1} parent=0
    #allocation2 [shape = 'u8[262144]{0}', space=vmem, size = 0x40000, scoped, tag = 'output window, operand 0']
    loop: start=0, step=1, limit=6
    $region2: #{_lambda_.1} parent=1 // loop_pre_header
      _
    $region3: #{_lambda_.1} parent=1 // loop_header
      %s18 = sphi 0, %s22
      %p19 = scmp.ge.s32.totalorder %s18, 6
      %s28 = sphi 0, %s30
      %s31 = sphi 0, %s28
      %s32 = sphi 0, %s31
      %s48 = sphi 0, %s32
      %s54 = sphi 0, %s56
      %s57 = sphi 0, %s54
      %s58 = sphi 0, %s57
      %s74 = sphi 0, %s58
      %s80 = sphi 0, %s82
      %s83 = sphi 0, %s80
      %s84 = sphi 0, %s83
      %s100 = sphi 0, %s84
      %s104 = sphi 0, %s104
      %s106 = sphi 0, %s104
      %s107 = sphi 0, %s106
      %s121 = sphi 0, %s107
      %s125 = sphi 0, %s125
      %s127 = sphi 0, %s125
      %s128 = sphi 0, %s127
      %s142 = sphi 0, %s128
      %s146 = sphi 0, %s146
      %s148 = sphi 0, %s146
      %s149 = sphi 0, %s148
      %s163 = sphi 0, %s149
      %s167 = sphi 0, %s167
      %s169 = sphi 0, %s167
      %s170 = sphi 0, %s169
      %s184 = sphi 0, %s170
      %s188 = sphi 0, %s188
      %s190 = sphi 0, %s188
      %s191 = sphi 0, %s190
      %s205 = sphi 0, %s191
      %s209 = sphi 0, %s209
      %s211 = sphi 0, %s209
      %s212 = sphi 0, %s211
      %s226 = sphi 0, %s212
      %s230 = sphi 0, %s230
      %s232 = sphi 0, %s230
      %s233 = sphi 0, %s232
      %s247 = sphi 0, %s233
      %s251 = sphi 0, %s251
      %s253 = sphi 0, %s251
      %s254 = sphi 0, %s253
      %s268 = sphi 0, %s254
      %s272 = sphi 0, %s272
      %s274 = sphi 0, %s272
      %s275 = sphi 0, %s274
      %s289 = sphi 0, %s275
      %s295 = sphi 0, %s297
      %s298 = sphi 0, %s295
      %s299 = sphi 0, %s298
      %s315 = sphi 0, %s299
    $region4: #{_lambda_.1} parent=1 // loop_header_branch
      %21 = sbr.rel (%p19) target = $region8
    $region5: #{_lambda_.1} parent=1 // loop_body
      %s23 = ssub.s32 %s18, 1
      %s24 = ssub.s32 %s18, 2
      %s25 = sadd.s32 %s18, 1
      %s26 = ssub.s32 %s18, %s25
      %p27 = scmp.eq.s32.totalorder %s26, 0
      %s29 = sadd.s32 %s28, 1
      %s30 = scalar_select %p27, %s28, %s29
      %p33 = pneg %p27
      %p34 = scmp.eq.s32.totalorder %s18, 3
      %p35 = por %p33, %p34
      %p36 = scmp.ne.s32.totalorder %s28, %s31
      %p37 = scmp.eq.s32.totalorder %s18, 0
      %p38 = por %p36, %p37
      %p39 = scmp.ne.s32.totalorder %s28, %s31
      %p40 = scmp.eq.s32.totalorder %s23, 3
      %p41 = por %p39, %p40
      %p42 = scmp.ne.s32.totalorder %s31, %s32
      %p43 = scmp.eq.s32.totalorder %s23, 0
      %p44 = por %p42, %p43
      %p45 = scmp.ne.s32.totalorder %s31, %s32
      %p46 = scmp.eq.s32.totalorder %s24, 3
      %p47 = por %p45, %p46
      %p49 = scmp.ne.s32.totalorder %s32, %s48
      %p50 = scmp.eq.s32.totalorder %s24, 0
      %p51 = por %p49, %p50
      %s52 = ssub.s32 %s18, %s25
      %p53 = scmp.eq.s32.totalorder %s52, 0
      %s55 = sadd.s32 %s54, 1
      %s56 = scalar_select %p53, %s54, %s55
      %p59 = pneg %p53
      %p60 = scmp.eq.s32.totalorder %s18, 3
      %p61 = por %p59, %p60
      %p62 = scmp.ne.s32.totalorder %s54, %s57
      %p63 = scmp.eq.s32.totalorder %s18, 0
      %p64 = por %p62, %p63
      %p65 = scmp.ne.s32.totalorder %s54, %s57
      %p66 = scmp.eq.s32.totalorder %s23, 3
      %p67 = por %p65, %p66
      %p68 = scmp.ne.s32.totalorder %s57, %s58
      %p69 = scmp.eq.s32.totalorder %s23, 0
      %p70 = por %p68, %p69
      %p71 = scmp.ne.s32.totalorder %s57, %s58
      %p72 = scmp.eq.s32.totalorder %s24, 3
      %p73 = por %p71, %p72
      %p75 = scmp.ne.s32.totalorder %s58, %s74
      %p76 = scmp.eq.s32.totalorder %s24, 0
      %p77 = por %p75, %p76
      %s78 = ssub.s32 %s18, %s25
      %p79 = scmp.eq.s32.totalorder %s78, 0
      %s81 = sadd.s32 %s80, 1
      %s82 = scalar_select %p79, %s80, %s81
      %p85 = pneg %p79
      %p86 = scmp.eq.s32.totalorder %s18, 3
      %p87 = por %p85, %p86
      %p88 = scmp.ne.s32.totalorder %s80, %s83
      %p89 = scmp.eq.s32.totalorder %s18, 0
      %p90 = por %p88, %p89
      %p91 = scmp.ne.s32.totalorder %s80, %s83
      %p92 = scmp.eq.s32.totalorder %s23, 3
      %p93 = por %p91, %p92
      %p94 = scmp.ne.s32.totalorder %s83, %s84
      %p95 = scmp.eq.s32.totalorder %s23, 0
      %p96 = por %p94, %p95
      %p97 = scmp.ne.s32.totalorder %s83, %s84
      %p98 = scmp.eq.s32.totalorder %s24, 3
      %p99 = por %p97, %p98
      %p101 = scmp.ne.s32.totalorder %s84, %s100
      %p102 = scmp.eq.s32.totalorder %s24, 0
      %p103 = por %p101, %p102
      %s105 = sadd.s32 %s104, 1
      %p108 = scmp.eq.s32.totalorder %s18, 3
      %p109 = scmp.ne.s32.totalorder %s104, %s106
      %p110 = scmp.eq.s32.totalorder %s18, 0
      %p111 = por %p109, %p110
      %p112 = scmp.ne.s32.totalorder %s104, %s106
      %p113 = scmp.eq.s32.totalorder %s23, 3
      %p114 = por %p112, %p113
      %p115 = scmp.ne.s32.totalorder %s106, %s107
      %p116 = scmp.eq.s32.totalorder %s23, 0
      %p117 = por %p115, %p116
      %p118 = scmp.ne.s32.totalorder %s106, %s107
      %p119 = scmp.eq.s32.totalorder %s24, 3
      %p120 = por %p118, %p119
      %p122 = scmp.ne.s32.totalorder %s107, %s121
      %p123 = scmp.eq.s32.totalorder %s24, 0
      %p124 = por %p122, %p123
      %s126 = sadd.s32 %s125, 1
      %p129 = scmp.eq.s32.totalorder %s18, 3
      %p130 = scmp.ne.s32.totalorder %s125, %s127
      %p131 = scmp.eq.s32.totalorder %s18, 0
      %p132 = por %p130, %p131
      %p133 = scmp.ne.s32.totalorder %s125, %s127
      %p134 = scmp.eq.s32.totalorder %s23, 3
      %p135 = por %p133, %p134
      %p136 = scmp.ne.s32.totalorder %s127, %s128
      %p137 = scmp.eq.s32.totalorder %s23, 0
      %p138 = por %p136, %p137
      %p139 = scmp.ne.s32.totalorder %s127, %s128
      %p140 = scmp.eq.s32.totalorder %s24, 3
      %p141 = por %p139, %p140
      %p143 = scmp.ne.s32.totalorder %s128, %s142
      %p144 = scmp.eq.s32.totalorder %s24, 0
      %p145 = por %p143, %p144
      %s147 = sadd.s32 %s146, 1
      %p150 = scmp.eq.s32.totalorder %s18, 3
      %p151 = scmp.ne.s32.totalorder %s146, %s148
      %p152 = scmp.eq.s32.totalorder %s18, 0
      %p153 = por %p151, %p152
      %p154 = scmp.ne.s32.totalorder %s146, %s148
      %p155 = scmp.eq.s32.totalorder %s23, 3
      %p156 = por %p154, %p155
      %p157 = scmp.ne.s32.totalorder %s148, %s149
      %p158 = scmp.eq.s32.totalorder %s23, 0
      %p159 = por %p157, %p158
      %p160 = scmp.ne.s32.totalorder %s148, %s149
      %p161 = scmp.eq.s32.totalorder %s24, 3
      %p162 = por %p160, %p161
      %p164 = scmp.ne.s32.totalorder %s149, %s163
      %p165 = scmp.eq.s32.totalorder %s24, 0
      %p166 = por %p164, %p165
      %s168 = sadd.s32 %s167, 1
      %p171 = scmp.eq.s32.totalorder %s18, 3
      %p172 = scmp.ne.s32.totalorder %s167, %s169
      %p173 = scmp.eq.s32.totalorder %s18, 0
      %p174 = por %p172, %p173
      %p175 = scmp.ne.s32.totalorder %s167, %s169
      %p176 = scmp.eq.s32.totalorder %s23, 3
      %p177 = por %p175, %p176
      %p178 = scmp.ne.s32.totalorder %s169, %s170
      %p179 = scmp.eq.s32.totalorder %s23, 0
      %p180 = por %p178, %p179
      %p181 = scmp.ne.s32.totalorder %s169, %s170
      %p182 = scmp.eq.s32.totalorder %s24, 3
      %p183 = por %p181, %p182
      %p185 = scmp.ne.s32.totalorder %s170, %s184
      %p186 = scmp.eq.s32.totalorder %s24, 0
      %p187 = por %p185, %p186
      %s189 = sadd.s32 %s188, 1
      %p192 = scmp.eq.s32.totalorder %s18, 3
      %p193 = scmp.ne.s32.totalorder %s188, %s190
      %p194 = scmp.eq.s32.totalorder %s18, 0
      %p195 = por %p193, %p194
      %p196 = scmp.ne.s32.totalorder %s188, %s190
      %p197 = scmp.eq.s32.totalorder %s23, 3
      %p198 = por %p196, %p197
      %p199 = scmp.ne.s32.totalorder %s190, %s191
      %p200 = scmp.eq.s32.totalorder %s23, 0
      %p201 = por %p199, %p200
      %p202 = scmp.ne.s32.totalorder %s190, %s191
      %p203 = scmp.eq.s32.totalorder %s24, 3
      %p204 = por %p202, %p203
      %p206 = scmp.ne.s32.totalorder %s191, %s205
      %p207 = scmp.eq.s32.totalorder %s24, 0
      %p208 = por %p206, %p207
      %s210 = sadd.s32 %s209, 1
      %p213 = scmp.eq.s32.totalorder %s18, 3
      %p214 = scmp.ne.s32.totalorder %s209, %s211
      %p215 = scmp.eq.s32.totalorder %s18, 0
      %p216 = por %p214, %p215
      %p217 = scmp.ne.s32.totalorder %s209, %s211
      %p218 = scmp.eq.s32.totalorder %s23, 3
      %p219 = por %p217, %p218
      %p220 = scmp.ne.s32.totalorder %s211, %s212
      %p221 = scmp.eq.s32.totalorder %s23, 0
      %p222 = por %p220, %p221
      %p223 = scmp.ne.s32.totalorder %s211, %s212
      %p224 = scmp.eq.s32.totalorder %s24, 3
      %p225 = por %p223, %p224
      %p227 = scmp.ne.s32.totalorder %s212, %s226
      %p228 = scmp.eq.s32.totalorder %s24, 0
      %p229 = por %p227, %p228
      %s231 = sadd.s32 %s230, 1
      %p234 = scmp.eq.s32.totalorder %s18, 3
      %p235 = scmp.ne.s32.totalorder %s230, %s232
      %p236 = scmp.eq.s32.totalorder %s18, 0
      %p237 = por %p235, %p236
      %p238 = scmp.ne.s32.totalorder %s230, %s232
      %p239 = scmp.eq.s32.totalorder %s23, 3
      %p240 = por %p238, %p239
      %p241 = scmp.ne.s32.totalorder %s232, %s233
      %p242 = scmp.eq.s32.totalorder %s23, 0
      %p243 = por %p241, %p242
      %p244 = scmp.ne.s32.totalorder %s232, %s233
      %p245 = scmp.eq.s32.totalorder %s24, 3
      %p246 = por %p244, %p245
      %p248 = scmp.ne.s32.totalorder %s233, %s247
      %p249 = scmp.eq.s32.totalorder %s24, 0
      %p250 = por %p248, %p249
      %s252 = sadd.s32 %s251, 1
      %p255 = scmp.eq.s32.totalorder %s18, 3
      %p256 = scmp.ne.s32.totalorder %s251, %s253
      %p257 = scmp.eq.s32.totalorder %s18, 0
      %p258 = por %p256, %p257
      %p259 = scmp.ne.s32.totalorder %s251, %s253
      %p260 = scmp.eq.s32.totalorder %s23, 3
      %p261 = por %p259, %p260
      %p262 = scmp.ne.s32.totalorder %s253, %s254
      %p263 = scmp.eq.s32.totalorder %s23, 0
      %p264 = por %p262, %p263
      %p265 = scmp.ne.s32.totalorder %s253, %s254
      %p266 = scmp.eq.s32.totalorder %s24, 3
      %p267 = por %p265, %p266
      %p269 = scmp.ne.s32.totalorder %s254, %s268
      %p270 = scmp.eq.s32.totalorder %s24, 0
      %p271 = por %p269, %p270
      %s273 = sadd.s32 %s272, 1
      %p276 = scmp.eq.s32.totalorder %s18, 3
      %p277 = scmp.ne.s32.totalorder %s272, %s274
      %p278 = scmp.eq.s32.totalorder %s18, 0
      %p279 = por %p277, %p278
      %p280 = scmp.ne.s32.totalorder %s272, %s274
      %p281 = scmp.eq.s32.totalorder %s23, 3
      %p282 = por %p280, %p281
      %p283 = scmp.ne.s32.totalorder %s274, %s275
      %p284 = scmp.eq.s32.totalorder %s23, 0
      %p285 = por %p283, %p284
      %p286 = scmp.ne.s32.totalorder %s274, %s275
      %p287 = scmp.eq.s32.totalorder %s24, 3
      %p288 = por %p286, %p287
      %p290 = scmp.ne.s32.totalorder %s275, %s289
      %p291 = scmp.eq.s32.totalorder %s24, 0
      %p292 = por %p290, %p291
      %s293 = ssub.s32 %s18, %s25
      %p294 = scmp.eq.s32.totalorder %s293, 0
      %s296 = sadd.s32 %s295, 1
      %s297 = scalar_select %p294, %s295, %s296
      %p300 = pneg %p294
      %p301 = scmp.eq.s32.totalorder %s18, 3
      %p302 = por %p300, %p301
      %p303 = scmp.ne.s32.totalorder %s295, %s298
      %p304 = scmp.eq.s32.totalorder %s18, 0
      %p305 = por %p303, %p304
      %p306 = scmp.ne.s32.totalorder %s295, %s298
      %p307 = scmp.eq.s32.totalorder %s23, 3
      %p308 = por %p306, %p307
      %p309 = scmp.ne.s32.totalorder %s298, %s299
      %p310 = scmp.eq.s32.totalorder %s23, 0
      %p311 = por %p309, %p310
      %p312 = scmp.ne.s32.totalorder %s298, %s299
      %p313 = scmp.eq.s32.totalorder %s24, 3
      %p314 = por %p312, %p313
      %p316 = scmp.ne.s32.totalorder %s299, %s315
      %p317 = scmp.eq.s32.totalorder %s24, 0
      %p318 = por %p316, %p317
      %p319 = scmp.le.s32.totalorder 1, %s18
      %p320 = scmp.lt.s32.totalorder %s18, 5
      %p321 = pnand %p319, %p320
      %p322 = pneg %p321
      // Predicated region
      $region9: #{_lambda_.1} parent=5 // pred_check
        _
      $region10: #{_lambda_.1} parent=5 // pred_check_branch
        %324 = sbr.rel (%p321) target = $region12
      $region11: #{_lambda_.1} parent=5 // pred_region
        %s325 = ssub.s32 %s18, 1
        // Predicated region
        $region13: #{_lambda_.1} parent=11 // pred_check
          %p326 = pneg %p117
        $region14: #{_lambda_.1} parent=11 // pred_check_branch
          %328 = sbr.rel (%p326) target = $region16
        $region15: #{_lambda_.1} parent=11 // pred_region
          _
        $region16: #{_lambda_.1} parent=11 // pred_fallthru
          _
        // Predicated region
        $region17: #{_lambda_.1} parent=11 // pred_check
          %p329 = pneg %p138
        $region18: #{_lambda_.1} parent=11 // pred_check_branch
          %331 = sbr.rel (%p329) target = $region20
        $region19: #{_lambda_.1} parent=11 // pred_region
          _
        $region20: #{_lambda_.1} parent=11 // pred_fallthru
          _
        // Predicated region
        $region21: #{_lambda_.1} parent=11 // pred_check
          %p332 = pneg %p159
        $region22: #{_lambda_.1} parent=11 // pred_check_branch
          %334 = sbr.rel (%p332) target = $region24
        $region23: #{_lambda_.1} parent=11 // pred_region
          _
        $region24: #{_lambda_.1} parent=11 // pred_fallthru
          _
        // Predicated region
        $region25: #{_lambda_.1} parent=11 // pred_check
          %p335 = pneg %p180
        $region26: #{_lambda_.1} parent=11 // pred_check_branch
          %337 = sbr.rel (%p335) target = $region28
        $region27: #{_lambda_.1} parent=11 // pred_region
          _
        $region28: #{_lambda_.1} parent=11 // pred_fallthru
          _
        // Predicated region
        $region29: #{_lambda_.1} parent=11 // pred_check
          %p338 = pneg %p201
        $region30: #{_lambda_.1} parent=11 // pred_check_branch
          %340 = sbr.rel (%p338) target = $region32
        $region31: #{_lambda_.1} parent=11 // pred_region
          _
        $region32: #{_lambda_.1} parent=11 // pred_fallthru
          _
        // Predicated region
        $region33: #{_lambda_.1} parent=11 // pred_check
          %p341 = pneg %p222
        $region34: #{_lambda_.1} parent=11 // pred_check_branch
          %343 = sbr.rel (%p341) target = $region36
        $region35: #{_lambda_.1} parent=11 // pred_region
          _
        $region36: #{_lambda_.1} parent=11 // pred_fallthru
          _
        // Predicated region
        $region37: #{_lambda_.1} parent=11 // pred_check
          %p344 = pneg %p243
        $region38: #{_lambda_.1} parent=11 // pred_check_branch
          %346 = sbr.rel (%p344) target = $region40
        $region39: #{_lambda_.1} parent=11 // pred_region
          _
        $region40: #{_lambda_.1} parent=11 // pred_fallthru
          _
        // Predicated region
        $region41: #{_lambda_.1} parent=11 // pred_check
          %p347 = pneg %p264
        $region42: #{_lambda_.1} parent=11 // pred_check_branch
          %349 = sbr.rel (%p347) target = $region44
        $region43: #{_lambda_.1} parent=11 // pred_region
          _
        $region44: #{_lambda_.1} parent=11 // pred_fallthru
          _
        // Predicated region
        $region45: #{_lambda_.1} parent=11 // pred_check
          %p350 = pneg %p285
        $region46: #{_lambda_.1} parent=11 // pred_check_branch
          %352 = sbr.rel (%p350) target = $region48
        $region47: #{_lambda_.1} parent=11 // pred_region
          _
        $region48: #{_lambda_.1} parent=11 // pred_fallthru
          _
      $region12: #{_lambda_.1} parent=5 // pred_fallthru
        _
      %p353 = scmp.lt.s32.totalorder %s18, 4
      // Predicated region
      $region49: #{_lambda_.1} parent=5 // pred_check
        %p354 = pneg %p353
      $region50: #{_lambda_.1} parent=5 // pred_check_branch
        %356 = sbr.rel (%p354) target = $region52
      $region51: #{_lambda_.1} parent=5 // pred_region
        // Predicated region
        $region53: #{_lambda_.1} parent=51 // pred_check
          %p357 = pneg %p38
        $region54: #{_lambda_.1} parent=51 // pred_check_branch
          %359 = sbr.rel (%p357) target = $region56
        $region55: #{_lambda_.1} parent=51 // pred_region
          %s360 = smul.u32 32, %s18
          %s361 = ssub.s32 125, %s360
          %p362 = scmp.lt.s32.totalorder %s361, 32
          %s363 = scalar_select %p362, %s361, 32
          %s364 = smul.u32 8, %s363
          %p365 = scmp.lt.s32.totalorder %s360, 124
          %s366 = scalar_select %p365, %s360, 124
          %s367 = smul.addr %s366, 8
          %s368 = scalar_lea.vmem %s0, %s367
          %s369 = smul.u32 32, %s18
          %s370 = ssub.s32 125, %s369
          %p371 = scmp.lt.s32.totalorder %s370, 32
          %s372 = scalar_select %p371, %s370, 32
          %s373 = smul.u32 8, %s372
        $region56: #{_lambda_.1} parent=51 // pred_fallthru
          _
        // Predicated region
        $region57: #{_lambda_.1} parent=51 // pred_check
          %p374 = pneg %p64
        $region58: #{_lambda_.1} parent=51 // pred_check_branch
          %376 = sbr.rel (%p374) target = $region60
        $region59: #{_lambda_.1} parent=51 // pred_region
          %s377 = smul.u32 32, %s18
          %s378 = ssub.s32 125, %s377
          %p379 = scmp.lt.s32.totalorder %s378, 32
          %s380 = scalar_select %p379, %s378, 32
          %s381 = smul.u32 8, %s380
          %p382 = scmp.lt.s32.totalorder %s377, 124
          %s383 = scalar_select %p382, %s377, 124
          %s384 = smul.addr %s383, 8
          %s385 = scalar_lea.vmem %s1, %s384
          %s386 = smul.u32 32, %s18
          %s387 = ssub.s32 125, %s386
          %p388 = scmp.lt.s32.totalorder %s387, 32
          %s389 = scalar_select %p388, %s387, 32
          %s390 = smul.u32 8, %s389
        $region60: #{_lambda_.1} parent=51 // pred_fallthru
          _
        // Predicated region
        $region61: #{_lambda_.1} parent=51 // pred_check
          %p391 = pneg %p90
        $region62: #{_lambda_.1} parent=51 // pred_check_branch
          %393 = sbr.rel (%p391) target = $region64
        $region63: #{_lambda_.1} parent=51 // pred_region
          %s394 = smul.u32 32, %s18
          %s395 = ssub.s32 125, %s394
          %p396 = scmp.lt.s32.totalorder %s395, 32
          %s397 = scalar_select %p396, %s395, 32
          %s398 = smul.u32 8, %s397
          %p399 = scmp.lt.s32.totalorder %s394, 124
          %s400 = scalar_select %p399, %s394, 124
          %s401 = smul.addr %s400, 8
          %s402 = scalar_lea.vmem %s2, %s401
          %s403 = smul.u32 32, %s18
          %s404 = ssub.s32 125, %s403
          %p405 = scmp.lt.s32.totalorder %s404, 32
          %s406 = scalar_select %p405, %s404, 32
          %s407 = smul.u32 8, %s406
        $region64: #{_lambda_.1} parent=51 // pred_fallthru
          _
      $region52: #{_lambda_.1} parent=5 // pred_fallthru
        _
      %p408 = scmp.le.s32.totalorder 1, %s18
      %p409 = scmp.lt.s32.totalorder %s18, 5
      %p410 = pnand %p408, %p409
      %p411 = pneg %p410
      // Predicated region
      $region65: #{_lambda_.1} parent=5 // pred_check
        _
      $region66: #{_lambda_.1} parent=5 // pred_check_branch
        %413 = sbr.rel (%p410) target = $region68
      $region67: #{_lambda_.1} parent=5 // pred_region
        %s414 = ssub.s32 %s18, 1
        %s415 = smul.u32 32, %s23
        %s416 = ssub.s32 125, %s415
        %p417 = scmp.lt.s32.totalorder %s416, 32
        %s418 = scalar_select %p417, %s416, 32
        %s419 = smul.u32 8, %s418
        %p420 = scmp.lt.s32.totalorder %s415, 124
        %s421 = scalar_select %p420, %s415, 124
        %s422 = smul.addr %s421, 8
        %s423 = scalar_lea.vmem %s0, %s422
        %p424 = pneg %p44
        %p425 = pneg %p41
        %s426 = smul.u32 32, %s23
        %s427 = ssub.s32 125, %s426
        %p428 = scmp.lt.s32.totalorder %s427, 32
        %s429 = scalar_select %p428, %s427, 32
        %s430 = smul.u32 8, %s429
        %p431 = scmp.lt.s32.totalorder %s426, 124
        %s432 = scalar_select %p431, %s426, 124
        %s433 = smul.addr %s432, 8
        %s434 = scalar_lea.vmem %s1, %s433
        %p435 = pneg %p70
        %p436 = pneg %p67
        %s437 = smul.u32 32, %s23
        %s438 = ssub.s32 125, %s437
        %p439 = scmp.lt.s32.totalorder %s438, 32
        %s440 = scalar_select %p439, %s438, 32
        %s441 = smul.u32 8, %s440
        %p442 = scmp.lt.s32.totalorder %s437, 124
        %s443 = scalar_select %p442, %s437, 124
        %s444 = smul.addr %s443, 8
        %s445 = scalar_lea.vmem %s2, %s444
        %p446 = pneg %p96
        %p447 = pneg %p93
        %p448 = pneg %p117
        %p449 = pneg %p114
        %p450 = pneg %p138
        %p451 = pneg %p135
        %p452 = pneg %p159
        %p453 = pneg %p156
        %p454 = pneg %p180
        %p455 = pneg %p177
        %p456 = pneg %p201
        %p457 = pneg %p198
        %p458 = pneg %p222
        %p459 = pneg %p219
        %p460 = pneg %p243
        %p461 = pneg %p240
        %p462 = pneg %p264
        %p463 = pneg %p261
        %p464 = pneg %p285
        %p465 = pneg %p282
        %p466 = pneg %p311
        %p467 = pneg %p308
        %s468 = sand.u32 %s298, 1
        %s469 = sand.u32 %s298, 1
        %s470 = smul.addr %s469, 256
        %s471 = scalar_lea.vmem [#allocation2], %s470
        %s472 = smul.u32 32, %s23
        %s473 = ssub.s32 125, %s472
        %p474 = scmp.lt.s32.totalorder %s473, 32
        %s475 = scalar_select %p474, %s473, 32
        %s476 = smul.u32 8, %s475
        %p477 = scmp.lt.s32.totalorder %s472, 124
        %s478 = scalar_select %p477, %s472, 124
        %s479 = smul.addr %s478, 8
        %s480 = scalar_lea.vmem %s0, %s479
        %s481 = smul.u32 32, %s23
        %s482 = ssub.s32 125, %s481
        %p483 = scmp.lt.s32.totalorder %s482, 32
        %s484 = scalar_select %p483, %s482, 32
        %s485 = smul.u32 8, %s484
        %s486 = smul.u32 32, %s23
        %s487 = ssub.s32 125, %s486
        %p488 = scmp.lt.s32.totalorder %s487, 32
        %s489 = scalar_select %p488, %s487, 32
        %s490 = smul.u32 8, %s489
        %p491 = scmp.lt.s32.totalorder %s486, 124
        %s492 = scalar_select %p491, %s486, 124
        %s493 = smul.addr %s492, 8
        %s494 = scalar_lea.vmem %s1, %s493
        %s495 = smul.u32 32, %s23
        %s496 = ssub.s32 125, %s495
        %p497 = scmp.lt.s32.totalorder %s496, 32
        %s498 = scalar_select %p497, %s496, 32
        %s499 = smul.u32 8, %s498
        %s500 = smul.u32 32, %s23
        %s501 = ssub.s32 125, %s500
        %p502 = scmp.lt.s32.totalorder %s501, 32
        %s503 = scalar_select %p502, %s501, 32
        %s504 = smul.u32 8, %s503
        %p505 = scmp.lt.s32.totalorder %s500, 124
        %s506 = scalar_select %p505, %s500, 124
        %s507 = smul.addr %s506, 8
        %s508 = scalar_lea.vmem %s2, %s507
        %s509 = smul.u32 32, %s23
        %s510 = ssub.s32 125, %s509
        %p511 = scmp.lt.s32.totalorder %s510, 32
        %s512 = scalar_select %p511, %s510, 32
        %s513 = smul.u32 8, %s512
        %s514 = smul.u32 32, %s23
        %s515 = ssub.s32 125, %s514
        %p516 = scmp.lt.s32.totalorder %s515, 32
        %s517 = scalar_select %p516, %s515, 32
        %s518 = smul.u32 8, %s517
        %v519 = vld [vmem:[%s480] sm:$0xff]
        %v520 = vld [vmem:[%s480 + $0x8] sm:$0xff]
        %v521 = vld [vmem:[%s480 + $0x10] sm:$0xff]
        %v522 = vld [vmem:[%s480 + $0x18] sm:$0xff]
        %v523 = vld [vmem:[%s480 + $0x20] sm:$0xff]
        %v524 = vld [vmem:[%s480 + $0x28] sm:$0xff]
        %v525 = vld [vmem:[%s480 + $0x30] sm:$0xff]
        %v526 = vld [vmem:[%s480 + $0x38] sm:$0xff]
        %v527 = vld [vmem:[%s480 + $0x40] sm:$0xff]
        %v528 = vld [vmem:[%s480 + $0x48] sm:$0xff]
        %v529 = vld [vmem:[%s480 + $0x50] sm:$0xff]
        %v530 = vld [vmem:[%s480 + $0x58] sm:$0xff]
        %v531 = vld [vmem:[%s480 + $0x60] sm:$0xff]
        %v532 = vld [vmem:[%s480 + $0x68] sm:$0xff]
        %v533 = vld [vmem:[%s480 + $0x70] sm:$0xff]
        %v534 = vld [vmem:[%s480 + $0x78] sm:$0xff]
        %v535 = vld [vmem:[%s480 + $0x80] sm:$0xff]
        %v536 = vld [vmem:[%s480 + $0x88] sm:$0xff]
        %v537 = vld [vmem:[%s480 + $0x90] sm:$0xff]
        %v538 = vld [vmem:[%s480 + $0x98] sm:$0xff]
        %v539 = vld [vmem:[%s480 + $0xa0] sm:$0xff]
        %v540 = vld [vmem:[%s480 + $0xa8] sm:$0xff]
        %v541 = vld [vmem:[%s480 + $0xb0] sm:$0xff]
        %v542 = vld [vmem:[%s480 + $0xb8] sm:$0xff]
        %v543 = vld [vmem:[%s480 + $0xc0] sm:$0xff]
        %v544 = vld [vmem:[%s480 + $0xc8] sm:$0xff]
        %v545 = vld [vmem:[%s480 + $0xd0] sm:$0xff]
        %v546 = vld [vmem:[%s480 + $0xd8] sm:$0xff]
        %v547 = vld [vmem:[%s480 + $0xe0] sm:$0xff]
        %v548 = vld [vmem:[%s480 + $0xe8] sm:$0xff]
        %v549 = vld [vmem:[%s480 + $0xf0] sm:$0xff]
        %v550 = vld [vmem:[%s480 + $0xf8] sm:$0xff]
        %v551 = vld [vmem:[%s3] sm:$0x1]
        %553 = vset.pattern.permute.xlu0 0
        %554 = vperm.xlu0 %553, %v519
        %v555 = vpop.permute.xlu0 %554
        %558 = vset.pattern.permute.xlu0 0
        %559 = vperm.xlu0 %558, %v520
        %v560 = vpop.permute.xlu0 %559
        %563 = vset.pattern.permute.xlu0 0
        %564 = vperm.xlu0 %563, %v521
        %v565 = vpop.permute.xlu0 %564
        %568 = vset.pattern.permute.xlu0 0
        %569 = vperm.xlu0 %568, %v522
        %v570 = vpop.permute.xlu0 %569
        %573 = vset.pattern.permute.xlu0 0
        %574 = vperm.xlu0 %573, %v523
        %v575 = vpop.permute.xlu0 %574
        %578 = vset.pattern.permute.xlu0 0
        %579 = vperm.xlu0 %578, %v524
        %v580 = vpop.permute.xlu0 %579
        %583 = vset.pattern.permute.xlu0 0
        %584 = vperm.xlu0 %583, %v525
        %v585 = vpop.permute.xlu0 %584
        %588 = vset.pattern.permute.xlu0 0
        %589 = vperm.xlu0 %588, %v526
        %v590 = vpop.permute.xlu0 %589
        %593 = vset.pattern.permute.xlu0 0
        %594 = vperm.xlu0 %593, %v527
        %v595 = vpop.permute.xlu0 %594
        %598 = vset.pattern.permute.xlu0 0
        %599 = vperm.xlu0 %598, %v528
        %v600 = vpop.permute.xlu0 %599
        %603 = vset.pattern.permute.xlu0 0
        %604 = vperm.xlu0 %603, %v529
        %v605 = vpop.permute.xlu0 %604
        %608 = vset.pattern.permute.xlu0 0
        %609 = vperm.xlu0 %608, %v530
        %v610 = vpop.permute.xlu0 %609
        %613 = vset.pattern.permute.xlu0 0
        %614 = vperm.xlu0 %613, %v531
        %v615 = vpop.permute.xlu0 %614
        %618 = vset.pattern.permute.xlu0 0
        %619 = vperm.xlu0 %618, %v532
        %v620 = vpop.permute.xlu0 %619
        %623 = vset.pattern.permute.xlu0 0
        %624 = vperm.xlu0 %623, %v533
        %v625 = vpop.permute.xlu0 %624
        %628 = vset.pattern.permute.xlu0 0
        %629 = vperm.xlu0 %628, %v534
        %v630 = vpop.permute.xlu0 %629
        %633 = vset.pattern.permute.xlu0 0
        %634 = vperm.xlu0 %633, %v535
        %v635 = vpop.permute.xlu0 %634
        %638 = vset.pattern.permute.xlu0 0
        %639 = vperm.xlu0 %638, %v536
        %v640 = vpop.permute.xlu0 %639
        %643 = vset.pattern.permute.xlu0 0
        %644 = vperm.xlu0 %643, %v537
        %v645 = vpop.permute.xlu0 %644
        %648 = vset.pattern.permute.xlu0 0
        %649 = vperm.xlu0 %648, %v538
        %v650 = vpop.permute.xlu0 %649
        %653 = vset.pattern.permute.xlu0 0
        %654 = vperm.xlu0 %653, %v539
        %v655 = vpop.permute.xlu0 %654
        %658 = vset.pattern.permute.xlu0 0
        %659 = vperm.xlu0 %658, %v540
        %v660 = vpop.permute.xlu0 %659
        %663 = vset.pattern.permute.xlu0 0
        %664 = vperm.xlu0 %663, %v541
        %v665 = vpop.permute.xlu0 %664
        %668 = vset.pattern.permute.xlu0 0
        %669 = vperm.xlu0 %668, %v542
        %v670 = vpop.permute.xlu0 %669
        %673 = vset.pattern.permute.xlu0 0
        %674 = vperm.xlu0 %673, %v543
        %v675 = vpop.permute.xlu0 %674
        %678 = vset.pattern.permute.xlu0 0
        %679 = vperm.xlu0 %678, %v544
        %v680 = vpop.permute.xlu0 %679
        %683 = vset.pattern.permute.xlu0 0
        %684 = vperm.xlu0 %683, %v545
        %v685 = vpop.permute.xlu0 %684
        %688 = vset.pattern.permute.xlu0 0
        %689 = vperm.xlu0 %688, %v546
        %v690 = vpop.permute.xlu0 %689
        %693 = vset.pattern.permute.xlu0 0
        %694 = vperm.xlu0 %693, %v547
        %v695 = vpop.permute.xlu0 %694
        %698 = vset.pattern.permute.xlu0 0
        %699 = vperm.xlu0 %698, %v548
        %v700 = vpop.permute.xlu0 %699
        %703 = vset.pattern.permute.xlu0 0
        %704 = vperm.xlu0 %703, %v549
        %v705 = vpop.permute.xlu0 %704
        %708 = vset.pattern.permute.xlu0 0
        %709 = vperm.xlu0 %708, %v550
        %v710 = vpop.permute.xlu0 %709
        %v713 = vperm.slane %v551, 0
        %v715 = vmul.f32 %v555, %v713
        %v716 = vmul.f32 %v560, %v713
        %v717 = vmul.f32 %v565, %v713
        %v718 = vmul.f32 %v570, %v713
        %v719 = vmul.f32 %v575, %v713
        %v720 = vmul.f32 %v580, %v713
        %v721 = vmul.f32 %v585, %v713
        %v722 = vmul.f32 %v590, %v713
        %v723 = vmul.f32 %v595, %v713
        %v724 = vmul.f32 %v600, %v713
        %v725 = vmul.f32 %v605, %v713
        %v726 = vmul.f32 %v610, %v713
        %v727 = vmul.f32 %v615, %v713
        %v728 = vmul.f32 %v620, %v713
        %v729 = vmul.f32 %v625, %v713
        %v730 = vmul.f32 %v630, %v713
        %v731 = vmul.f32 %v635, %v713
        %v732 = vmul.f32 %v640, %v713
        %v733 = vmul.f32 %v645, %v713
        %v734 = vmul.f32 %v650, %v713
        %v735 = vmul.f32 %v655, %v713
        %v736 = vmul.f32 %v660, %v713
        %v737 = vmul.f32 %v665, %v713
        %v738 = vmul.f32 %v670, %v713
        %v739 = vmul.f32 %v675, %v713
        %v740 = vmul.f32 %v680, %v713
        %v741 = vmul.f32 %v685, %v713
        %v742 = vmul.f32 %v690, %v713
        %v743 = vmul.f32 %v695, %v713
        %v744 = vmul.f32 %v700, %v713
        %v745 = vmul.f32 %v705, %v713
        %v746 = vmul.f32 %v710, %v713
        %v747 = vld [vmem:[%s4] sm:$0x1]
        %v749 = vperm.slane %v747, 0
        %v751 = vadd.f32 %v715, %v749
        %v752 = vadd.f32 %v716, %v749
        %v753 = vadd.f32 %v717, %v749
        %v754 = vadd.f32 %v718, %v749
        %v755 = vadd.f32 %v719, %v749
        %v756 = vadd.f32 %v720, %v749
        %v757 = vadd.f32 %v721, %v749
        %v758 = vadd.f32 %v722, %v749
        %v759 = vadd.f32 %v723, %v749
        %v760 = vadd.f32 %v724, %v749
        %v761 = vadd.f32 %v725, %v749
        %v762 = vadd.f32 %v726, %v749
        %v763 = vadd.f32 %v727, %v749
        %v764 = vadd.f32 %v728, %v749
        %v765 = vadd.f32 %v729, %v749
        %v766 = vadd.f32 %v730, %v749
        %v767 = vadd.f32 %v731, %v749
        %v768 = vadd.f32 %v732, %v749
        %v769 = vadd.f32 %v733, %v749
        %v770 = vadd.f32 %v734, %v749
        %v771 = vadd.f32 %v735, %v749
        %v772 = vadd.f32 %v736, %v749
        %v773 = vadd.f32 %v737, %v749
        %v774 = vadd.f32 %v738, %v749
        %v775 = vadd.f32 %v739, %v749
        %v776 = vadd.f32 %v740, %v749
        %v777 = vadd.f32 %v741, %v749
        %v778 = vadd.f32 %v742, %v749
        %v779 = vadd.f32 %v743, %v749
        %v780 = vadd.f32 %v744, %v749
        %v781 = vadd.f32 %v745, %v749
        %v782 = vadd.f32 %v746, %v749
        %v783 = vmax.f32 %v751, 0.0
        %v784 = vmax.f32 %v752, 0.0
        %v785 = vmax.f32 %v753, 0.0
        %v786 = vmax.f32 %v754, 0.0
        %v787 = vmax.f32 %v755, 0.0
        %v788 = vmax.f32 %v756, 0.0
        %v789 = vmax.f32 %v757, 0.0
        %v790 = vmax.f32 %v758, 0.0
        %v791 = vmax.f32 %v759, 0.0
        %v792 = vmax.f32 %v760, 0.0
        %v793 = vmax.f32 %v761, 0.0
        %v794 = vmax.f32 %v762, 0.0
        %v795 = vmax.f32 %v763, 0.0
        %v796 = vmax.f32 %v764, 0.0
        %v797 = vmax.f32 %v765, 0.0
        %v798 = vmax.f32 %v766, 0.0
        %v799 = vmax.f32 %v767, 0.0
        %v800 = vmax.f32 %v768, 0.0
        %v801 = vmax.f32 %v769, 0.0
        %v802 = vmax.f32 %v770, 0.0
        %v803 = vmax.f32 %v771, 0.0
        %v804 = vmax.f32 %v772, 0.0
        %v805 = vmax.f32 %v773, 0.0
        %v806 = vmax.f32 %v774, 0.0
        %v807 = vmax.f32 %v775, 0.0
        %v808 = vmax.f32 %v776, 0.0
        %v809 = vmax.f32 %v777, 0.0
        %v810 = vmax.f32 %v778, 0.0
        %v811 = vmax.f32 %v779, 0.0
        %v812 = vmax.f32 %v780, 0.0
        %v813 = vmax.f32 %v781, 0.0
        %v814 = vmax.f32 %v782, 0.0
        %v815 = vld [vmem:[%s5] sm:$0xff]
        %v816 = vld [vmem:[%s5 + $0x8] sm:$0xff]
        %v817 = vld [vmem:[%s5 + $0x10] sm:$0xff]
        %v818 = vld [vmem:[%s5 + $0x18] sm:$0xff]
        %v819 = vld [vmem:[%s5 + $0x20] sm:$0xff]
        %v820 = vld [vmem:[%s5 + $0x28] sm:$0xff]
        %v821 = vld [vmem:[%s5 + $0x30] sm:$0xff]
        %v822 = vld [vmem:[%s5 + $0x38] sm:$0xff]
        %v823 = vld [vmem:[%s5 + $0x40] sm:$0xff]
        %v824 = vld [vmem:[%s5 + $0x48] sm:$0xff]
        %v825 = vld [vmem:[%s5 + $0x50] sm:$0xff]
        %v826 = vld [vmem:[%s5 + $0x58] sm:$0xff]
        %v827 = vld [vmem:[%s5 + $0x60] sm:$0xff]
        %v828 = vld [vmem:[%s5 + $0x68] sm:$0xff]
        %v829 = vld [vmem:[%s5 + $0x70] sm:$0xff]
        %v830 = vld [vmem:[%s5 + $0x78] sm:$0xff]
        %v831 = vld [vmem:[%s6] sm:$0x1]
        %v833 = vperm.slane %v831, 0
        %835 = vmatpush.msra.mxu0 %v830
        %836 = vmatpush.msra.mxu0 %v829
        %837 = vmatpush.msra.mxu0 %v828
        %838 = vmatpush.msra.mxu0 %v827
        %839 = vmatpush.msra.mxu0 %v826
        %840 = vmatpush.msra.mxu0 %v825
        %841 = vmatpush.msra.mxu0 %v824
        %842 = vmatpush.msra.mxu0 %v823
        %843 = vmatpush.msra.mxu0 %v822
        %844 = vmatpush.msra.mxu0 %v821
        %845 = vmatpush.msra.mxu0 %v820
        %846 = vmatpush.msra.mxu0 %v819
        %847 = vmatpush.msra.mxu0 %v818
        %848 = vmatpush.msra.mxu0 %v817
        %849 = vmatpush.msra.mxu0 %v816
        %850 = vmatpush.msra.mxu0 %v815
        %851 = vmatmul.f32.gmra.mxu0 %v783
        %v852 = vpop.f32.mrf.mxu0
        %v853 = vadd.f32 %v833, %v852
        %854 = vmatmul.f32.gmra.mxu0 %v784
        %v855 = vpop.f32.mrf.mxu0
        %v856 = vadd.f32 %v833, %v855
        %857 = vmatmul.f32.gmra.mxu0 %v785
        %v858 = vpop.f32.mrf.mxu0
        %v859 = vadd.f32 %v833, %v858
        %860 = vmatmul.f32.gmra.mxu0 %v786
        %v861 = vpop.f32.mrf.mxu0
        %v862 = vadd.f32 %v833, %v861
        %863 = vmatmul.f32.gmra.mxu0 %v787
        %v864 = vpop.f32.mrf.mxu0
        %v865 = vadd.f32 %v833, %v864
        %866 = vmatmul.f32.gmra.mxu0 %v788
        %v867 = vpop.f32.mrf.mxu0
        %v868 = vadd.f32 %v833, %v867
        %869 = vmatmul.f32.gmra.mxu0 %v789
        %v870 = vpop.f32.mrf.mxu0
        %v871 = vadd.f32 %v833, %v870
        %872 = vmatmul.f32.gmra.mxu0 %v790
        %v873 = vpop.f32.mrf.mxu0
        %v874 = vadd.f32 %v833, %v873
        %875 = vmatmul.f32.gmra.mxu0 %v791
        %v876 = vpop.f32.mrf.mxu0
        %v877 = vadd.f32 %v833, %v876
        %878 = vmatmul.f32.gmra.mxu0 %v792
        %v879 = vpop.f32.mrf.mxu0
        %v880 = vadd.f32 %v833, %v879
        %881 = vmatmul.f32.gmra.mxu0 %v793
        %v882 = vpop.f32.mrf.mxu0
        %v883 = vadd.f32 %v833, %v882
        %884 = vmatmul.f32.gmra.mxu0 %v794
        %v885 = vpop.f32.mrf.mxu0
        %v886 = vadd.f32 %v833, %v885
        %887 = vmatmul.f32.gmra.mxu0 %v795
        %v888 = vpop.f32.mrf.mxu0
        %v889 = vadd.f32 %v833, %v888
        %890 = vmatmul.f32.gmra.mxu0 %v796
        %v891 = vpop.f32.mrf.mxu0
        %v892 = vadd.f32 %v833, %v891
        %893 = vmatmul.f32.gmra.mxu0 %v797
        %v894 = vpop.f32.mrf.mxu0
        %v895 = vadd.f32 %v833, %v894
        %896 = vmatmul.f32.gmra.mxu0 %v798
        %v897 = vpop.f32.mrf.mxu0
        %v898 = vadd.f32 %v833, %v897
        %899 = vmatmul.f32.gmra.mxu0 %v799
        %v900 = vpop.f32.mrf.mxu0
        %v901 = vadd.f32 %v833, %v900
        %902 = vmatmul.f32.gmra.mxu0 %v800
        %v903 = vpop.f32.mrf.mxu0
        %v904 = vadd.f32 %v833, %v903
        %905 = vmatmul.f32.gmra.mxu0 %v801
        %v906 = vpop.f32.mrf.mxu0
        %v907 = vadd.f32 %v833, %v906
        %908 = vmatmul.f32.gmra.mxu0 %v802
        %v909 = vpop.f32.mrf.mxu0
        %v910 = vadd.f32 %v833, %v909
        %911 = vmatmul.f32.gmra.mxu0 %v803
        %v912 = vpop.f32.mrf.mxu0
        %v913 = vadd.f32 %v833, %v912
        %914 = vmatmul.f32.gmra.mxu0 %v804
        %v915 = vpop.f32.mrf.mxu0
        %v916 = vadd.f32 %v833, %v915
        %917 = vmatmul.f32.gmra.mxu0 %v805
        %v918 = vpop.f32.mrf.mxu0
        %v919 = vadd.f32 %v833, %v918
        %920 = vmatmul.f32.gmra.mxu0 %v806
        %v921 = vpop.f32.mrf.mxu0
        %v922 = vadd.f32 %v833, %v921
        %923 = vmatmul.f32.gmra.mxu0 %v807
        %v924 = vpop.f32.mrf.mxu0
        %v925 = vadd.f32 %v833, %v924
        %926 = vmatmul.f32.gmra.mxu0 %v808
        %v927 = vpop.f32.mrf.mxu0
        %v928 = vadd.f32 %v833, %v927
        %929 = vmatmul.f32.gmra.mxu0 %v809
        %v930 = vpop.f32.mrf.mxu0
        %v931 = vadd.f32 %v833, %v930
        %932 = vmatmul.f32.gmra.mxu0 %v810
        %v933 = vpop.f32.mrf.mxu0
        %v934 = vadd.f32 %v833, %v933
        %935 = vmatmul.f32.gmra.mxu0 %v811
        %v936 = vpop.f32.mrf.mxu0
        %v937 = vadd.f32 %v833, %v936
        %938 = vmatmul.f32.gmra.mxu0 %v812
        %v939 = vpop.f32.mrf.mxu0
        %v940 = vadd.f32 %v833, %v939
        %941 = vmatmul.f32.gmra.mxu0 %v813
        %v942 = vpop.f32.mrf.mxu0
        %v943 = vadd.f32 %v833, %v942
        %944 = vmatmul.f32.gmra.mxu0 %v814
        %v945 = vpop.f32.mrf.mxu0
        %v946 = vadd.f32 %v833, %v945
        %947 = vdwg.mxu0
        %v948 = vmax.f32 %v853, 0.0
        %v949 = vmax.f32 %v856, 0.0
        %v950 = vmax.f32 %v859, 0.0
        %v951 = vmax.f32 %v862, 0.0
        %v952 = vmax.f32 %v865, 0.0
        %v953 = vmax.f32 %v868, 0.0
        %v954 = vmax.f32 %v871, 0.0
        %v955 = vmax.f32 %v874, 0.0
        %v956 = vmax.f32 %v877, 0.0
        %v957 = vmax.f32 %v880, 0.0
        %v958 = vmax.f32 %v883, 0.0
        %v959 = vmax.f32 %v886, 0.0
        %v960 = vmax.f32 %v889, 0.0
        %v961 = vmax.f32 %v892, 0.0
        %v962 = vmax.f32 %v895, 0.0
        %v963 = vmax.f32 %v898, 0.0
        %v964 = vmax.f32 %v901, 0.0
        %v965 = vmax.f32 %v904, 0.0
        %v966 = vmax.f32 %v907, 0.0
        %v967 = vmax.f32 %v910, 0.0
        %v968 = vmax.f32 %v913, 0.0
        %v969 = vmax.f32 %v916, 0.0
        %v970 = vmax.f32 %v919, 0.0
        %v971 = vmax.f32 %v922, 0.0
        %v972 = vmax.f32 %v925, 0.0
        %v973 = vmax.f32 %v928, 0.0
        %v974 = vmax.f32 %v931, 0.0
        %v975 = vmax.f32 %v934, 0.0
        %v976 = vmax.f32 %v937, 0.0
        %v977 = vmax.f32 %v940, 0.0
        %v978 = vmax.f32 %v943, 0.0
        %v979 = vmax.f32 %v946, 0.0
        %v980 = vld [vmem:[%s7] sm:$0xff]
        %v981 = vld [vmem:[%s7 + $0x8] sm:$0xff]
        %v982 = vld [vmem:[%s7 + $0x10] sm:$0xff]
        %v983 = vld [vmem:[%s7 + $0x18] sm:$0xff]
        %v984 = vld [vmem:[%s7 + $0x20] sm:$0xff]
        %v985 = vld [vmem:[%s7 + $0x28] sm:$0xff]
        %v986 = vld [vmem:[%s7 + $0x30] sm:$0xff]
        %v987 = vld [vmem:[%s7 + $0x38] sm:$0xff]
        %v988 = vld [vmem:[%s7 + $0x40] sm:$0xff]
        %v989 = vld [vmem:[%s7 + $0x48] sm:$0xff]
        %v990 = vld [vmem:[%s7 + $0x50] sm:$0xff]
        %v991 = vld [vmem:[%s7 + $0x58] sm:$0xff]
        %v992 = vld [vmem:[%s7 + $0x60] sm:$0xff]
        %v993 = vld [vmem:[%s7 + $0x68] sm:$0xff]
        %v994 = vld [vmem:[%s7 + $0x70] sm:$0xff]
        %v995 = vld [vmem:[%s7 + $0x78] sm:$0xff]
        %v996 = vld [vmem:[%s7 + $0x80] sm:$0xff]
        %v997 = vld [vmem:[%s7 + $0x88] sm:$0xff]
        %v998 = vld [vmem:[%s7 + $0x90] sm:$0xff]
        %v999 = vld [vmem:[%s7 + $0x98] sm:$0xff]
        %v1000 = vld [vmem:[%s7 + $0xa0] sm:$0xff]
        %v1001 = vld [vmem:[%s7 + $0xa8] sm:$0xff]
        %v1002 = vld [vmem:[%s7 + $0xb0] sm:$0xff]
        %v1003 = vld [vmem:[%s7 + $0xb8] sm:$0xff]
        %v1004 = vld [vmem:[%s7 + $0xc0] sm:$0xff]
        %v1005 = vld [vmem:[%s7 + $0xc8] sm:$0xff]
        %v1006 = vld [vmem:[%s7 + $0xd0] sm:$0xff]
        %v1007 = vld [vmem:[%s7 + $0xd8] sm:$0xff]
        %v1008 = vld [vmem:[%s7 + $0xe0] sm:$0xff]
        %v1009 = vld [vmem:[%s7 + $0xe8] sm:$0xff]
        %v1010 = vld [vmem:[%s7 + $0xf0] sm:$0xff]
        %v1011 = vld [vmem:[%s7 + $0xf8] sm:$0xff]
        %1012 = vmatpush.msra.mxu0 %v1010
        %1013 = vmatpush.msra.mxu0 %v1008
        %1014 = vmatpush.msra.mxu0 %v1006
        %1015 = vmatpush.msra.mxu0 %v1004
        %1016 = vmatpush.msra.mxu0 %v1002
        %1017 = vmatpush.msra.mxu0 %v1000
        %1018 = vmatpush.msra.mxu0 %v998
        %1019 = vmatpush.msra.mxu0 %v996
        %1020 = vmatpush.msra.mxu0 %v994
        %1021 = vmatpush.msra.mxu0 %v992
        %1022 = vmatpush.msra.mxu0 %v990
        %1023 = vmatpush.msra.mxu0 %v988
        %1024 = vmatpush.msra.mxu0 %v986
        %1025 = vmatpush.msra.mxu0 %v984
        %1026 = vmatpush.msra.mxu0 %v982
        %1027 = vmatpush.msra.mxu0 %v980
        %1028 = vmatmul.f32.gmra.mxu0 %v948
        %v1029 = vpop.f32.mrf.mxu0
        %v1030 = vadd.f32 0.0, %v1029
        %1031 = vmatmul.f32.gmra.mxu0 %v949
        %v1032 = vpop.f32.mrf.mxu0
        %v1033 = vadd.f32 0.0, %v1032
        %1034 = vmatmul.f32.gmra.mxu0 %v950
        %v1035 = vpop.f32.mrf.mxu0
        %v1036 = vadd.f32 0.0, %v1035
        %1037 = vmatmul.f32.gmra.mxu0 %v951
        %v1038 = vpop.f32.mrf.mxu0
        %v1039 = vadd.f32 0.0, %v1038
        %1040 = vmatmul.f32.gmra.mxu0 %v952
        %v1041 = vpop.f32.mrf.mxu0
        %v1042 = vadd.f32 0.0, %v1041
        %1043 = vmatmul.f32.gmra.mxu0 %v953
        %v1044 = vpop.f32.mrf.mxu0
        %v1045 = vadd.f32 0.0, %v1044
        %1046 = vmatmul.f32.gmra.mxu0 %v954
        %v1047 = vpop.f32.mrf.mxu0
        %v1048 = vadd.f32 0.0, %v1047
        %1049 = vmatmul.f32.gmra.mxu0 %v955
        %v1050 = vpop.f32.mrf.mxu0
        %v1051 = vadd.f32 0.0, %v1050
        %1052 = vmatmul.f32.gmra.mxu0 %v956
        %v1053 = vpop.f32.mrf.mxu0
        %v1054 = vadd.f32 0.0, %v1053
        %1055 = vmatmul.f32.gmra.mxu0 %v957
        %v1056 = vpop.f32.mrf.mxu0
        %v1057 = vadd.f32 0.0, %v1056
        %1058 = vmatmul.f32.gmra.mxu0 %v958
        %v1059 = vpop.f32.mrf.mxu0
        %v1060 = vadd.f32 0.0, %v1059
        %1061 = vmatmul.f32.gmra.mxu0 %v959
        %v1062 = vpop.f32.mrf.mxu0
        %v1063 = vadd.f32 0.0, %v1062
        %1064 = vmatmul.f32.gmra.mxu0 %v960
        %v1065 = vpop.f32.mrf.mxu0
        %v1066 = vadd.f32 0.0, %v1065
        %1067 = vmatmul.f32.gmra.mxu0 %v961
        %v1068 = vpop.f32.mrf.mxu0
        %v1069 = vadd.f32 0.0, %v1068
        %1070 = vmatmul.f32.gmra.mxu0 %v962
        %v1071 = vpop.f32.mrf.mxu0
        %v1072 = vadd.f32 0.0, %v1071
        %1073 = vmatmul.f32.gmra.mxu0 %v963
        %v1074 = vpop.f32.mrf.mxu0
        %v1075 = vadd.f32 0.0, %v1074
        %1076 = vmatmul.f32.gmra.mxu0 %v964
        %v1077 = vpop.f32.mrf.mxu0
        %v1078 = vadd.f32 0.0, %v1077
        %1079 = vmatmul.f32.gmra.mxu0 %v965
        %v1080 = vpop.f32.mrf.mxu0
        %v1081 = vadd.f32 0.0, %v1080
        %1082 = vmatmul.f32.gmra.mxu0 %v966
        %v1083 = vpop.f32.mrf.mxu0
        %v1084 = vadd.f32 0.0, %v1083
        %1085 = vmatmul.f32.gmra.mxu0 %v967
        %v1086 = vpop.f32.mrf.mxu0
        %v1087 = vadd.f32 0.0, %v1086
        %1088 = vmatmul.f32.gmra.mxu0 %v968
        %v1089 = vpop.f32.mrf.mxu0
        %v1090 = vadd.f32 0.0, %v1089
        %1091 = vmatmul.f32.gmra.mxu0 %v969
        %v1092 = vpop.f32.mrf.mxu0
        %v1093 = vadd.f32 0.0, %v1092
        %1094 = vmatmul.f32.gmra.mxu0 %v970
        %v1095 = vpop.f32.mrf.mxu0
        %v1096 = vadd.f32 0.0, %v1095
        %1097 = vmatmul.f32.gmra.mxu0 %v971
        %v1098 = vpop.f32.mrf.mxu0
        %v1099 = vadd.f32 0.0, %v1098
        %1100 = vmatmul.f32.gmra.mxu0 %v972
        %v1101 = vpop.f32.mrf.mxu0
        %v1102 = vadd.f32 0.0, %v1101
        %1103 = vmatmul.f32.gmra.mxu0 %v973
        %v1104 = vpop.f32.mrf.mxu0
        %v1105 = vadd.f32 0.0, %v1104
        %1106 = vmatmul.f32.gmra.mxu0 %v974
        %v1107 = vpop.f32.mrf.mxu0
        %v1108 = vadd.f32 0.0, %v1107
        %1109 = vmatmul.f32.gmra.mxu0 %v975
        %v1110 = vpop.f32.mrf.mxu0
        %v1111 = vadd.f32 0.0, %v1110
        %1112 = vmatmul.f32.gmra.mxu0 %v976
        %v1113 = vpop.f32.mrf.mxu0
        %v1114 = vadd.f32 0.0, %v1113
        %1115 = vmatmul.f32.gmra.mxu0 %v977
        %v1116 = vpop.f32.mrf.mxu0
        %v1117 = vadd.f32 0.0, %v1116
        %1118 = vmatmul.f32.gmra.mxu0 %v978
        %v1119 = vpop.f32.mrf.mxu0
        %v1120 = vadd.f32 0.0, %v1119
        %1121 = vmatmul.f32.gmra.mxu0 %v979
        %v1122 = vpop.f32.mrf.mxu0
        %v1123 = vadd.f32 0.0, %v1122
        %1124 = vdwg.mxu0
        %1125 = vmatpush.msra.mxu0 %v1011
        %1126 = vmatpush.msra.mxu0 %v1009
        %1127 = vmatpush.msra.mxu0 %v1007
        %1128 = vmatpush.msra.mxu0 %v1005
        %1129 = vmatpush.msra.mxu0 %v1003
        %1130 = vmatpush.msra.mxu0 %v1001
        %1131 = vmatpush.msra.mxu0 %v999
        %1132 = vmatpush.msra.mxu0 %v997
        %1133 = vmatpush.msra.mxu0 %v995
        %1134 = vmatpush.msra.mxu0 %v993
        %1135 = vmatpush.msra.mxu0 %v991
        %1136 = vmatpush.msra.mxu0 %v989
        %1137 = vmatpush.msra.mxu0 %v987
        %1138 = vmatpush.msra.mxu0 %v985
        %1139 = vmatpush.msra.mxu0 %v983
        %1140 = vmatpush.msra.mxu0 %v981
        %1141 = vmatmul.f32.gmra.mxu0 %v948
        %v1142 = vpop.f32.mrf.mxu0
        %v1143 = vadd.f32 0.0, %v1142
        %1144 = vmatmul.f32.gmra.mxu0 %v949
        %v1145 = vpop.f32.mrf.mxu0
        %v1146 = vadd.f32 0.0, %v1145
        %1147 = vmatmul.f32.gmra.mxu0 %v950
        %v1148 = vpop.f32.mrf.mxu0
        %v1149 = vadd.f32 0.0, %v1148
        %1150 = vmatmul.f32.gmra.mxu0 %v951
        %v1151 = vpop.f32.mrf.mxu0
        %v1152 = vadd.f32 0.0, %v1151
        %1153 = vmatmul.f32.gmra.mxu0 %v952
        %v1154 = vpop.f32.mrf.mxu0
        %v1155 = vadd.f32 0.0, %v1154
        %1156 = vmatmul.f32.gmra.mxu0 %v953
        %v1157 = vpop.f32.mrf.mxu0
        %v1158 = vadd.f32 0.0, %v1157
        %1159 = vmatmul.f32.gmra.mxu0 %v954
        %v1160 = vpop.f32.mrf.mxu0
        %v1161 = vadd.f32 0.0, %v1160
        %1162 = vmatmul.f32.gmra.mxu0 %v955
        %v1163 = vpop.f32.mrf.mxu0
        %v1164 = vadd.f32 0.0, %v1163
        %1165 = vmatmul.f32.gmra.mxu0 %v956
        %v1166 = vpop.f32.mrf.mxu0
        %v1167 = vadd.f32 0.0, %v1166
        %1168 = vmatmul.f32.gmra.mxu0 %v957
        %v1169 = vpop.f32.mrf.mxu0
        %v1170 = vadd.f32 0.0, %v1169
        %1171 = vmatmul.f32.gmra.mxu0 %v958
        %v1172 = vpop.f32.mrf.mxu0
        %v1173 = vadd.f32 0.0, %v1172
        %1174 = vmatmul.f32.gmra.mxu0 %v959
        %v1175 = vpop.f32.mrf.mxu0
        %v1176 = vadd.f32 0.0, %v1175
        %1177 = vmatmul.f32.gmra.mxu0 %v960
        %v1178 = vpop.f32.mrf.mxu0
        %v1179 = vadd.f32 0.0, %v1178
        %1180 = vmatmul.f32.gmra.mxu0 %v961
        %v1181 = vpop.f32.mrf.mxu0
        %v1182 = vadd.f32 0.0, %v1181
        %1183 = vmatmul.f32.gmra.mxu0 %v962
        %v1184 = vpop.f32.mrf.mxu0
        %v1185 = vadd.f32 0.0, %v1184
        %1186 = vmatmul.f32.gmra.mxu0 %v963
        %v1187 = vpop.f32.mrf.mxu0
        %v1188 = vadd.f32 0.0, %v1187
        %1189 = vmatmul.f32.gmra.mxu0 %v964
        %v1190 = vpop.f32.mrf.mxu0
        %v1191 = vadd.f32 0.0, %v1190
        %1192 = vmatmul.f32.gmra.mxu0 %v965
        %v1193 = vpop.f32.mrf.mxu0
        %v1194 = vadd.f32 0.0, %v1193
        %1195 = vmatmul.f32.gmra.mxu0 %v966
        %v1196 = vpop.f32.mrf.mxu0
        %v1197 = vadd.f32 0.0, %v1196
        %1198 = vmatmul.f32.gmra.mxu0 %v967
        %v1199 = vpop.f32.mrf.mxu0
        %v1200 = vadd.f32 0.0, %v1199
        %1201 = vmatmul.f32.gmra.mxu0 %v968
        %v1202 = vpop.f32.mrf.mxu0
        %v1203 = vadd.f32 0.0, %v1202
        %1204 = vmatmul.f32.gmra.mxu0 %v969
        %v1205 = vpop.f32.mrf.mxu0
        %v1206 = vadd.f32 0.0, %v1205
        %1207 = vmatmul.f32.gmra.mxu0 %v970
        %v1208 = vpop.f32.mrf.mxu0
        %v1209 = vadd.f32 0.0, %v1208
        %1210 = vmatmul.f32.gmra.mxu0 %v971
        %v1211 = vpop.f32.mrf.mxu0
        %v1212 = vadd.f32 0.0, %v1211
        %1213 = vmatmul.f32.gmra.mxu0 %v972
        %v1214 = vpop.f32.mrf.mxu0
        %v1215 = vadd.f32 0.0, %v1214
        %1216 = vmatmul.f32.gmra.mxu0 %v973
        %v1217 = vpop.f32.mrf.mxu0
        %v1218 = vadd.f32 0.0, %v1217
        %1219 = vmatmul.f32.gmra.mxu0 %v974
        %v1220 = vpop.f32.mrf.mxu0
        %v1221 = vadd.f32 0.0, %v1220
        %1222 = vmatmul.f32.gmra.mxu0 %v975
        %v1223 = vpop.f32.mrf.mxu0
        %v1224 = vadd.f32 0.0, %v1223
        %1225 = vmatmul.f32.gmra.mxu0 %v976
        %v1226 = vpop.f32.mrf.mxu0
        %v1227 = vadd.f32 0.0, %v1226
        %1228 = vmatmul.f32.gmra.mxu0 %v977
        %v1229 = vpop.f32.mrf.mxu0
        %v1230 = vadd.f32 0.0, %v1229
        %1231 = vmatmul.f32.gmra.mxu0 %v978
        %v1232 = vpop.f32.mrf.mxu0
        %v1233 = vadd.f32 0.0, %v1232
        %1234 = vmatmul.f32.gmra.mxu0 %v979
        %v1235 = vpop.f32.mrf.mxu0
        %v1236 = vadd.f32 0.0, %v1235
        %1237 = vdwg.mxu0
        %v1238 = vld [vmem:[%s494] sm:$0xff]
        %v1239 = vld [vmem:[%s494 + $0x8] sm:$0xff]
        %v1240 = vld [vmem:[%s494 + $0x10] sm:$0xff]
        %v1241 = vld [vmem:[%s494 + $0x18] sm:$0xff]
        %v1242 = vld [vmem:[%s494 + $0x20] sm:$0xff]
        %v1243 = vld [vmem:[%s494 + $0x28] sm:$0xff]
        %v1244 = vld [vmem:[%s494 + $0x30] sm:$0xff]
        %v1245 = vld [vmem:[%s494 + $0x38] sm:$0xff]
        %v1246 = vld [vmem:[%s494 + $0x40] sm:$0xff]
        %v1247 = vld [vmem:[%s494 + $0x48] sm:$0xff]
        %v1248 = vld [vmem:[%s494 + $0x50] sm:$0xff]
        %v1249 = vld [vmem:[%s494 + $0x58] sm:$0xff]
        %v1250 = vld [vmem:[%s494 + $0x60] sm:$0xff]
        %v1251 = vld [vmem:[%s494 + $0x68] sm:$0xff]
        %v1252 = vld [vmem:[%s494 + $0x70] sm:$0xff]
        %v1253 = vld [vmem:[%s494 + $0x78] sm:$0xff]
        %v1254 = vld [vmem:[%s494 + $0x80] sm:$0xff]
        %v1255 = vld [vmem:[%s494 + $0x88] sm:$0xff]
        %v1256 = vld [vmem:[%s494 + $0x90] sm:$0xff]
        %v1257 = vld [vmem:[%s494 + $0x98] sm:$0xff]
        %v1258 = vld [vmem:[%s494 + $0xa0] sm:$0xff]
        %v1259 = vld [vmem:[%s494 + $0xa8] sm:$0xff]
        %v1260 = vld [vmem:[%s494 + $0xb0] sm:$0xff]
        %v1261 = vld [vmem:[%s494 + $0xb8] sm:$0xff]
        %v1262 = vld [vmem:[%s494 + $0xc0] sm:$0xff]
        %v1263 = vld [vmem:[%s494 + $0xc8] sm:$0xff]
        %v1264 = vld [vmem:[%s494 + $0xd0] sm:$0xff]
        %v1265 = vld [vmem:[%s494 + $0xd8] sm:$0xff]
        %v1266 = vld [vmem:[%s494 + $0xe0] sm:$0xff]
        %v1267 = vld [vmem:[%s494 + $0xe8] sm:$0xff]
        %v1268 = vld [vmem:[%s494 + $0xf0] sm:$0xff]
        %v1269 = vld [vmem:[%s494 + $0xf8] sm:$0xff]
        %v1270 = vld [vmem:[%s8] sm:$0xff]
        %v1271 = vld [vmem:[%s8 + $0x8] sm:$0xff]
        %v1272 = vld [vmem:[%s8 + $0x10] sm:$0xff]
        %v1273 = vld [vmem:[%s8 + $0x18] sm:$0xff]
        %v1274 = vld [vmem:[%s8 + $0x20] sm:$0xf]
        %v1275 = vld [vmem:[%s8 + $0x28] sm:$0xf]
        %vm1276 = vcmask 162816
        %v1278 = vsel %vm1276, %v1238, 0
        %v1281 = vsel %vm1276, %v1239, 0
        %v1284 = vsel %vm1276, %v1240, 0
        %v1287 = vsel %vm1276, %v1241, 0
        %v1290 = vsel %vm1276, %v1242, 0
        %v1293 = vsel %vm1276, %v1243, 0
        %v1296 = vsel %vm1276, %v1244, 0
        %v1299 = vsel %vm1276, %v1245, 0
        %v1302 = vsel %vm1276, %v1246, 0
        %v1305 = vsel %vm1276, %v1247, 0
        %v1308 = vsel %vm1276, %v1248, 0
        %v1311 = vsel %vm1276, %v1249, 0
        %v1314 = vsel %vm1276, %v1250, 0
        %v1317 = vsel %vm1276, %v1251, 0
        %v1320 = vsel %vm1276, %v1252, 0
        %v1323 = vsel %vm1276, %v1253, 0
        %v1326 = vsel %vm1276, %v1254, 0
        %v1329 = vsel %vm1276, %v1255, 0
        %v1332 = vsel %vm1276, %v1256, 0
        %v1335 = vsel %vm1276, %v1257, 0
        %v1338 = vsel %vm1276, %v1258, 0
        %v1341 = vsel %vm1276, %v1259, 0
        %v1344 = vsel %vm1276, %v1260, 0
        %v1347 = vsel %vm1276, %v1261, 0
        %v1350 = vsel %vm1276, %v1262, 0
        %v1353 = vsel %vm1276, %v1263, 0
        %v1356 = vsel %vm1276, %v1264, 0
        %v1359 = vsel %vm1276, %v1265, 0
        %v1362 = vsel %vm1276, %v1266, 0
        %v1365 = vsel %vm1276, %v1267, 0
        %v1368 = vsel %vm1276, %v1268, 0
        %v1371 = vsel %vm1276, %v1269, 0
        %vm1373 = vcmask 1043456
        %v1375 = vsel %vm1373, %v1274, 0
        %v1378 = vsel %vm1373, %v1275, 0
        %1380 = vmatpush.msra.mxu0 0.0
        %1381 = vmatpush.msra.mxu0 0.0
        %1382 = vmatpush.msra.mxu0 0.0
        %1383 = vmatpush.msra.mxu0 0.0
        %1384 = vmatpush.msra.mxu0 0.0
        %1385 = vmatpush.msra.mxu0 0.0
        %1386 = vmatpush.msra.mxu0 0.0
        %1387 = vmatpush.msra.mxu0 0.0
        %1388 = vmatpush.msra.mxu0 0.0
        %1389 = vmatpush.msra.mxu0 0.0
        %1390 = vmatpush.msra.mxu0 0.0
        %1391 = vmatpush.msra.mxu0 0.0
        %1392 = vmatpush.msra.mxu0 0.0
        %1393 = vmatpush.msra.mxu0 %v1375
        %1394 = vmatpush.msra.mxu0 %v1272
        %1395 = vmatpush.msra.mxu0 %v1270
        %1396 = vmatmul.f32.gmra.mxu0 %v1278
        %v1397 = vpop.f32.mrf.mxu0
        %v1398 = vadd.f32 0.0, %v1397
        %1399 = vmatmul.f32.gmra.mxu0 %v1281
        %v1400 = vpop.f32.mrf.mxu0
        %v1401 = vadd.f32 0.0, %v1400
        %1402 = vmatmul.f32.gmra.mxu0 %v1284
        %v1403 = vpop.f32.mrf.mxu0
        %v1404 = vadd.f32 0.0, %v1403
        %1405 = vmatmul.f32.gmra.mxu0 %v1287
        %v1406 = vpop.f32.mrf.mxu0
        %v1407 = vadd.f32 0.0, %v1406
        %1408 = vmatmul.f32.gmra.mxu0 %v1290
        %v1409 = vpop.f32.mrf.mxu0
        %v1410 = vadd.f32 0.0, %v1409
        %1411 = vmatmul.f32.gmra.mxu0 %v1293
        %v1412 = vpop.f32.mrf.mxu0
        %v1413 = vadd.f32 0.0, %v1412
        %1414 = vmatmul.f32.gmra.mxu0 %v1296
        %v1415 = vpop.f32.mrf.mxu0
        %v1416 = vadd.f32 0.0, %v1415
        %1417 = vmatmul.f32.gmra.mxu0 %v1299
        %v1418 = vpop.f32.mrf.mxu0
        %v1419 = vadd.f32 0.0, %v1418
        %1420 = vmatmul.f32.gmra.mxu0 %v1302
        %v1421 = vpop.f32.mrf.mxu0
        %v1422 = vadd.f32 0.0, %v1421
        %1423 = vmatmul.f32.gmra.mxu0 %v1305
        %v1424 = vpop.f32.mrf.mxu0
        %v1425 = vadd.f32 0.0, %v1424
        %1426 = vmatmul.f32.gmra.mxu0 %v1308
        %v1427 = vpop.f32.mrf.mxu0
        %v1428 = vadd.f32 0.0, %v1427
        %1429 = vmatmul.f32.gmra.mxu0 %v1311
        %v1430 = vpop.f32.mrf.mxu0
        %v1431 = vadd.f32 0.0, %v1430
        %1432 = vmatmul.f32.gmra.mxu0 %v1314
        %v1433 = vpop.f32.mrf.mxu0
        %v1434 = vadd.f32 0.0, %v1433
        %1435 = vmatmul.f32.gmra.mxu0 %v1317
        %v1436 = vpop.f32.mrf.mxu0
        %v1437 = vadd.f32 0.0, %v1436
        %1438 = vmatmul.f32.gmra.mxu0 %v1320
        %v1439 = vpop.f32.mrf.mxu0
        %v1440 = vadd.f32 0.0, %v1439
        %1441 = vmatmul.f32.gmra.mxu0 %v1323
        %v1442 = vpop.f32.mrf.mxu0
        %v1443 = vadd.f32 0.0, %v1442
        %1444 = vmatmul.f32.gmra.mxu0 %v1326
        %v1445 = vpop.f32.mrf.mxu0
        %v1446 = vadd.f32 0.0, %v1445
        %1447 = vmatmul.f32.gmra.mxu0 %v1329
        %v1448 = vpop.f32.mrf.mxu0
        %v1449 = vadd.f32 0.0, %v1448
        %1450 = vmatmul.f32.gmra.mxu0 %v1332
        %v1451 = vpop.f32.mrf.mxu0
        %v1452 = vadd.f32 0.0, %v1451
        %1453 = vmatmul.f32.gmra.mxu0 %v1335
        %v1454 = vpop.f32.mrf.mxu0
        %v1455 = vadd.f32 0.0, %v1454
        %1456 = vmatmul.f32.gmra.mxu0 %v1338
        %v1457 = vpop.f32.mrf.mxu0
        %v1458 = vadd.f32 0.0, %v1457
        %1459 = vmatmul.f32.gmra.mxu0 %v1341
        %v1460 = vpop.f32.mrf.mxu0
        %v1461 = vadd.f32 0.0, %v1460
        %1462 = vmatmul.f32.gmra.mxu0 %v1344
        %v1463 = vpop.f32.mrf.mxu0
        %v1464 = vadd.f32 0.0, %v1463
        %1465 = vmatmul.f32.gmra.mxu0 %v1347
        %v1466 = vpop.f32.mrf.mxu0
        %v1467 = vadd.f32 0.0, %v1466
        %1468 = vmatmul.f32.gmra.mxu0 %v1350
        %v1469 = vpop.f32.mrf.mxu0
        %v1470 = vadd.f32 0.0, %v1469
        %1471 = vmatmul.f32.gmra.mxu0 %v1353
        %v1472 = vpop.f32.mrf.mxu0
        %v1473 = vadd.f32 0.0, %v1472
        %1474 = vmatmul.f32.gmra.mxu0 %v1356
        %v1475 = vpop.f32.mrf.mxu0
        %v1476 = vadd.f32 0.0, %v1475
        %1477 = vmatmul.f32.gmra.mxu0 %v1359
        %v1478 = vpop.f32.mrf.mxu0
        %v1479 = vadd.f32 0.0, %v1478
        %1480 = vmatmul.f32.gmra.mxu0 %v1362
        %v1481 = vpop.f32.mrf.mxu0
        %v1482 = vadd.f32 0.0, %v1481
        %1483 = vmatmul.f32.gmra.mxu0 %v1365
        %v1484 = vpop.f32.mrf.mxu0
        %v1485 = vadd.f32 0.0, %v1484
        %1486 = vmatmul.f32.gmra.mxu0 %v1368
        %v1487 = vpop.f32.mrf.mxu0
        %v1488 = vadd.f32 0.0, %v1487
        %1489 = vmatmul.f32.gmra.mxu0 %v1371
        %v1490 = vpop.f32.mrf.mxu0
        %v1491 = vadd.f32 0.0, %v1490
        %1492 = vdwg.mxu0
        %1493 = vmatpush.msra.mxu0 0.0
        %1494 = vmatpush.msra.mxu0 0.0
        %1495 = vmatpush.msra.mxu0 0.0
        %1496 = vmatpush.msra.mxu0 0.0
        %1497 = vmatpush.msra.mxu0 0.0
        %1498 = vmatpush.msra.mxu0 0.0
        %1499 = vmatpush.msra.mxu0 0.0
        %1500 = vmatpush.msra.mxu0 0.0
        %1501 = vmatpush.msra.mxu0 0.0
        %1502 = vmatpush.msra.mxu0 0.0
        %1503 = vmatpush.msra.mxu0 0.0
        %1504 = vmatpush.msra.mxu0 0.0
        %1505 = vmatpush.msra.mxu0 0.0
        %1506 = vmatpush.msra.mxu0 %v1378
        %1507 = vmatpush.msra.mxu0 %v1273
        %1508 = vmatpush.msra.mxu0 %v1271
        %1509 = vmatmul.f32.gmra.mxu0 %v1278
        %v1510 = vpop.f32.mrf.mxu0
        %v1511 = vadd.f32 0.0, %v1510
        %1512 = vmatmul.f32.gmra.mxu0 %v1281
        %v1513 = vpop.f32.mrf.mxu0
        %v1514 = vadd.f32 0.0, %v1513
        %1515 = vmatmul.f32.gmra.mxu0 %v1284
        %v1516 = vpop.f32.mrf.mxu0
        %v1517 = vadd.f32 0.0, %v1516
        %1518 = vmatmul.f32.gmra.mxu0 %v1287
        %v1519 = vpop.f32.mrf.mxu0
        %v1520 = vadd.f32 0.0, %v1519
        %1521 = vmatmul.f32.gmra.mxu0 %v1290
        %v1522 = vpop.f32.mrf.mxu0
        %v1523 = vadd.f32 0.0, %v1522
        %1524 = vmatmul.f32.gmra.mxu0 %v1293
        %v1525 = vpop.f32.mrf.mxu0
        %v1526 = vadd.f32 0.0, %v1525
        %1527 = vmatmul.f32.gmra.mxu0 %v1296
        %v1528 = vpop.f32.mrf.mxu0
        %v1529 = vadd.f32 0.0, %v1528
        %1530 = vmatmul.f32.gmra.mxu0 %v1299
        %v1531 = vpop.f32.mrf.mxu0
        %v1532 = vadd.f32 0.0, %v1531
        %1533 = vmatmul.f32.gmra.mxu0 %v1302
        %v1534 = vpop.f32.mrf.mxu0
        %v1535 = vadd.f32 0.0, %v1534
        %1536 = vmatmul.f32.gmra.mxu0 %v1305
        %v1537 = vpop.f32.mrf.mxu0
        %v1538 = vadd.f32 0.0, %v1537
        %1539 = vmatmul.f32.gmra.mxu0 %v1308
        %v1540 = vpop.f32.mrf.mxu0
        %v1541 = vadd.f32 0.0, %v1540
        %1542 = vmatmul.f32.gmra.mxu0 %v1311
        %v1543 = vpop.f32.mrf.mxu0
        %v1544 = vadd.f32 0.0, %v1543
        %1545 = vmatmul.f32.gmra.mxu0 %v1314
        %v1546 = vpop.f32.mrf.mxu0
        %v1547 = vadd.f32 0.0, %v1546
        %1548 = vmatmul.f32.gmra.mxu0 %v1317
        %v1549 = vpop.f32.mrf.mxu0
        %v1550 = vadd.f32 0.0, %v1549
        %1551 = vmatmul.f32.gmra.mxu0 %v1320
        %v1552 = vpop.f32.mrf.mxu0
        %v1553 = vadd.f32 0.0, %v1552
        %1554 = vmatmul.f32.gmra.mxu0 %v1323
        %v1555 = vpop.f32.mrf.mxu0
        %v1556 = vadd.f32 0.0, %v1555
        %1557 = vmatmul.f32.gmra.mxu0 %v1326
        %v1558 = vpop.f32.mrf.mxu0
        %v1559 = vadd.f32 0.0, %v1558
        %1560 = vmatmul.f32.gmra.mxu0 %v1329
        %v1561 = vpop.f32.mrf.mxu0
        %v1562 = vadd.f32 0.0, %v1561
        %1563 = vmatmul.f32.gmra.mxu0 %v1332
        %v1564 = vpop.f32.mrf.mxu0
        %v1565 = vadd.f32 0.0, %v1564
        %1566 = vmatmul.f32.gmra.mxu0 %v1335
        %v1567 = vpop.f32.mrf.mxu0
        %v1568 = vadd.f32 0.0, %v1567
        %1569 = vmatmul.f32.gmra.mxu0 %v1338
        %v1570 = vpop.f32.mrf.mxu0
        %v1571 = vadd.f32 0.0, %v1570
        %1572 = vmatmul.f32.gmra.mxu0 %v1341
        %v1573 = vpop.f32.mrf.mxu0
        %v1574 = vadd.f32 0.0, %v1573
        %1575 = vmatmul.f32.gmra.mxu0 %v1344
        %v1576 = vpop.f32.mrf.mxu0
        %v1577 = vadd.f32 0.0, %v1576
        %1578 = vmatmul.f32.gmra.mxu0 %v1347
        %v1579 = vpop.f32.mrf.mxu0
        %v1580 = vadd.f32 0.0, %v1579
        %1581 = vmatmul.f32.gmra.mxu0 %v1350
        %v1582 = vpop.f32.mrf.mxu0
        %v1583 = vadd.f32 0.0, %v1582
        %1584 = vmatmul.f32.gmra.mxu0 %v1353
        %v1585 = vpop.f32.mrf.mxu0
        %v1586 = vadd.f32 0.0, %v1585
        %1587 = vmatmul.f32.gmra.mxu0 %v1356
        %v1588 = vpop.f32.mrf.mxu0
        %v1589 = vadd.f32 0.0, %v1588
        %1590 = vmatmul.f32.gmra.mxu0 %v1359
        %v1591 = vpop.f32.mrf.mxu0
        %v1592 = vadd.f32 0.0, %v1591
        %1593 = vmatmul.f32.gmra.mxu0 %v1362
        %v1594 = vpop.f32.mrf.mxu0
        %v1595 = vadd.f32 0.0, %v1594
        %1596 = vmatmul.f32.gmra.mxu0 %v1365
        %v1597 = vpop.f32.mrf.mxu0
        %v1598 = vadd.f32 0.0, %v1597
        %1599 = vmatmul.f32.gmra.mxu0 %v1368
        %v1600 = vpop.f32.mrf.mxu0
        %v1601 = vadd.f32 0.0, %v1600
        %1602 = vmatmul.f32.gmra.mxu0 %v1371
        %v1603 = vpop.f32.mrf.mxu0
        %v1604 = vadd.f32 0.0, %v1603
        %1605 = vdwg.mxu0
        %v1606 = vld [vmem:[%s508] sm:$0xff]
        %v1607 = vld [vmem:[%s508 + $0x8] sm:$0xff]
        %v1608 = vld [vmem:[%s508 + $0x10] sm:$0xff]
        %v1609 = vld [vmem:[%s508 + $0x18] sm:$0xff]
        %v1610 = vld [vmem:[%s508 + $0x20] sm:$0xff]
        %v1611 = vld [vmem:[%s508 + $0x28] sm:$0xff]
        %v1612 = vld [vmem:[%s508 + $0x30] sm:$0xff]
        %v1613 = vld [vmem:[%s508 + $0x38] sm:$0xff]
        %v1614 = vld [vmem:[%s508 + $0x40] sm:$0xff]
        %v1615 = vld [vmem:[%s508 + $0x48] sm:$0xff]
        %v1616 = vld [vmem:[%s508 + $0x50] sm:$0xff]
        %v1617 = vld [vmem:[%s508 + $0x58] sm:$0xff]
        %v1618 = vld [vmem:[%s508 + $0x60] sm:$0xff]
        %v1619 = vld [vmem:[%s508 + $0x68] sm:$0xff]
        %v1620 = vld [vmem:[%s508 + $0x70] sm:$0xff]
        %v1621 = vld [vmem:[%s508 + $0x78] sm:$0xff]
        %v1622 = vld [vmem:[%s508 + $0x80] sm:$0xff]
        %v1623 = vld [vmem:[%s508 + $0x88] sm:$0xff]
        %v1624 = vld [vmem:[%s508 + $0x90] sm:$0xff]
        %v1625 = vld [vmem:[%s508 + $0x98] sm:$0xff]
        %v1626 = vld [vmem:[%s508 + $0xa0] sm:$0xff]
        %v1627 = vld [vmem:[%s508 + $0xa8] sm:$0xff]
        %v1628 = vld [vmem:[%s508 + $0xb0] sm:$0xff]
        %v1629 = vld [vmem:[%s508 + $0xb8] sm:$0xff]
        %v1630 = vld [vmem:[%s508 + $0xc0] sm:$0xff]
        %v1631 = vld [vmem:[%s508 + $0xc8] sm:$0xff]
        %v1632 = vld [vmem:[%s508 + $0xd0] sm:$0xff]
        %v1633 = vld [vmem:[%s508 + $0xd8] sm:$0xff]
        %v1634 = vld [vmem:[%s508 + $0xe0] sm:$0xff]
        %v1635 = vld [vmem:[%s508 + $0xe8] sm:$0xff]
        %v1636 = vld [vmem:[%s508 + $0xf0] sm:$0xff]
        %v1637 = vld [vmem:[%s508 + $0xf8] sm:$0xff]
        %v1638 = vld [vmem:[%s9] sm:$0xff]
        %v1639 = vld [vmem:[%s9 + $0x8] sm:$0xff]
        %v1640 = vld [vmem:[%s9 + $0x10] sm:$0xff]
        %v1641 = vld [vmem:[%s9 + $0x18] sm:$0xff]
        %v1642 = vld [vmem:[%s9 + $0x20] sm:$0xff]
        %v1643 = vld [vmem:[%s9 + $0x28] sm:$0xff]
        %v1644 = vld [vmem:[%s9 + $0x30] sm:$0xff]
        %v1645 = vld [vmem:[%s9 + $0x38] sm:$0xff]
        %v1646 = vld [vmem:[%s9 + $0x40] sm:$0xff]
        %v1647 = vld [vmem:[%s9 + $0x48] sm:$0xff]
        %v1648 = vld [vmem:[%s9 + $0x50] sm:$0xff]
        %v1649 = vld [vmem:[%s9 + $0x58] sm:$0xff]
        %v1650 = vld [vmem:[%s9 + $0x60] sm:$0xff]
        %v1651 = vld [vmem:[%s9 + $0x68] sm:$0xff]
        %v1652 = vld [vmem:[%s9 + $0x70] sm:$0xf]
        %v1653 = vld [vmem:[%s9 + $0x78] sm:$0xf]
        %vm1654 = vcmask 490496
        %v1656 = vsel %vm1654, %v1606, 0
        %v1659 = vsel %vm1654, %v1607, 0
        %v1662 = vsel %vm1654, %v1608, 0
        %v1665 = vsel %vm1654, %v1609, 0
        %v1668 = vsel %vm1654, %v1610, 0
        %v1671 = vsel %vm1654, %v1611, 0
        %v1674 = vsel %vm1654, %v1612, 0
        %v1677 = vsel %vm1654, %v1613, 0
        %v1680 = vsel %vm1654, %v1614, 0
        %v1683 = vsel %vm1654, %v1615, 0
        %v1686 = vsel %vm1654, %v1616, 0
        %v1689 = vsel %vm1654, %v1617, 0
        %v1692 = vsel %vm1654, %v1618, 0
        %v1695 = vsel %vm1654, %v1619, 0
        %v1698 = vsel %vm1654, %v1620, 0
        %v1701 = vsel %vm1654, %v1621, 0
        %v1704 = vsel %vm1654, %v1622, 0
        %v1707 = vsel %vm1654, %v1623, 0
        %v1710 = vsel %vm1654, %v1624, 0
        %v1713 = vsel %vm1654, %v1625, 0
        %v1716 = vsel %vm1654, %v1626, 0
        %v1719 = vsel %vm1654, %v1627, 0
        %v1722 = vsel %vm1654, %v1628, 0
        %v1725 = vsel %vm1654, %v1629, 0
        %v1728 = vsel %vm1654, %v1630, 0
        %v1731 = vsel %vm1654, %v1631, 0
        %v1734 = vsel %vm1654, %v1632, 0
        %v1737 = vsel %vm1654, %v1633, 0
        %v1740 = vsel %vm1654, %v1634, 0
        %v1743 = vsel %vm1654, %v1635, 0
        %v1746 = vsel %vm1654, %v1636, 0
        %v1749 = vsel %vm1654, %v1637, 0
        %v1752 = vsel %vm1373, %v1652, 0
        %v1755 = vsel %vm1373, %v1653, 0
        %1757 = vmatpush.msra.mxu0 0.0
        %1758 = vmatpush.msra.mxu0 0.0
        %1759 = vmatpush.msra.mxu0 0.0
        %1760 = vmatpush.msra.mxu0 0.0
        %1761 = vmatpush.msra.mxu0 0.0
        %1762 = vmatpush.msra.mxu0 0.0
        %1763 = vmatpush.msra.mxu0 0.0
        %1764 = vmatpush.msra.mxu0 0.0
        %1765 = vmatpush.msra.mxu0 %v1752
        %1766 = vmatpush.msra.mxu0 %v1650
        %1767 = vmatpush.msra.mxu0 %v1648
        %1768 = vmatpush.msra.mxu0 %v1646
        %1769 = vmatpush.msra.mxu0 %v1644
        %1770 = vmatpush.msra.mxu0 %v1642
        %1771 = vmatpush.msra.mxu0 %v1640
        %1772 = vmatpush.msra.mxu0 %v1638
        %1773 = vmatmul.f32.gmra.mxu0 %v1656
        %v1774 = vpop.f32.mrf.mxu0
        %v1775 = vadd.f32 0.0, %v1774
        %1776 = vmatmul.f32.gmra.mxu0 %v1659
        %v1777 = vpop.f32.mrf.mxu0
        %v1778 = vadd.f32 0.0, %v1777
        %1779 = vmatmul.f32.gmra.mxu0 %v1662
        %v1780 = vpop.f32.mrf.mxu0
        %v1781 = vadd.f32 0.0, %v1780
        %1782 = vmatmul.f32.gmra.mxu0 %v1665
        %v1783 = vpop.f32.mrf.mxu0
        %v1784 = vadd.f32 0.0, %v1783
        %1785 = vmatmul.f32.gmra.mxu0 %v1668
        %v1786 = vpop.f32.mrf.mxu0
        %v1787 = vadd.f32 0.0, %v1786
        %1788 = vmatmul.f32.gmra.mxu0 %v1671
        %v1789 = vpop.f32.mrf.mxu0
        %v1790 = vadd.f32 0.0, %v1789
        %1791 = vmatmul.f32.gmra.mxu0 %v1674
        %v1792 = vpop.f32.mrf.mxu0
        %v1793 = vadd.f32 0.0, %v1792
        %1794 = vmatmul.f32.gmra.mxu0 %v1677
        %v1795 = vpop.f32.mrf.mxu0
        %v1796 = vadd.f32 0.0, %v1795
        %1797 = vmatmul.f32.gmra.mxu0 %v1680
        %v1798 = vpop.f32.mrf.mxu0
        %v1799 = vadd.f32 0.0, %v1798
        %1800 = vmatmul.f32.gmra.mxu0 %v1683
        %v1801 = vpop.f32.mrf.mxu0
        %v1802 = vadd.f32 0.0, %v1801
        %1803 = vmatmul.f32.gmra.mxu0 %v1686
        %v1804 = vpop.f32.mrf.mxu0
        %v1805 = vadd.f32 0.0, %v1804
        %1806 = vmatmul.f32.gmra.mxu0 %v1689
        %v1807 = vpop.f32.mrf.mxu0
        %v1808 = vadd.f32 0.0, %v1807
        %1809 = vmatmul.f32.gmra.mxu0 %v1692
        %v1810 = vpop.f32.mrf.mxu0
        %v1811 = vadd.f32 0.0, %v1810
        %1812 = vmatmul.f32.gmra.mxu0 %v1695
        %v1813 = vpop.f32.mrf.mxu0
        %v1814 = vadd.f32 0.0, %v1813
        %1815 = vmatmul.f32.gmra.mxu0 %v1698
        %v1816 = vpop.f32.mrf.mxu0
        %v1817 = vadd.f32 0.0, %v1816
        %1818 = vmatmul.f32.gmra.mxu0 %v1701
        %v1819 = vpop.f32.mrf.mxu0
        %v1820 = vadd.f32 0.0, %v1819
        %1821 = vmatmul.f32.gmra.mxu0 %v1704
        %v1822 = vpop.f32.mrf.mxu0
        %v1823 = vadd.f32 0.0, %v1822
        %1824 = vmatmul.f32.gmra.mxu0 %v1707
        %v1825 = vpop.f32.mrf.mxu0
        %v1826 = vadd.f32 0.0, %v1825
        %1827 = vmatmul.f32.gmra.mxu0 %v1710
        %v1828 = vpop.f32.mrf.mxu0
        %v1829 = vadd.f32 0.0, %v1828
        %1830 = vmatmul.f32.gmra.mxu0 %v1713
        %v1831 = vpop.f32.mrf.mxu0
        %v1832 = vadd.f32 0.0, %v1831
        %1833 = vmatmul.f32.gmra.mxu0 %v1716
        %v1834 = vpop.f32.mrf.mxu0
        %v1835 = vadd.f32 0.0, %v1834
        %1836 = vmatmul.f32.gmra.mxu0 %v1719
        %v1837 = vpop.f32.mrf.mxu0
        %v1838 = vadd.f32 0.0, %v1837
        %1839 = vmatmul.f32.gmra.mxu0 %v1722
        %v1840 = vpop.f32.mrf.mxu0
        %v1841 = vadd.f32 0.0, %v1840
        %1842 = vmatmul.f32.gmra.mxu0 %v1725
        %v1843 = vpop.f32.mrf.mxu0
        %v1844 = vadd.f32 0.0, %v1843
        %1845 = vmatmul.f32.gmra.mxu0 %v1728
        %v1846 = vpop.f32.mrf.mxu0
        %v1847 = vadd.f32 0.0, %v1846
        %1848 = vmatmul.f32.gmra.mxu0 %v1731
        %v1849 = vpop.f32.mrf.mxu0
        %v1850 = vadd.f32 0.0, %v1849
        %1851 = vmatmul.f32.gmra.mxu0 %v1734
        %v1852 = vpop.f32.mrf.mxu0
        %v1853 = vadd.f32 0.0, %v1852
        %1854 = vmatmul.f32.gmra.mxu0 %v1737
        %v1855 = vpop.f32.mrf.mxu0
        %v1856 = vadd.f32 0.0, %v1855
        %1857 = vmatmul.f32.gmra.mxu0 %v1740
        %v1858 = vpop.f32.mrf.mxu0
        %v1859 = vadd.f32 0.0, %v1858
        %1860 = vmatmul.f32.gmra.mxu0 %v1743
        %v1861 = vpop.f32.mrf.mxu0
        %v1862 = vadd.f32 0.0, %v1861
        %1863 = vmatmul.f32.gmra.mxu0 %v1746
        %v1864 = vpop.f32.mrf.mxu0
        %v1865 = vadd.f32 0.0, %v1864
        %1866 = vmatmul.f32.gmra.mxu0 %v1749
        %v1867 = vpop.f32.mrf.mxu0
        %v1868 = vadd.f32 0.0, %v1867
        %1869 = vdwg.mxu0
        %1870 = vmatpush.msra.mxu0 0.0
        %1871 = vmatpush.msra.mxu0 0.0
        %1872 = vmatpush.msra.mxu0 0.0
        %1873 = vmatpush.msra.mxu0 0.0
        %1874 = vmatpush.msra.mxu0 0.0
        %1875 = vmatpush.msra.mxu0 0.0
        %1876 = vmatpush.msra.mxu0 0.0
        %1877 = vmatpush.msra.mxu0 0.0
        %1878 = vmatpush.msra.mxu0 %v1755
        %1879 = vmatpush.msra.mxu0 %v1651
        %1880 = vmatpush.msra.mxu0 %v1649
        %1881 = vmatpush.msra.mxu0 %v1647
        %1882 = vmatpush.msra.mxu0 %v1645
        %1883 = vmatpush.msra.mxu0 %v1643
        %1884 = vmatpush.msra.mxu0 %v1641
        %1885 = vmatpush.msra.mxu0 %v1639
        %1886 = vmatmul.f32.gmra.mxu0 %v1656
        %v1887 = vpop.f32.mrf.mxu0
        %v1888 = vadd.f32 0.0, %v1887
        %1889 = vmatmul.f32.gmra.mxu0 %v1659
        %v1890 = vpop.f32.mrf.mxu0
        %v1891 = vadd.f32 0.0, %v1890
        %1892 = vmatmul.f32.gmra.mxu0 %v1662
        %v1893 = vpop.f32.mrf.mxu0
        %v1894 = vadd.f32 0.0, %v1893
        %1895 = vmatmul.f32.gmra.mxu0 %v1665
        %v1896 = vpop.f32.mrf.mxu0
        %v1897 = vadd.f32 0.0, %v1896
        %1898 = vmatmul.f32.gmra.mxu0 %v1668
        %v1899 = vpop.f32.mrf.mxu0
        %v1900 = vadd.f32 0.0, %v1899
        %1901 = vmatmul.f32.gmra.mxu0 %v1671
        %v1902 = vpop.f32.mrf.mxu0
        %v1903 = vadd.f32 0.0, %v1902
        %1904 = vmatmul.f32.gmra.mxu0 %v1674
        %v1905 = vpop.f32.mrf.mxu0
        %v1906 = vadd.f32 0.0, %v1905
        %1907 = vmatmul.f32.gmra.mxu0 %v1677
        %v1908 = vpop.f32.mrf.mxu0
        %v1909 = vadd.f32 0.0, %v1908
        %1910 = vmatmul.f32.gmra.mxu0 %v1680
        %v1911 = vpop.f32.mrf.mxu0
        %v1912 = vadd.f32 0.0, %v1911
        %1913 = vmatmul.f32.gmra.mxu0 %v1683
        %v1914 = vpop.f32.mrf.mxu0
        %v1915 = vadd.f32 0.0, %v1914
        %1916 = vmatmul.f32.gmra.mxu0 %v1686
        %v1917 = vpop.f32.mrf.mxu0
        %v1918 = vadd.f32 0.0, %v1917
        %1919 = vmatmul.f32.gmra.mxu0 %v1689
        %v1920 = vpop.f32.mrf.mxu0
        %v1921 = vadd.f32 0.0, %v1920
        %1922 = vmatmul.f32.gmra.mxu0 %v1692
        %v1923 = vpop.f32.mrf.mxu0
        %v1924 = vadd.f32 0.0, %v1923
        %1925 = vmatmul.f32.gmra.mxu0 %v1695
        %v1926 = vpop.f32.mrf.mxu0
        %v1927 = vadd.f32 0.0, %v1926
        %1928 = vmatmul.f32.gmra.mxu0 %v1698
        %v1929 = vpop.f32.mrf.mxu0
        %v1930 = vadd.f32 0.0, %v1929
        %1931 = vmatmul.f32.gmra.mxu0 %v1701
        %v1932 = vpop.f32.mrf.mxu0
        %v1933 = vadd.f32 0.0, %v1932
        %1934 = vmatmul.f32.gmra.mxu0 %v1704
        %v1935 = vpop.f32.mrf.mxu0
        %v1936 = vadd.f32 0.0, %v1935
        %1937 = vmatmul.f32.gmra.mxu0 %v1707
        %v1938 = vpop.f32.mrf.mxu0
        %v1939 = vadd.f32 0.0, %v1938
        %1940 = vmatmul.f32.gmra.mxu0 %v1710
        %v1941 = vpop.f32.mrf.mxu0
        %v1942 = vadd.f32 0.0, %v1941
        %1943 = vmatmul.f32.gmra.mxu0 %v1713
        %v1944 = vpop.f32.mrf.mxu0
        %v1945 = vadd.f32 0.0, %v1944
        %1946 = vmatmul.f32.gmra.mxu0 %v1716
        %v1947 = vpop.f32.mrf.mxu0
        %v1948 = vadd.f32 0.0, %v1947
        %1949 = vmatmul.f32.gmra.mxu0 %v1719
        %v1950 = vpop.f32.mrf.mxu0
        %v1951 = vadd.f32 0.0, %v1950
        %1952 = vmatmul.f32.gmra.mxu0 %v1722
        %v1953 = vpop.f32.mrf.mxu0
        %v1954 = vadd.f32 0.0, %v1953
        %1955 = vmatmul.f32.gmra.mxu0 %v1725
        %v1956 = vpop.f32.mrf.mxu0
        %v1957 = vadd.f32 0.0, %v1956
        %1958 = vmatmul.f32.gmra.mxu0 %v1728
        %v1959 = vpop.f32.mrf.mxu0
        %v1960 = vadd.f32 0.0, %v1959
        %1961 = vmatmul.f32.gmra.mxu0 %v1731
        %v1962 = vpop.f32.mrf.mxu0
        %v1963 = vadd.f32 0.0, %v1962
        %1964 = vmatmul.f32.gmra.mxu0 %v1734
        %v1965 = vpop.f32.mrf.mxu0
        %v1966 = vadd.f32 0.0, %v1965
        %1967 = vmatmul.f32.gmra.mxu0 %v1737
        %v1968 = vpop.f32.mrf.mxu0
        %v1969 = vadd.f32 0.0, %v1968
        %1970 = vmatmul.f32.gmra.mxu0 %v1740
        %v1971 = vpop.f32.mrf.mxu0
        %v1972 = vadd.f32 0.0, %v1971
        %1973 = vmatmul.f32.gmra.mxu0 %v1743
        %v1974 = vpop.f32.mrf.mxu0
        %v1975 = vadd.f32 0.0, %v1974
        %1976 = vmatmul.f32.gmra.mxu0 %v1746
        %v1977 = vpop.f32.mrf.mxu0
        %v1978 = vadd.f32 0.0, %v1977
        %1979 = vmatmul.f32.gmra.mxu0 %v1749
        %v1980 = vpop.f32.mrf.mxu0
        %v1981 = vadd.f32 0.0, %v1980
        %1982 = vdwg.mxu0
        %v1983 = vmul.f32 %v1398, %v1775
        %v1984 = vmul.f32 %v1511, %v1888
        %v1985 = vmul.f32 %v1401, %v1778
        %v1986 = vmul.f32 %v1514, %v1891
        %v1987 = vmul.f32 %v1404, %v1781
        %v1988 = vmul.f32 %v1517, %v1894
        %v1989 = vmul.f32 %v1407, %v1784
        %v1990 = vmul.f32 %v1520, %v1897
        %v1991 = vmul.f32 %v1410, %v1787
        %v1992 = vmul.f32 %v1523, %v1900
        %v1993 = vmul.f32 %v1413, %v1790
        %v1994 = vmul.f32 %v1526, %v1903
        %v1995 = vmul.f32 %v1416, %v1793
        %v1996 = vmul.f32 %v1529, %v1906
        %v1997 = vmul.f32 %v1419, %v1796
        %v1998 = vmul.f32 %v1532, %v1909
        %v1999 = vmul.f32 %v1422, %v1799
        %v2000 = vmul.f32 %v1535, %v1912
        %v2001 = vmul.f32 %v1425, %v1802
        %v2002 = vmul.f32 %v1538, %v1915
        %v2003 = vmul.f32 %v1428, %v1805
        %v2004 = vmul.f32 %v1541, %v1918
        %v2005 = vmul.f32 %v1431, %v1808
        %v2006 = vmul.f32 %v1544, %v1921
        %v2007 = vmul.f32 %v1434, %v1811
        %v2008 = vmul.f32 %v1547, %v1924
        %v2009 = vmul.f32 %v1437, %v1814
        %v2010 = vmul.f32 %v1550, %v1927
        %v2011 = vmul.f32 %v1440, %v1817
        %v2012 = vmul.f32 %v1553, %v1930
        %v2013 = vmul.f32 %v1443, %v1820
        %v2014 = vmul.f32 %v1556, %v1933
        %v2015 = vmul.f32 %v1446, %v1823
        %v2016 = vmul.f32 %v1559, %v1936
        %v2017 = vmul.f32 %v1449, %v1826
        %v2018 = vmul.f32 %v1562, %v1939
        %v2019 = vmul.f32 %v1452, %v1829
        %v2020 = vmul.f32 %v1565, %v1942
        %v2021 = vmul.f32 %v1455, %v1832
        %v2022 = vmul.f32 %v1568, %v1945
        %v2023 = vmul.f32 %v1458, %v1835
        %v2024 = vmul.f32 %v1571, %v1948
        %v2025 = vmul.f32 %v1461, %v1838
        %v2026 = vmul.f32 %v1574, %v1951
        %v2027 = vmul.f32 %v1464, %v1841
        %v2028 = vmul.f32 %v1577, %v1954
        %v2029 = vmul.f32 %v1467, %v1844
        %v2030 = vmul.f32 %v1580, %v1957
        %v2031 = vmul.f32 %v1470, %v1847
        %v2032 = vmul.f32 %v1583, %v1960
        %v2033 = vmul.f32 %v1473, %v1850
        %v2034 = vmul.f32 %v1586, %v1963
        %v2035 = vmul.f32 %v1476, %v1853
        %v2036 = vmul.f32 %v1589, %v1966
        %v2037 = vmul.f32 %v1479, %v1856
        %v2038 = vmul.f32 %v1592, %v1969
        %v2039 = vmul.f32 %v1482, %v1859
        %v2040 = vmul.f32 %v1595, %v1972
        %v2041 = vmul.f32 %v1485, %v1862
        %v2042 = vmul.f32 %v1598, %v1975
        %v2043 = vmul.f32 %v1488, %v1865
        %v2044 = vmul.f32 %v1601, %v1978
        %v2045 = vmul.f32 %v1491, %v1868
        %v2046 = vmul.f32 %v1604, %v1981
        %v2047 = vld [vmem:[%s10] sm:$0xff]
        %v2048 = vld [vmem:[%s10 + $0x8] sm:$0xff]
        %v2049 = vld [vmem:[%s10 + $0x10] sm:$0xff]
        %v2050 = vld [vmem:[%s10 + $0x18] sm:$0xff]
        %v2051 = vld [vmem:[%s10 + $0x20] sm:$0xff]
        %v2052 = vld [vmem:[%s10 + $0x28] sm:$0xff]
        %v2053 = vld [vmem:[%s10 + $0x30] sm:$0xff]
        %v2054 = vld [vmem:[%s10 + $0x38] sm:$0xff]
        %v2055 = vld [vmem:[%s10 + $0x40] sm:$0xff]
        %v2056 = vld [vmem:[%s10 + $0x48] sm:$0xff]
        %v2057 = vld [vmem:[%s10 + $0x50] sm:$0xff]
        %v2058 = vld [vmem:[%s10 + $0x58] sm:$0xff]
        %v2059 = vld [vmem:[%s10 + $0x60] sm:$0xff]
        %v2060 = vld [vmem:[%s10 + $0x68] sm:$0xff]
        %v2061 = vld [vmem:[%s10 + $0x70] sm:$0xff]
        %v2062 = vld [vmem:[%s10 + $0x78] sm:$0xff]
        %v2063 = vld [vmem:[%s10 + $0x80] sm:$0xff]
        %v2064 = vld [vmem:[%s10 + $0x88] sm:$0xff]
        %v2065 = vld [vmem:[%s10 + $0x90] sm:$0xff]
        %v2066 = vld [vmem:[%s10 + $0x98] sm:$0xff]
        %v2067 = vld [vmem:[%s10 + $0xa0] sm:$0xff]
        %v2068 = vld [vmem:[%s10 + $0xa8] sm:$0xff]
        %v2069 = vld [vmem:[%s10 + $0xb0] sm:$0xff]
        %v2070 = vld [vmem:[%s10 + $0xb8] sm:$0xff]
        %v2071 = vld [vmem:[%s10 + $0xc0] sm:$0xff]
        %v2072 = vld [vmem:[%s10 + $0xc8] sm:$0xff]
        %v2073 = vld [vmem:[%s10 + $0xd0] sm:$0xff]
        %v2074 = vld [vmem:[%s10 + $0xd8] sm:$0xff]
        %v2075 = vld [vmem:[%s10 + $0xe0] sm:$0xff]
        %v2076 = vld [vmem:[%s10 + $0xe8] sm:$0xff]
        %v2077 = vld [vmem:[%s10 + $0xf0] sm:$0xff]
        %v2078 = vld [vmem:[%s10 + $0xf8] sm:$0xff]
        %v2079 = vld [vmem:[%s10 + $0x100] sm:$0xff]
        %v2080 = vld [vmem:[%s10 + $0x108] sm:$0xff]
        %v2081 = vld [vmem:[%s10 + $0x110] sm:$0xff]
        %v2082 = vld [vmem:[%s10 + $0x118] sm:$0xff]
        %v2083 = vld [vmem:[%s10 + $0x120] sm:$0xff]
        %v2084 = vld [vmem:[%s10 + $0x128] sm:$0xff]
        %v2085 = vld [vmem:[%s10 + $0x130] sm:$0xff]
        %v2086 = vld [vmem:[%s10 + $0x138] sm:$0xff]
        %v2087 = vld [vmem:[%s10 + $0x140] sm:$0xff]
        %v2088 = vld [vmem:[%s10 + $0x148] sm:$0xff]
        %v2089 = vld [vmem:[%s10 + $0x150] sm:$0xff]
        %v2090 = vld [vmem:[%s10 + $0x158] sm:$0xff]
        %v2091 = vld [vmem:[%s10 + $0x160] sm:$0xff]
        %v2092 = vld [vmem:[%s10 + $0x168] sm:$0xff]
        %v2093 = vld [vmem:[%s10 + $0x170] sm:$0xff]
        %v2094 = vld [vmem:[%s10 + $0x178] sm:$0xff]
        %v2095 = vld [vmem:[%s10 + $0x180] sm:$0xff]
        %v2096 = vld [vmem:[%s10 + $0x188] sm:$0xff]
        %v2097 = vld [vmem:[%s10 + $0x190] sm:$0xff]
        %v2098 = vld [vmem:[%s10 + $0x198] sm:$0xff]
        %v2099 = vld [vmem:[%s10 + $0x1a0] sm:$0xff]
        %v2100 = vld [vmem:[%s10 + $0x1a8] sm:$0xff]
        %v2101 = vld [vmem:[%s10 + $0x1b0] sm:$0xff]
        %v2102 = vld [vmem:[%s10 + $0x1b8] sm:$0xff]
        %v2103 = vld [vmem:[%s10 + $0x1c0] sm:$0xff]
        %v2104 = vld [vmem:[%s10 + $0x1c8] sm:$0xff]
        %v2105 = vld [vmem:[%s10 + $0x1d0] sm:$0xff]
        %v2106 = vld [vmem:[%s10 + $0x1d8] sm:$0xff]
        %vm2107 = vcmask 916480
        %v2109 = vsel %vm2107, %v1984, 0
        %v2112 = vsel %vm2107, %v1986, 0
        %v2115 = vsel %vm2107, %v1988, 0
        %v2118 = vsel %vm2107, %v1990, 0
        %v2121 = vsel %vm2107, %v1992, 0
        %v2124 = vsel %vm2107, %v1994, 0
        %v2127 = vsel %vm2107, %v1996, 0
        %v2130 = vsel %vm2107, %v1998, 0
        %v2133 = vsel %vm2107, %v2000, 0
        %v2136 = vsel %vm2107, %v2002, 0
        %v2139 = vsel %vm2107, %v2004, 0
        %v2142 = vsel %vm2107, %v2006, 0
        %v2145 = vsel %vm2107, %v2008, 0
        %v2148 = vsel %vm2107, %v2010, 0
        %v2151 = vsel %vm2107, %v2012, 0
        %v2154 = vsel %vm2107, %v2014, 0
        %v2157 = vsel %vm2107, %v2016, 0
        %v2160 = vsel %vm2107, %v2018, 0
        %v2163 = vsel %vm2107, %v2020, 0
        %v2166 = vsel %vm2107, %v2022, 0
        %v2169 = vsel %vm2107, %v2024, 0
        %v2172 = vsel %vm2107, %v2026, 0
        %v2175 = vsel %vm2107, %v2028, 0
        %v2178 = vsel %vm2107, %v2030, 0
        %v2181 = vsel %vm2107, %v2032, 0
        %v2184 = vsel %vm2107, %v2034, 0
        %v2187 = vsel %vm2107, %v2036, 0
        %v2190 = vsel %vm2107, %v2038, 0
        %v2193 = vsel %vm2107, %v2040, 0
        %v2196 = vsel %vm2107, %v2042, 0
        %v2199 = vsel %vm2107, %v2044, 0
        %v2202 = vsel %vm2107, %v2046, 0
        %2204 = vmatpush.msra.mxu0 %v2077
        %2205 = vmatpush.msra.mxu0 %v2075
        %2206 = vmatpush.msra.mxu0 %v2073
        %2207 = vmatpush.msra.mxu0 %v2071
        %2208 = vmatpush.msra.mxu0 %v2069
        %2209 = vmatpush.msra.mxu0 %v2067
        %2210 = vmatpush.msra.mxu0 %v2065
        %2211 = vmatpush.msra.mxu0 %v2063
        %2212 = vmatpush.msra.mxu0 %v2061
        %2213 = vmatpush.msra.mxu0 %v2059
        %2214 = vmatpush.msra.mxu0 %v2057
        %2215 = vmatpush.msra.mxu0 %v2055
        %2216 = vmatpush.msra.mxu0 %v2053
        %2217 = vmatpush.msra.mxu0 %v2051
        %2218 = vmatpush.msra.mxu0 %v2049
        %2219 = vmatpush.msra.mxu0 %v2047
        %2220 = vmatmul.f32.gmra.mxu0 %v1983
        %v2221 = vpop.f32.mrf.mxu0
        %v2222 = vadd.f32 0.0, %v2221
        %2223 = vmatmul.f32.gmra.mxu0 %v1985
        %v2224 = vpop.f32.mrf.mxu0
        %v2225 = vadd.f32 0.0, %v2224
        %2226 = vmatmul.f32.gmra.mxu0 %v1987
        %v2227 = vpop.f32.mrf.mxu0
        %v2228 = vadd.f32 0.0, %v2227
        %2229 = vmatmul.f32.gmra.mxu0 %v1989
        %v2230 = vpop.f32.mrf.mxu0
        %v2231 = vadd.f32 0.0, %v2230
        %2232 = vmatmul.f32.gmra.mxu0 %v1991
        %v2233 = vpop.f32.mrf.mxu0
        %v2234 = vadd.f32 0.0, %v2233
        %2235 = vmatmul.f32.gmra.mxu0 %v1993
        %v2236 = vpop.f32.mrf.mxu0
        %v2237 = vadd.f32 0.0, %v2236
        %2238 = vmatmul.f32.gmra.mxu0 %v1995
        %v2239 = vpop.f32.mrf.mxu0
        %v2240 = vadd.f32 0.0, %v2239
        %2241 = vmatmul.f32.gmra.mxu0 %v1997
        %v2242 = vpop.f32.mrf.mxu0
        %v2243 = vadd.f32 0.0, %v2242
        %2244 = vmatmul.f32.gmra.mxu0 %v1999
        %v2245 = vpop.f32.mrf.mxu0
        %v2246 = vadd.f32 0.0, %v2245
        %2247 = vmatmul.f32.gmra.mxu0 %v2001
        %v2248 = vpop.f32.mrf.mxu0
        %v2249 = vadd.f32 0.0, %v2248
        %2250 = vmatmul.f32.gmra.mxu0 %v2003
        %v2251 = vpop.f32.mrf.mxu0
        %v2252 = vadd.f32 0.0, %v2251
        %2253 = vmatmul.f32.gmra.mxu0 %v2005
        %v2254 = vpop.f32.mrf.mxu0
        %v2255 = vadd.f32 0.0, %v2254
        %2256 = vmatmul.f32.gmra.mxu0 %v2007
        %v2257 = vpop.f32.mrf.mxu0
        %v2258 = vadd.f32 0.0, %v2257
        %2259 = vmatmul.f32.gmra.mxu0 %v2009
        %v2260 = vpop.f32.mrf.mxu0
        %v2261 = vadd.f32 0.0, %v2260
        %2262 = vmatmul.f32.gmra.mxu0 %v2011
        %v2263 = vpop.f32.mrf.mxu0
        %v2264 = vadd.f32 0.0, %v2263
        %2265 = vmatmul.f32.gmra.mxu0 %v2013
        %v2266 = vpop.f32.mrf.mxu0
        %v2267 = vadd.f32 0.0, %v2266
        %2268 = vmatmul.f32.gmra.mxu0 %v2015
        %v2269 = vpop.f32.mrf.mxu0
        %v2270 = vadd.f32 0.0, %v2269
        %2271 = vmatmul.f32.gmra.mxu0 %v2017
        %v2272 = vpop.f32.mrf.mxu0
        %v2273 = vadd.f32 0.0, %v2272
        %2274 = vmatmul.f32.gmra.mxu0 %v2019
        %v2275 = vpop.f32.mrf.mxu0
        %v2276 = vadd.f32 0.0, %v2275
        %2277 = vmatmul.f32.gmra.mxu0 %v2021
        %v2278 = vpop.f32.mrf.mxu0
        %v2279 = vadd.f32 0.0, %v2278
        %2280 = vmatmul.f32.gmra.mxu0 %v2023
        %v2281 = vpop.f32.mrf.mxu0
        %v2282 = vadd.f32 0.0, %v2281
        %2283 = vmatmul.f32.gmra.mxu0 %v2025
        %v2284 = vpop.f32.mrf.mxu0
        %v2285 = vadd.f32 0.0, %v2284
        %2286 = vmatmul.f32.gmra.mxu0 %v2027
        %v2287 = vpop.f32.mrf.mxu0
        %v2288 = vadd.f32 0.0, %v2287
        %2289 = vmatmul.f32.gmra.mxu0 %v2029
        %v2290 = vpop.f32.mrf.mxu0
        %v2291 = vadd.f32 0.0, %v2290
        %2292 = vmatmul.f32.gmra.mxu0 %v2031
        %v2293 = vpop.f32.mrf.mxu0
        %v2294 = vadd.f32 0.0, %v2293
        %2295 = vmatmul.f32.gmra.mxu0 %v2033
        %v2296 = vpop.f32.mrf.mxu0
        %v2297 = vadd.f32 0.0, %v2296
        %2298 = vmatmul.f32.gmra.mxu0 %v2035
        %v2299 = vpop.f32.mrf.mxu0
        %v2300 = vadd.f32 0.0, %v2299
        %2301 = vmatmul.f32.gmra.mxu0 %v2037
        %v2302 = vpop.f32.mrf.mxu0
        %v2303 = vadd.f32 0.0, %v2302
        %2304 = vmatmul.f32.gmra.mxu0 %v2039
        %v2305 = vpop.f32.mrf.mxu0
        %v2306 = vadd.f32 0.0, %v2305
        %2307 = vmatmul.f32.gmra.mxu0 %v2041
        %v2308 = vpop.f32.mrf.mxu0
        %v2309 = vadd.f32 0.0, %v2308
        %2310 = vmatmul.f32.gmra.mxu0 %v2043
        %v2311 = vpop.f32.mrf.mxu0
        %v2312 = vadd.f32 0.0, %v2311
        %2313 = vmatmul.f32.gmra.mxu0 %v2045
        %v2314 = vpop.f32.mrf.mxu0
        %v2315 = vadd.f32 0.0, %v2314
        %2316 = vdwg.mxu0
        %2317 = vmatpush.msra.mxu0 0.0
        %2318 = vmatpush.msra.mxu0 0.0
        %2319 = vmatpush.msra.mxu0 %v2105
        %2320 = vmatpush.msra.mxu0 %v2103
        %2321 = vmatpush.msra.mxu0 %v2101
        %2322 = vmatpush.msra.mxu0 %v2099
        %2323 = vmatpush.msra.mxu0 %v2097
        %2324 = vmatpush.msra.mxu0 %v2095
        %2325 = vmatpush.msra.mxu0 %v2093
        %2326 = vmatpush.msra.mxu0 %v2091
        %2327 = vmatpush.msra.mxu0 %v2089
        %2328 = vmatpush.msra.mxu0 %v2087
        %2329 = vmatpush.msra.mxu0 %v2085
        %2330 = vmatpush.msra.mxu0 %v2083
        %2331 = vmatpush.msra.mxu0 %v2081
        %2332 = vmatpush.msra.mxu0 %v2079
        %2333 = vmatmul.f32.gmra.mxu0 %v2109
        %v2334 = vpop.f32.mrf.mxu0
        %v2335 = vadd.f32 %v2222, %v2334
        %2336 = vmatmul.f32.gmra.mxu0 %v2112
        %v2337 = vpop.f32.mrf.mxu0
        %v2338 = vadd.f32 %v2225, %v2337
        %2339 = vmatmul.f32.gmra.mxu0 %v2115
        %v2340 = vpop.f32.mrf.mxu0
        %v2341 = vadd.f32 %v2228, %v2340
        %2342 = vmatmul.f32.gmra.mxu0 %v2118
        %v2343 = vpop.f32.mrf.mxu0
        %v2344 = vadd.f32 %v2231, %v2343
        %2345 = vmatmul.f32.gmra.mxu0 %v2121
        %v2346 = vpop.f32.mrf.mxu0
        %v2347 = vadd.f32 %v2234, %v2346
        %2348 = vmatmul.f32.gmra.mxu0 %v2124
        %v2349 = vpop.f32.mrf.mxu0
        %v2350 = vadd.f32 %v2237, %v2349
        %2351 = vmatmul.f32.gmra.mxu0 %v2127
        %v2352 = vpop.f32.mrf.mxu0
        %v2353 = vadd.f32 %v2240, %v2352
        %2354 = vmatmul.f32.gmra.mxu0 %v2130
        %v2355 = vpop.f32.mrf.mxu0
        %v2356 = vadd.f32 %v2243, %v2355
        %2357 = vmatmul.f32.gmra.mxu0 %v2133
        %v2358 = vpop.f32.mrf.mxu0
        %v2359 = vadd.f32 %v2246, %v2358
        %2360 = vmatmul.f32.gmra.mxu0 %v2136
        %v2361 = vpop.f32.mrf.mxu0
        %v2362 = vadd.f32 %v2249, %v2361
        %2363 = vmatmul.f32.gmra.mxu0 %v2139
        %v2364 = vpop.f32.mrf.mxu0
        %v2365 = vadd.f32 %v2252, %v2364
        %2366 = vmatmul.f32.gmra.mxu0 %v2142
        %v2367 = vpop.f32.mrf.mxu0
        %v2368 = vadd.f32 %v2255, %v2367
        %2369 = vmatmul.f32.gmra.mxu0 %v2145
        %v2370 = vpop.f32.mrf.mxu0
        %v2371 = vadd.f32 %v2258, %v2370
        %2372 = vmatmul.f32.gmra.mxu0 %v2148
        %v2373 = vpop.f32.mrf.mxu0
        %v2374 = vadd.f32 %v2261, %v2373
        %2375 = vmatmul.f32.gmra.mxu0 %v2151
        %v2376 = vpop.f32.mrf.mxu0
        %v2377 = vadd.f32 %v2264, %v2376
        %2378 = vmatmul.f32.gmra.mxu0 %v2154
        %v2379 = vpop.f32.mrf.mxu0
        %v2380 = vadd.f32 %v2267, %v2379
        %2381 = vmatmul.f32.gmra.mxu0 %v2157
        %v2382 = vpop.f32.mrf.mxu0
        %v2383 = vadd.f32 %v2270, %v2382
        %2384 = vmatmul.f32.gmra.mxu0 %v2160
        %v2385 = vpop.f32.mrf.mxu0
        %v2386 = vadd.f32 %v2273, %v2385
        %2387 = vmatmul.f32.gmra.mxu0 %v2163
        %v2388 = vpop.f32.mrf.mxu0
        %v2389 = vadd.f32 %v2276, %v2388
        %2390 = vmatmul.f32.gmra.mxu0 %v2166
        %v2391 = vpop.f32.mrf.mxu0
        %v2392 = vadd.f32 %v2279, %v2391
        %2393 = vmatmul.f32.gmra.mxu0 %v2169
        %v2394 = vpop.f32.mrf.mxu0
        %v2395 = vadd.f32 %v2282, %v2394
        %2396 = vmatmul.f32.gmra.mxu0 %v2172
        %v2397 = vpop.f32.mrf.mxu0
        %v2398 = vadd.f32 %v2285, %v2397
        %2399 = vmatmul.f32.gmra.mxu0 %v2175
        %v2400 = vpop.f32.mrf.mxu0
        %v2401 = vadd.f32 %v2288, %v2400
        %2402 = vmatmul.f32.gmra.mxu0 %v2178
        %v2403 = vpop.f32.mrf.mxu0
        %v2404 = vadd.f32 %v2291, %v2403
        %2405 = vmatmul.f32.gmra.mxu0 %v2181
        %v2406 = vpop.f32.mrf.mxu0
        %v2407 = vadd.f32 %v2294, %v2406
        %2408 = vmatmul.f32.gmra.mxu0 %v2184
        %v2409 = vpop.f32.mrf.mxu0
        %v2410 = vadd.f32 %v2297, %v2409
        %2411 = vmatmul.f32.gmra.mxu0 %v2187
        %v2412 = vpop.f32.mrf.mxu0
        %v2413 = vadd.f32 %v2300, %v2412
        %2414 = vmatmul.f32.gmra.mxu0 %v2190
        %v2415 = vpop.f32.mrf.mxu0
        %v2416 = vadd.f32 %v2303, %v2415
        %2417 = vmatmul.f32.gmra.mxu0 %v2193
        %v2418 = vpop.f32.mrf.mxu0
        %v2419 = vadd.f32 %v2306, %v2418
        %2420 = vmatmul.f32.gmra.mxu0 %v2196
        %v2421 = vpop.f32.mrf.mxu0
        %v2422 = vadd.f32 %v2309, %v2421
        %2423 = vmatmul.f32.gmra.mxu0 %v2199
        %v2424 = vpop.f32.mrf.mxu0
        %v2425 = vadd.f32 %v2312, %v2424
        %2426 = vmatmul.f32.gmra.mxu0 %v2202
        %v2427 = vpop.f32.mrf.mxu0
        %v2428 = vadd.f32 %v2315, %v2427
        %2429 = vdwg.mxu0
        %2430 = vmatpush.msra.mxu0 %v2078
        %2431 = vmatpush.msra.mxu0 %v2076
        %2432 = vmatpush.msra.mxu0 %v2074
        %2433 = vmatpush.msra.mxu0 %v2072
        %2434 = vmatpush.msra.mxu0 %v2070
        %2435 = vmatpush.msra.mxu0 %v2068
        %2436 = vmatpush.msra.mxu0 %v2066
        %2437 = vmatpush.msra.mxu0 %v2064
        %2438 = vmatpush.msra.mxu0 %v2062
        %2439 = vmatpush.msra.mxu0 %v2060
        %2440 = vmatpush.msra.mxu0 %v2058
        %2441 = vmatpush.msra.mxu0 %v2056
        %2442 = vmatpush.msra.mxu0 %v2054
        %2443 = vmatpush.msra.mxu0 %v2052
        %2444 = vmatpush.msra.mxu0 %v2050
        %2445 = vmatpush.msra.mxu0 %v2048
        %2446 = vmatmul.f32.gmra.mxu0 %v1983
        %v2447 = vpop.f32.mrf.mxu0
        %v2448 = vadd.f32 0.0, %v2447
        %2449 = vmatmul.f32.gmra.mxu0 %v1985
        %v2450 = vpop.f32.mrf.mxu0
        %v2451 = vadd.f32 0.0, %v2450
        %2452 = vmatmul.f32.gmra.mxu0 %v1987
        %v2453 = vpop.f32.mrf.mxu0
        %v2454 = vadd.f32 0.0, %v2453
        %2455 = vmatmul.f32.gmra.mxu0 %v1989
        %v2456 = vpop.f32.mrf.mxu0
        %v2457 = vadd.f32 0.0, %v2456
        %2458 = vmatmul.f32.gmra.mxu0 %v1991
        %v2459 = vpop.f32.mrf.mxu0
        %v2460 = vadd.f32 0.0, %v2459
        %2461 = vmatmul.f32.gmra.mxu0 %v1993
        %v2462 = vpop.f32.mrf.mxu0
        %v2463 = vadd.f32 0.0, %v2462
        %2464 = vmatmul.f32.gmra.mxu0 %v1995
        %v2465 = vpop.f32.mrf.mxu0
        %v2466 = vadd.f32 0.0, %v2465
        %2467 = vmatmul.f32.gmra.mxu0 %v1997
        %v2468 = vpop.f32.mrf.mxu0
        %v2469 = vadd.f32 0.0, %v2468
        %2470 = vmatmul.f32.gmra.mxu0 %v1999
        %v2471 = vpop.f32.mrf.mxu0
        %v2472 = vadd.f32 0.0, %v2471
        %2473 = vmatmul.f32.gmra.mxu0 %v2001
        %v2474 = vpop.f32.mrf.mxu0
        %v2475 = vadd.f32 0.0, %v2474
        %2476 = vmatmul.f32.gmra.mxu0 %v2003
        %v2477 = vpop.f32.mrf.mxu0
        %v2478 = vadd.f32 0.0, %v2477
        %2479 = vmatmul.f32.gmra.mxu0 %v2005
        %v2480 = vpop.f32.mrf.mxu0
        %v2481 = vadd.f32 0.0, %v2480
        %2482 = vmatmul.f32.gmra.mxu0 %v2007
        %v2483 = vpop.f32.mrf.mxu0
        %v2484 = vadd.f32 0.0, %v2483
        %2485 = vmatmul.f32.gmra.mxu0 %v2009
        %v2486 = vpop.f32.mrf.mxu0
        %v2487 = vadd.f32 0.0, %v2486
        %2488 = vmatmul.f32.gmra.mxu0 %v2011
        %v2489 = vpop.f32.mrf.mxu0
        %v2490 = vadd.f32 0.0, %v2489
        %2491 = vmatmul.f32.gmra.mxu0 %v2013
        %v2492 = vpop.f32.mrf.mxu0
        %v2493 = vadd.f32 0.0, %v2492
        %2494 = vmatmul.f32.gmra.mxu0 %v2015
        %v2495 = vpop.f32.mrf.mxu0
        %v2496 = vadd.f32 0.0, %v2495
        %2497 = vmatmul.f32.gmra.mxu0 %v2017
        %v2498 = vpop.f32.mrf.mxu0
        %v2499 = vadd.f32 0.0, %v2498
        %2500 = vmatmul.f32.gmra.mxu0 %v2019
        %v2501 = vpop.f32.mrf.mxu0
        %v2502 = vadd.f32 0.0, %v2501
        %2503 = vmatmul.f32.gmra.mxu0 %v2021
        %v2504 = vpop.f32.mrf.mxu0
        %v2505 = vadd.f32 0.0, %v2504
        %2506 = vmatmul.f32.gmra.mxu0 %v2023
        %v2507 = vpop.f32.mrf.mxu0
        %v2508 = vadd.f32 0.0, %v2507
        %2509 = vmatmul.f32.gmra.mxu0 %v2025
        %v2510 = vpop.f32.mrf.mxu0
        %v2511 = vadd.f32 0.0, %v2510
        %2512 = vmatmul.f32.gmra.mxu0 %v2027
        %v2513 = vpop.f32.mrf.mxu0
        %v2514 = vadd.f32 0.0, %v2513
        %2515 = vmatmul.f32.gmra.mxu0 %v2029
        %v2516 = vpop.f32.mrf.mxu0
        %v2517 = vadd.f32 0.0, %v2516
        %2518 = vmatmul.f32.gmra.mxu0 %v2031
        %v2519 = vpop.f32.mrf.mxu0
        %v2520 = vadd.f32 0.0, %v2519
        %2521 = vmatmul.f32.gmra.mxu0 %v2033
        %v2522 = vpop.f32.mrf.mxu0
        %v2523 = vadd.f32 0.0, %v2522
        %2524 = vmatmul.f32.gmra.mxu0 %v2035
        %v2525 = vpop.f32.mrf.mxu0
        %v2526 = vadd.f32 0.0, %v2525
        %2527 = vmatmul.f32.gmra.mxu0 %v2037
        %v2528 = vpop.f32.mrf.mxu0
        %v2529 = vadd.f32 0.0, %v2528
        %2530 = vmatmul.f32.gmra.mxu0 %v2039
        %v2531 = vpop.f32.mrf.mxu0
        %v2532 = vadd.f32 0.0, %v2531
        %2533 = vmatmul.f32.gmra.mxu0 %v2041
        %v2534 = vpop.f32.mrf.mxu0
        %v2535 = vadd.f32 0.0, %v2534
        %2536 = vmatmul.f32.gmra.mxu0 %v2043
        %v2537 = vpop.f32.mrf.mxu0
        %v2538 = vadd.f32 0.0, %v2537
        %2539 = vmatmul.f32.gmra.mxu0 %v2045
        %v2540 = vpop.f32.mrf.mxu0
        %v2541 = vadd.f32 0.0, %v2540
        %2542 = vdwg.mxu0
        %2543 = vmatpush.msra.mxu0 0.0
        %2544 = vmatpush.msra.mxu0 0.0
        %2545 = vmatpush.msra.mxu0 %v2106
        %2546 = vmatpush.msra.mxu0 %v2104
        %2547 = vmatpush.msra.mxu0 %v2102
        %2548 = vmatpush.msra.mxu0 %v2100
        %2549 = vmatpush.msra.mxu0 %v2098
        %2550 = vmatpush.msra.mxu0 %v2096
        %2551 = vmatpush.msra.mxu0 %v2094
        %2552 = vmatpush.msra.mxu0 %v2092
        %2553 = vmatpush.msra.mxu0 %v2090
        %2554 = vmatpush.msra.mxu0 %v2088
        %2555 = vmatpush.msra.mxu0 %v2086
        %2556 = vmatpush.msra.mxu0 %v2084
        %2557 = vmatpush.msra.mxu0 %v2082
        %2558 = vmatpush.msra.mxu0 %v2080
        %2559 = vmatmul.f32.gmra.mxu0 %v2109
        %v2560 = vpop.f32.mrf.mxu0
        %v2561 = vadd.f32 %v2448, %v2560
        %2562 = vmatmul.f32.gmra.mxu0 %v2112
        %v2563 = vpop.f32.mrf.mxu0
        %v2564 = vadd.f32 %v2451, %v2563
        %2565 = vmatmul.f32.gmra.mxu0 %v2115
        %v2566 = vpop.f32.mrf.mxu0
        %v2567 = vadd.f32 %v2454, %v2566
        %2568 = vmatmul.f32.gmra.mxu0 %v2118
        %v2569 = vpop.f32.mrf.mxu0
        %v2570 = vadd.f32 %v2457, %v2569
        %2571 = vmatmul.f32.gmra.mxu0 %v2121
        %v2572 = vpop.f32.mrf.mxu0
        %v2573 = vadd.f32 %v2460, %v2572
        %2574 = vmatmul.f32.gmra.mxu0 %v2124
        %v2575 = vpop.f32.mrf.mxu0
        %v2576 = vadd.f32 %v2463, %v2575
        %2577 = vmatmul.f32.gmra.mxu0 %v2127
        %v2578 = vpop.f32.mrf.mxu0
        %v2579 = vadd.f32 %v2466, %v2578
        %2580 = vmatmul.f32.gmra.mxu0 %v2130
        %v2581 = vpop.f32.mrf.mxu0
        %v2582 = vadd.f32 %v2469, %v2581
        %2583 = vmatmul.f32.gmra.mxu0 %v2133
        %v2584 = vpop.f32.mrf.mxu0
        %v2585 = vadd.f32 %v2472, %v2584
        %2586 = vmatmul.f32.gmra.mxu0 %v2136
        %v2587 = vpop.f32.mrf.mxu0
        %v2588 = vadd.f32 %v2475, %v2587
        %2589 = vmatmul.f32.gmra.mxu0 %v2139
        %v2590 = vpop.f32.mrf.mxu0
        %v2591 = vadd.f32 %v2478, %v2590
        %2592 = vmatmul.f32.gmra.mxu0 %v2142
        %v2593 = vpop.f32.mrf.mxu0
        %v2594 = vadd.f32 %v2481, %v2593
        %2595 = vmatmul.f32.gmra.mxu0 %v2145
        %v2596 = vpop.f32.mrf.mxu0
        %v2597 = vadd.f32 %v2484, %v2596
        %2598 = vmatmul.f32.gmra.mxu0 %v2148
        %v2599 = vpop.f32.mrf.mxu0
        %v2600 = vadd.f32 %v2487, %v2599
        %2601 = vmatmul.f32.gmra.mxu0 %v2151
        %v2602 = vpop.f32.mrf.mxu0
        %v2603 = vadd.f32 %v2490, %v2602
        %2604 = vmatmul.f32.gmra.mxu0 %v2154
        %v2605 = vpop.f32.mrf.mxu0
        %v2606 = vadd.f32 %v2493, %v2605
        %2607 = vmatmul.f32.gmra.mxu0 %v2157
        %v2608 = vpop.f32.mrf.mxu0
        %v2609 = vadd.f32 %v2496, %v2608
        %2610 = vmatmul.f32.gmra.mxu0 %v2160
        %v2611 = vpop.f32.mrf.mxu0
        %v2612 = vadd.f32 %v2499, %v2611
        %2613 = vmatmul.f32.gmra.mxu0 %v2163
        %v2614 = vpop.f32.mrf.mxu0
        %v2615 = vadd.f32 %v2502, %v2614
        %2616 = vmatmul.f32.gmra.mxu0 %v2166
        %v2617 = vpop.f32.mrf.mxu0
        %v2618 = vadd.f32 %v2505, %v2617
        %2619 = vmatmul.f32.gmra.mxu0 %v2169
        %v2620 = vpop.f32.mrf.mxu0
        %v2621 = vadd.f32 %v2508, %v2620
        %2622 = vmatmul.f32.gmra.mxu0 %v2172
        %v2623 = vpop.f32.mrf.mxu0
        %v2624 = vadd.f32 %v2511, %v2623
        %2625 = vmatmul.f32.gmra.mxu0 %v2175
        %v2626 = vpop.f32.mrf.mxu0
        %v2627 = vadd.f32 %v2514, %v2626
        %2628 = vmatmul.f32.gmra.mxu0 %v2178
        %v2629 = vpop.f32.mrf.mxu0
        %v2630 = vadd.f32 %v2517, %v2629
        %2631 = vmatmul.f32.gmra.mxu0 %v2181
        %v2632 = vpop.f32.mrf.mxu0
        %v2633 = vadd.f32 %v2520, %v2632
        %2634 = vmatmul.f32.gmra.mxu0 %v2184
        %v2635 = vpop.f32.mrf.mxu0
        %v2636 = vadd.f32 %v2523, %v2635
        %2637 = vmatmul.f32.gmra.mxu0 %v2187
        %v2638 = vpop.f32.mrf.mxu0
        %v2639 = vadd.f32 %v2526, %v2638
        %2640 = vmatmul.f32.gmra.mxu0 %v2190
        %v2641 = vpop.f32.mrf.mxu0
        %v2642 = vadd.f32 %v2529, %v2641
        %2643 = vmatmul.f32.gmra.mxu0 %v2193
        %v2644 = vpop.f32.mrf.mxu0
        %v2645 = vadd.f32 %v2532, %v2644
        %2646 = vmatmul.f32.gmra.mxu0 %v2196
        %v2647 = vpop.f32.mrf.mxu0
        %v2648 = vadd.f32 %v2535, %v2647
        %2649 = vmatmul.f32.gmra.mxu0 %v2199
        %v2650 = vpop.f32.mrf.mxu0
        %v2651 = vadd.f32 %v2538, %v2650
        %2652 = vmatmul.f32.gmra.mxu0 %v2202
        %v2653 = vpop.f32.mrf.mxu0
        %v2654 = vadd.f32 %v2541, %v2653
        %2655 = vdwg.mxu0
        %v2656 = vmul.f32 %v1030, %v2335
        %v2657 = vmul.f32 %v1143, %v2561
        %v2658 = vmul.f32 %v1033, %v2338
        %v2659 = vmul.f32 %v1146, %v2564
        %v2660 = vmul.f32 %v1036, %v2341
        %v2661 = vmul.f32 %v1149, %v2567
        %v2662 = vmul.f32 %v1039, %v2344
        %v2663 = vmul.f32 %v1152, %v2570
        %v2664 = vmul.f32 %v1042, %v2347
        %v2665 = vmul.f32 %v1155, %v2573
        %v2666 = vmul.f32 %v1045, %v2350
        %v2667 = vmul.f32 %v1158, %v2576
        %v2668 = vmul.f32 %v1048, %v2353
        %v2669 = vmul.f32 %v1161, %v2579
        %v2670 = vmul.f32 %v1051, %v2356
        %v2671 = vmul.f32 %v1164, %v2582
        %v2672 = vmul.f32 %v1054, %v2359
        %v2673 = vmul.f32 %v1167, %v2585
        %v2674 = vmul.f32 %v1057, %v2362
        %v2675 = vmul.f32 %v1170, %v2588
        %v2676 = vmul.f32 %v1060, %v2365
        %v2677 = vmul.f32 %v1173, %v2591
        %v2678 = vmul.f32 %v1063, %v2368
        %v2679 = vmul.f32 %v1176, %v2594
        %v2680 = vmul.f32 %v1066, %v2371
        %v2681 = vmul.f32 %v1179, %v2597
        %v2682 = vmul.f32 %v1069, %v2374
        %v2683 = vmul.f32 %v1182, %v2600
        %v2684 = vmul.f32 %v1072, %v2377
        %v2685 = vmul.f32 %v1185, %v2603
        %v2686 = vmul.f32 %v1075, %v2380
        %v2687 = vmul.f32 %v1188, %v2606
        %v2688 = vmul.f32 %v1078, %v2383
        %v2689 = vmul.f32 %v1191, %v2609
        %v2690 = vmul.f32 %v1081, %v2386
        %v2691 = vmul.f32 %v1194, %v2612
        %v2692 = vmul.f32 %v1084, %v2389
        %v2693 = vmul.f32 %v1197, %v2615
        %v2694 = vmul.f32 %v1087, %v2392
        %v2695 = vmul.f32 %v1200, %v2618
        %v2696 = vmul.f32 %v1090, %v2395
        %v2697 = vmul.f32 %v1203, %v2621
        %v2698 = vmul.f32 %v1093, %v2398
        %v2699 = vmul.f32 %v1206, %v2624
        %v2700 = vmul.f32 %v1096, %v2401
        %v2701 = vmul.f32 %v1209, %v2627
        %v2702 = vmul.f32 %v1099, %v2404
        %v2703 = vmul.f32 %v1212, %v2630
        %v2704 = vmul.f32 %v1102, %v2407
        %v2705 = vmul.f32 %v1215, %v2633
        %v2706 = vmul.f32 %v1105, %v2410
        %v2707 = vmul.f32 %v1218, %v2636
        %v2708 = vmul.f32 %v1108, %v2413
        %v2709 = vmul.f32 %v1221, %v2639
        %v2710 = vmul.f32 %v1111, %v2416
        %v2711 = vmul.f32 %v1224, %v2642
        %v2712 = vmul.f32 %v1114, %v2419
        %v2713 = vmul.f32 %v1227, %v2645
        %v2714 = vmul.f32 %v1117, %v2422
        %v2715 = vmul.f32 %v1230, %v2648
        %v2716 = vmul.f32 %v1120, %v2425
        %v2717 = vmul.f32 %v1233, %v2651
        %v2718 = vmul.f32 %v1123, %v2428
        %v2719 = vmul.f32 %v1236, %v2654
        %v2720 = vld [vmem:[%s11] sm:$0xff]
        %v2721 = vld [vmem:[%s11 + $0x8] sm:$0xff]
        %v2722 = vld [vmem:[%s11 + $0x10] sm:$0xff]
        %v2723 = vld [vmem:[%s11 + $0x18] sm:$0xff]
        %v2724 = vld [vmem:[%s11 + $0x20] sm:$0xff]
        %v2725 = vld [vmem:[%s11 + $0x28] sm:$0xff]
        %v2726 = vld [vmem:[%s11 + $0x30] sm:$0xff]
        %v2727 = vld [vmem:[%s11 + $0x38] sm:$0xff]
        %v2728 = vld [vmem:[%s11 + $0x40] sm:$0xff]
        %v2729 = vld [vmem:[%s11 + $0x48] sm:$0xff]
        %v2730 = vld [vmem:[%s11 + $0x50] sm:$0xff]
        %v2731 = vld [vmem:[%s11 + $0x58] sm:$0xff]
        %v2732 = vld [vmem:[%s11 + $0x60] sm:$0xff]
        %v2733 = vld [vmem:[%s11 + $0x68] sm:$0xff]
        %v2734 = vld [vmem:[%s11 + $0x70] sm:$0xff]
        %v2735 = vld [vmem:[%s11 + $0x78] sm:$0xff]
        %v2736 = vld [vmem:[%s11 + $0x80] sm:$0xff]
        %v2737 = vld [vmem:[%s11 + $0x88] sm:$0xff]
        %v2738 = vld [vmem:[%s11 + $0x90] sm:$0xff]
        %v2739 = vld [vmem:[%s11 + $0x98] sm:$0xff]
        %v2740 = vld [vmem:[%s11 + $0xa0] sm:$0xff]
        %v2741 = vld [vmem:[%s11 + $0xa8] sm:$0xff]
        %v2742 = vld [vmem:[%s11 + $0xb0] sm:$0xff]
        %v2743 = vld [vmem:[%s11 + $0xb8] sm:$0xff]
        %vm2744 = vcmask 523264
        %v2746 = vsel %vm2744, %v2657, 0
        %v2749 = vsel %vm2744, %v2659, 0
        %v2752 = vsel %vm2744, %v2661, 0
        %v2755 = vsel %vm2744, %v2663, 0
        %v2758 = vsel %vm2744, %v2665, 0
        %v2761 = vsel %vm2744, %v2667, 0
        %v2764 = vsel %vm2744, %v2669, 0
        %v2767 = vsel %vm2744, %v2671, 0
        %v2770 = vsel %vm2744, %v2673, 0
        %v2773 = vsel %vm2744, %v2675, 0
        %v2776 = vsel %vm2744, %v2677, 0
        %v2779 = vsel %vm2744, %v2679, 0
        %v2782 = vsel %vm2744, %v2681, 0
        %v2785 = vsel %vm2744, %v2683, 0
        %v2788 = vsel %vm2744, %v2685, 0
        %v2791 = vsel %vm2744, %v2687, 0
        %v2794 = vsel %vm2744, %v2689, 0
        %v2797 = vsel %vm2744, %v2691, 0
        %v2800 = vsel %vm2744, %v2693, 0
        %v2803 = vsel %vm2744, %v2695, 0
        %v2806 = vsel %vm2744, %v2697, 0
        %v2809 = vsel %vm2744, %v2699, 0
        %v2812 = vsel %vm2744, %v2701, 0
        %v2815 = vsel %vm2744, %v2703, 0
        %v2818 = vsel %vm2744, %v2705, 0
        %v2821 = vsel %vm2744, %v2707, 0
        %v2824 = vsel %vm2744, %v2709, 0
        %v2827 = vsel %vm2744, %v2711, 0
        %v2830 = vsel %vm2744, %v2713, 0
        %v2833 = vsel %vm2744, %v2715, 0
        %v2836 = vsel %vm2744, %v2717, 0
        %v2839 = vsel %vm2744, %v2719, 0
        %2841 = vmatpush.msra.mxu0 %v2735
        %2842 = vmatpush.msra.mxu0 %v2734
        %2843 = vmatpush.msra.mxu0 %v2733
        %2844 = vmatpush.msra.mxu0 %v2732
        %2845 = vmatpush.msra.mxu0 %v2731
        %2846 = vmatpush.msra.mxu0 %v2730
        %2847 = vmatpush.msra.mxu0 %v2729
        %2848 = vmatpush.msra.mxu0 %v2728
        %2849 = vmatpush.msra.mxu0 %v2727
        %2850 = vmatpush.msra.mxu0 %v2726
        %2851 = vmatpush.msra.mxu0 %v2725
        %2852 = vmatpush.msra.mxu0 %v2724
        %2853 = vmatpush.msra.mxu0 %v2723
        %2854 = vmatpush.msra.mxu0 %v2722
        %2855 = vmatpush.msra.mxu0 %v2721
        %2856 = vmatpush.msra.mxu0 %v2720
        %2857 = vmatmul.f32.gmra.mxu0 %v2656
        %v2858 = vpop.f32.mrf.mxu0
        %v2859 = vadd.f32 0.0, %v2858
        %2860 = vmatmul.f32.gmra.mxu0 %v2658
        %v2861 = vpop.f32.mrf.mxu0
        %v2862 = vadd.f32 0.0, %v2861
        %2863 = vmatmul.f32.gmra.mxu0 %v2660
        %v2864 = vpop.f32.mrf.mxu0
        %v2865 = vadd.f32 0.0, %v2864
        %2866 = vmatmul.f32.gmra.mxu0 %v2662
        %v2867 = vpop.f32.mrf.mxu0
        %v2868 = vadd.f32 0.0, %v2867
        %2869 = vmatmul.f32.gmra.mxu0 %v2664
        %v2870 = vpop.f32.mrf.mxu0
        %v2871 = vadd.f32 0.0, %v2870
        %2872 = vmatmul.f32.gmra.mxu0 %v2666
        %v2873 = vpop.f32.mrf.mxu0
        %v2874 = vadd.f32 0.0, %v2873
        %2875 = vmatmul.f32.gmra.mxu0 %v2668
        %v2876 = vpop.f32.mrf.mxu0
        %v2877 = vadd.f32 0.0, %v2876
        %2878 = vmatmul.f32.gmra.mxu0 %v2670
        %v2879 = vpop.f32.mrf.mxu0
        %v2880 = vadd.f32 0.0, %v2879
        %2881 = vmatmul.f32.gmra.mxu0 %v2672
        %v2882 = vpop.f32.mrf.mxu0
        %v2883 = vadd.f32 0.0, %v2882
        %2884 = vmatmul.f32.gmra.mxu0 %v2674
        %v2885 = vpop.f32.mrf.mxu0
        %v2886 = vadd.f32 0.0, %v2885
        %2887 = vmatmul.f32.gmra.mxu0 %v2676
        %v2888 = vpop.f32.mrf.mxu0
        %v2889 = vadd.f32 0.0, %v2888
        %2890 = vmatmul.f32.gmra.mxu0 %v2678
        %v2891 = vpop.f32.mrf.mxu0
        %v2892 = vadd.f32 0.0, %v2891
        %2893 = vmatmul.f32.gmra.mxu0 %v2680
        %v2894 = vpop.f32.mrf.mxu0
        %v2895 = vadd.f32 0.0, %v2894
        %2896 = vmatmul.f32.gmra.mxu0 %v2682
        %v2897 = vpop.f32.mrf.mxu0
        %v2898 = vadd.f32 0.0, %v2897
        %2899 = vmatmul.f32.gmra.mxu0 %v2684
        %v2900 = vpop.f32.mrf.mxu0
        %v2901 = vadd.f32 0.0, %v2900
        %2902 = vmatmul.f32.gmra.mxu0 %v2686
        %v2903 = vpop.f32.mrf.mxu0
        %v2904 = vadd.f32 0.0, %v2903
        %2905 = vmatmul.f32.gmra.mxu0 %v2688
        %v2906 = vpop.f32.mrf.mxu0
        %v2907 = vadd.f32 0.0, %v2906
        %2908 = vmatmul.f32.gmra.mxu0 %v2690
        %v2909 = vpop.f32.mrf.mxu0
        %v2910 = vadd.f32 0.0, %v2909
        %2911 = vmatmul.f32.gmra.mxu0 %v2692
        %v2912 = vpop.f32.mrf.mxu0
        %v2913 = vadd.f32 0.0, %v2912
        %2914 = vmatmul.f32.gmra.mxu0 %v2694
        %v2915 = vpop.f32.mrf.mxu0
        %v2916 = vadd.f32 0.0, %v2915
        %2917 = vmatmul.f32.gmra.mxu0 %v2696
        %v2918 = vpop.f32.mrf.mxu0
        %v2919 = vadd.f32 0.0, %v2918
        %2920 = vmatmul.f32.gmra.mxu0 %v2698
        %v2921 = vpop.f32.mrf.mxu0
        %v2922 = vadd.f32 0.0, %v2921
        %2923 = vmatmul.f32.gmra.mxu0 %v2700
        %v2924 = vpop.f32.mrf.mxu0
        %v2925 = vadd.f32 0.0, %v2924
        %2926 = vmatmul.f32.gmra.mxu0 %v2702
        %v2927 = vpop.f32.mrf.mxu0
        %v2928 = vadd.f32 0.0, %v2927
        %2929 = vmatmul.f32.gmra.mxu0 %v2704
        %v2930 = vpop.f32.mrf.mxu0
        %v2931 = vadd.f32 0.0, %v2930
        %2932 = vmatmul.f32.gmra.mxu0 %v2706
        %v2933 = vpop.f32.mrf.mxu0
        %v2934 = vadd.f32 0.0, %v2933
        %2935 = vmatmul.f32.gmra.mxu0 %v2708
        %v2936 = vpop.f32.mrf.mxu0
        %v2937 = vadd.f32 0.0, %v2936
        %2938 = vmatmul.f32.gmra.mxu0 %v2710
        %v2939 = vpop.f32.mrf.mxu0
        %v2940 = vadd.f32 0.0, %v2939
        %2941 = vmatmul.f32.gmra.mxu0 %v2712
        %v2942 = vpop.f32.mrf.mxu0
        %v2943 = vadd.f32 0.0, %v2942
        %2944 = vmatmul.f32.gmra.mxu0 %v2714
        %v2945 = vpop.f32.mrf.mxu0
        %v2946 = vadd.f32 0.0, %v2945
        %2947 = vmatmul.f32.gmra.mxu0 %v2716
        %v2948 = vpop.f32.mrf.mxu0
        %v2949 = vadd.f32 0.0, %v2948
        %2950 = vmatmul.f32.gmra.mxu0 %v2718
        %v2951 = vpop.f32.mrf.mxu0
        %v2952 = vadd.f32 0.0, %v2951
        %2953 = vdwg.mxu0
        %2954 = vmatpush.msra.mxu0 0.0
        %2955 = vmatpush.msra.mxu0 0.0
        %2956 = vmatpush.msra.mxu0 0.0
        %2957 = vmatpush.msra.mxu0 0.0
        %2958 = vmatpush.msra.mxu0 0.0
        %2959 = vmatpush.msra.mxu0 0.0
        %2960 = vmatpush.msra.mxu0 0.0
        %2961 = vmatpush.msra.mxu0 0.0
        %2962 = vmatpush.msra.mxu0 %v2743
        %2963 = vmatpush.msra.mxu0 %v2742
        %2964 = vmatpush.msra.mxu0 %v2741
        %2965 = vmatpush.msra.mxu0 %v2740
        %2966 = vmatpush.msra.mxu0 %v2739
        %2967 = vmatpush.msra.mxu0 %v2738
        %2968 = vmatpush.msra.mxu0 %v2737
        %2969 = vmatpush.msra.mxu0 %v2736
        %2970 = vmatmul.f32.gmra.mxu0 %v2746
        %v2971 = vpop.f32.mrf.mxu0
        %v2972 = vadd.f32 %v2859, %v2971
        %2973 = vmatmul.f32.gmra.mxu0 %v2749
        %v2974 = vpop.f32.mrf.mxu0
        %v2975 = vadd.f32 %v2862, %v2974
        %2976 = vmatmul.f32.gmra.mxu0 %v2752
        %v2977 = vpop.f32.mrf.mxu0
        %v2978 = vadd.f32 %v2865, %v2977
        %2979 = vmatmul.f32.gmra.mxu0 %v2755
        %v2980 = vpop.f32.mrf.mxu0
        %v2981 = vadd.f32 %v2868, %v2980
        %2982 = vmatmul.f32.gmra.mxu0 %v2758
        %v2983 = vpop.f32.mrf.mxu0
        %v2984 = vadd.f32 %v2871, %v2983
        %2985 = vmatmul.f32.gmra.mxu0 %v2761
        %v2986 = vpop.f32.mrf.mxu0
        %v2987 = vadd.f32 %v2874, %v2986
        %2988 = vmatmul.f32.gmra.mxu0 %v2764
        %v2989 = vpop.f32.mrf.mxu0
        %v2990 = vadd.f32 %v2877, %v2989
        %2991 = vmatmul.f32.gmra.mxu0 %v2767
        %v2992 = vpop.f32.mrf.mxu0
        %v2993 = vadd.f32 %v2880, %v2992
        %2994 = vmatmul.f32.gmra.mxu0 %v2770
        %v2995 = vpop.f32.mrf.mxu0
        %v2996 = vadd.f32 %v2883, %v2995
        %2997 = vmatmul.f32.gmra.mxu0 %v2773
        %v2998 = vpop.f32.mrf.mxu0
        %v2999 = vadd.f32 %v2886, %v2998
        %3000 = vmatmul.f32.gmra.mxu0 %v2776
        %v3001 = vpop.f32.mrf.mxu0
        %v3002 = vadd.f32 %v2889, %v3001
        %3003 = vmatmul.f32.gmra.mxu0 %v2779
        %v3004 = vpop.f32.mrf.mxu0
        %v3005 = vadd.f32 %v2892, %v3004
        %3006 = vmatmul.f32.gmra.mxu0 %v2782
        %v3007 = vpop.f32.mrf.mxu0
        %v3008 = vadd.f32 %v2895, %v3007
        %3009 = vmatmul.f32.gmra.mxu0 %v2785
        %v3010 = vpop.f32.mrf.mxu0
        %v3011 = vadd.f32 %v2898, %v3010
        %3012 = vmatmul.f32.gmra.mxu0 %v2788
        %v3013 = vpop.f32.mrf.mxu0
        %v3014 = vadd.f32 %v2901, %v3013
        %3015 = vmatmul.f32.gmra.mxu0 %v2791
        %v3016 = vpop.f32.mrf.mxu0
        %v3017 = vadd.f32 %v2904, %v3016
        %3018 = vmatmul.f32.gmra.mxu0 %v2794
        %v3019 = vpop.f32.mrf.mxu0
        %v3020 = vadd.f32 %v2907, %v3019
        %3021 = vmatmul.f32.gmra.mxu0 %v2797
        %v3022 = vpop.f32.mrf.mxu0
        %v3023 = vadd.f32 %v2910, %v3022
        %3024 = vmatmul.f32.gmra.mxu0 %v2800
        %v3025 = vpop.f32.mrf.mxu0
        %v3026 = vadd.f32 %v2913, %v3025
        %3027 = vmatmul.f32.gmra.mxu0 %v2803
        %v3028 = vpop.f32.mrf.mxu0
        %v3029 = vadd.f32 %v2916, %v3028
        %3030 = vmatmul.f32.gmra.mxu0 %v2806
        %v3031 = vpop.f32.mrf.mxu0
        %v3032 = vadd.f32 %v2919, %v3031
        %3033 = vmatmul.f32.gmra.mxu0 %v2809
        %v3034 = vpop.f32.mrf.mxu0
        %v3035 = vadd.f32 %v2922, %v3034
        %3036 = vmatmul.f32.gmra.mxu0 %v2812
        %v3037 = vpop.f32.mrf.mxu0
        %v3038 = vadd.f32 %v2925, %v3037
        %3039 = vmatmul.f32.gmra.mxu0 %v2815
        %v3040 = vpop.f32.mrf.mxu0
        %v3041 = vadd.f32 %v2928, %v3040
        %3042 = vmatmul.f32.gmra.mxu0 %v2818
        %v3043 = vpop.f32.mrf.mxu0
        %v3044 = vadd.f32 %v2931, %v3043
        %3045 = vmatmul.f32.gmra.mxu0 %v2821
        %v3046 = vpop.f32.mrf.mxu0
        %v3047 = vadd.f32 %v2934, %v3046
        %3048 = vmatmul.f32.gmra.mxu0 %v2824
        %v3049 = vpop.f32.mrf.mxu0
        %v3050 = vadd.f32 %v2937, %v3049
        %3051 = vmatmul.f32.gmra.mxu0 %v2827
        %v3052 = vpop.f32.mrf.mxu0
        %v3053 = vadd.f32 %v2940, %v3052
        %3054 = vmatmul.f32.gmra.mxu0 %v2830
        %v3055 = vpop.f32.mrf.mxu0
        %v3056 = vadd.f32 %v2943, %v3055
        %3057 = vmatmul.f32.gmra.mxu0 %v2833
        %v3058 = vpop.f32.mrf.mxu0
        %v3059 = vadd.f32 %v2946, %v3058
        %3060 = vmatmul.f32.gmra.mxu0 %v2836
        %v3061 = vpop.f32.mrf.mxu0
        %v3062 = vadd.f32 %v2949, %v3061
        %3063 = vmatmul.f32.gmra.mxu0 %v2839
        %v3064 = vpop.f32.mrf.mxu0
        %v3065 = vadd.f32 %v2952, %v3064
        %3066 = vdwg.mxu0
        %vm3067 = vcmask 97280
        %3068 = vst.msk [vmem:[%s471] sm:$0xff] %vm3067, %v2972
        %3069 = vst.msk [vmem:[%s471 + $0x8] sm:$0xff] %vm3067, %v2975
        %3070 = vst.msk [vmem:[%s471 + $0x10] sm:$0xff] %vm3067, %v2978
        %3071 = vst.msk [vmem:[%s471 + $0x18] sm:$0xff] %vm3067, %v2981
        %3072 = vst.msk [vmem:[%s471 + $0x20] sm:$0xff] %vm3067, %v2984
        %3073 = vst.msk [vmem:[%s471 + $0x28] sm:$0xff] %vm3067, %v2987
        %3074 = vst.msk [vmem:[%s471 + $0x30] sm:$0xff] %vm3067, %v2990
        %3075 = vst.msk [vmem:[%s471 + $0x38] sm:$0xff] %vm3067, %v2993
        %3076 = vst.msk [vmem:[%s471 + $0x40] sm:$0xff] %vm3067, %v2996
        %3077 = vst.msk [vmem:[%s471 + $0x48] sm:$0xff] %vm3067, %v2999
        %3078 = vst.msk [vmem:[%s471 + $0x50] sm:$0xff] %vm3067, %v3002
        %3079 = vst.msk [vmem:[%s471 + $0x58] sm:$0xff] %vm3067, %v3005
        %3080 = vst.msk [vmem:[%s471 + $0x60] sm:$0xff] %vm3067, %v3008
        %3081 = vst.msk [vmem:[%s471 + $0x68] sm:$0xff] %vm3067, %v3011
        %3082 = vst.msk [vmem:[%s471 + $0x70] sm:$0xff] %vm3067, %v3014
        %3083 = vst.msk [vmem:[%s471 + $0x78] sm:$0xff] %vm3067, %v3017
        %3084 = vst.msk [vmem:[%s471 + $0x80] sm:$0xff] %vm3067, %v3020
        %3085 = vst.msk [vmem:[%s471 + $0x88] sm:$0xff] %vm3067, %v3023
        %3086 = vst.msk [vmem:[%s471 + $0x90] sm:$0xff] %vm3067, %v3026
        %3087 = vst.msk [vmem:[%s471 + $0x98] sm:$0xff] %vm3067, %v3029
        %3088 = vst.msk [vmem:[%s471 + $0xa0] sm:$0xff] %vm3067, %v3032
        %3089 = vst.msk [vmem:[%s471 + $0xa8] sm:$0xff] %vm3067, %v3035
        %3090 = vst.msk [vmem:[%s471 + $0xb0] sm:$0xff] %vm3067, %v3038
        %3091 = vst.msk [vmem:[%s471 + $0xb8] sm:$0xff] %vm3067, %v3041
        %3092 = vst.msk [vmem:[%s471 + $0xc0] sm:$0xff] %vm3067, %v3044
        %3093 = vst.msk [vmem:[%s471 + $0xc8] sm:$0xff] %vm3067, %v3047
        %3094 = vst.msk [vmem:[%s471 + $0xd0] sm:$0xff] %vm3067, %v3050
        %3095 = vst.msk [vmem:[%s471 + $0xd8] sm:$0xff] %vm3067, %v3053
        %3096 = vst.msk [vmem:[%s471 + $0xe0] sm:$0xff] %vm3067, %v3056
        %3097 = vst.msk [vmem:[%s471 + $0xe8] sm:$0xff] %vm3067, %v3059
        %3098 = vst.msk [vmem:[%s471 + $0xf0] sm:$0xff] %vm3067, %v3062
        %3099 = vst.msk [vmem:[%s471 + $0xf8] sm:$0xff] %vm3067, %v3065
        %s3100 = sand.u32 %s298, 1
        %s3101 = sand.u32 %s298, 1
        %s3102 = smul.addr %s3101, 256
        %s3103 = scalar_lea.vmem [#allocation2], %s3102
        // Predicated region
        $region69: #{_lambda_.1} parent=67 // pred_check
          %p3104 = pneg %p308
        $region70: #{_lambda_.1} parent=67 // pred_check_branch
          %3106 = sbr.rel (%p3104) target = $region72
        $region71: #{_lambda_.1} parent=67 // pred_region
          %s3107 = smul.u32 32, %s23
          %s3108 = ssub.s32 125, %s3107
          %p3109 = scmp.lt.s32.totalorder %s3108, 32
          %s3110 = scalar_select %p3109, %s3108, 32
          %s3111 = smul.u32 8, %s3110
          %p3112 = scmp.ne.s32.totalorder 0, %s3111
          %s3113 = smul.addr %s3107, 8
          %s3114 = scalar_lea.vmem %s12, %s3113
          // Predicated region
          $region73: #{_lambda_.1} parent=71 // pred_check
            %p3115 = pneg %p3112
          $region74: #{_lambda_.1} parent=71 // pred_check_branch
            %3117 = sbr.rel (%p3115) target = $region76
          $region75: #{_lambda_.1} parent=71 // pred_region
            // Predicated region
            $region77: #{_lambda_.1} parent=75 // pred_check
              _
            $region78: #{_lambda_.1} parent=75 // pred_check_branch
              %3119 = sbr.rel (0) target = $region80
            $region79: #{_lambda_.1} parent=75 // pred_region
              // Predicated region
              $region99: #{_lambda_.1} parent=79 // pred_check
                _
              $region100: #{_lambda_.1} parent=79 // pred_check_branch
                %3231 = sbr.rel (0) target = $region102
              $region101: #{_lambda_.1} parent=79 // pred_region
                %s3232 = sshrl.u32 %s3110, 5
                // While loop
                $region103: #{_lambda_.1} parent=101 // loop_pre_header
                  _
                $region104: #{_lambda_.1} parent=101 // loop_header
                  %s3234 = sphi 0, %s3236
                  %p3235 = scmp.ge.s32.totalorder %s3234, %s3232
                  %s3239 = sphi 0, %s3308
                  %s3240 = sphi %s3103, %s3311
                  %s3241 = sphi %s3114, %s3312
                $region105: #{_lambda_.1} parent=101 // loop_header_branch
                  %3238 = sbr.rel (%p3235) target = $region109
                $region106: #{_lambda_.1} parent=101 // loop_body
                  %v3242 = vld [vmem:[%s3240] sm:$0xff]
                  %3243 = vst [vmem:[%s3241] sm:$0xff] %v3242
                  %v3244 = vld [vmem:[%s3240 + $0x8] sm:$0xff]
                  %3245 = vst [vmem:[%s3241 + $0x8] sm:$0xff] %v3244
                  %v3246 = vld [vmem:[%s3240 + $0x10] sm:$0xff]
                  %3247 = vst [vmem:[%s3241 + $0x10] sm:$0xff] %v3246
                  %v3248 = vld [vmem:[%s3240 + $0x18] sm:$0xff]
                  %3249 = vst [vmem:[%s3241 + $0x18] sm:$0xff] %v3248
                  %v3250 = vld [vmem:[%s3240 + $0x20] sm:$0xff]
                  %3251 = vst [vmem:[%s3241 + $0x20] sm:$0xff] %v3250
                  %v3252 = vld [vmem:[%s3240 + $0x28] sm:$0xff]
                  %3253 = vst [vmem:[%s3241 + $0x28] sm:$0xff] %v3252
                  %v3254 = vld [vmem:[%s3240 + $0x30] sm:$0xff]
                  %3255 = vst [vmem:[%s3241 + $0x30] sm:$0xff] %v3254
                  %v3256 = vld [vmem:[%s3240 + $0x38] sm:$0xff]
                  %3257 = vst [vmem:[%s3241 + $0x38] sm:$0xff] %v3256
                  %v3258 = vld [vmem:[%s3240 + $0x40] sm:$0xff]
                  %3259 = vst [vmem:[%s3241 + $0x40] sm:$0xff] %v3258
                  %v3260 = vld [vmem:[%s3240 + $0x48] sm:$0xff]
                  %3261 = vst [vmem:[%s3241 + $0x48] sm:$0xff] %v3260
                  %v3262 = vld [vmem:[%s3240 + $0x50] sm:$0xff]
                  %3263 = vst [vmem:[%s3241 + $0x50] sm:$0xff] %v3262
                  %v3264 = vld [vmem:[%s3240 + $0x58] sm:$0xff]
                  %3265 = vst [vmem:[%s3241 + $0x58] sm:$0xff] %v3264
                  %v3266 = vld [vmem:[%s3240 + $0x60] sm:$0xff]
                  %3267 = vst [vmem:[%s3241 + $0x60] sm:$0xff] %v3266
                  %v3268 = vld [vmem:[%s3240 + $0x68] sm:$0xff]
                  %3269 = vst [vmem:[%s3241 + $0x68] sm:$0xff] %v3268
                  %v3270 = vld [vmem:[%s3240 + $0x70] sm:$0xff]
                  %3271 = vst [vmem:[%s3241 + $0x70] sm:$0xff] %v3270
                  %v3272 = vld [vmem:[%s3240 + $0x78] sm:$0xff]
                  %3273 = vst [vmem:[%s3241 + $0x78] sm:$0xff] %v3272
                  %v3274 = vld [vmem:[%s3240 + $0x80] sm:$0xff]
                  %3275 = vst [vmem:[%s3241 + $0x80] sm:$0xff] %v3274
                  %v3276 = vld [vmem:[%s3240 + $0x88] sm:$0xff]
                  %3277 = vst [vmem:[%s3241 + $0x88] sm:$0xff] %v3276
                  %v3278 = vld [vmem:[%s3240 + $0x90] sm:$0xff]
                  %3279 = vst [vmem:[%s3241 + $0x90] sm:$0xff] %v3278
                  %v3280 = vld [vmem:[%s3240 + $0x98] sm:$0xff]
                  %3281 = vst [vmem:[%s3241 + $0x98] sm:$0xff] %v3280
                  %v3282 = vld [vmem:[%s3240 + $0xa0] sm:$0xff]
                  %3283 = vst [vmem:[%s3241 + $0xa0] sm:$0xff] %v3282
                  %v3284 = vld [vmem:[%s3240 + $0xa8] sm:$0xff]
                  %3285 = vst [vmem:[%s3241 + $0xa8] sm:$0xff] %v3284
                  %v3286 = vld [vmem:[%s3240 + $0xb0] sm:$0xff]
                  %3287 = vst [vmem:[%s3241 + $0xb0] sm:$0xff] %v3286
                  %v3288 = vld [vmem:[%s3240 + $0xb8] sm:$0xff]
                  %3289 = vst [vmem:[%s3241 + $0xb8] sm:$0xff] %v3288
                  %v3290 = vld [vmem:[%s3240 + $0xc0] sm:$0xff]
                  %3291 = vst [vmem:[%s3241 + $0xc0] sm:$0xff] %v3290
                  %v3292 = vld [vmem:[%s3240 + $0xc8] sm:$0xff]
                  %3293 = vst [vmem:[%s3241 + $0xc8] sm:$0xff] %v3292
                  %v3294 = vld [vmem:[%s3240 + $0xd0] sm:$0xff]
                  %3295 = vst [vmem:[%s3241 + $0xd0] sm:$0xff] %v3294
                  %v3296 = vld [vmem:[%s3240 + $0xd8] sm:$0xff]
                  %3297 = vst [vmem:[%s3241 + $0xd8] sm:$0xff] %v3296
                  %v3298 = vld [vmem:[%s3240 + $0xe0] sm:$0xff]
                  %3299 = vst [vmem:[%s3241 + $0xe0] sm:$0xff] %v3298
                  %v3300 = vld [vmem:[%s3240 + $0xe8] sm:$0xff]
                  %3301 = vst [vmem:[%s3241 + $0xe8] sm:$0xff] %v3300
                  %v3302 = vld [vmem:[%s3240 + $0xf0] sm:$0xff]
                  %3303 = vst [vmem:[%s3241 + $0xf0] sm:$0xff] %v3302
                  %v3304 = vld [vmem:[%s3240 + $0xf8] sm:$0xff]
                  %3305 = vst [vmem:[%s3241 + $0xf8] sm:$0xff] %v3304
                  %s3306 = sadd.s32 1, %s3239
                  %p3307 = scmp.ge.s32.totalorder %s3306, %s3232
                  %s3308 = scalar_select %p3307, 0, %s3306
                  %s3309 = smul.u32 %s3308, 256
                  %s3310 = smul.u32 %s3308, 256
                  %s3311 = scalar_lea.vmem %s3103, %s3309 [#allocation2]
                  %s3312 = scalar_lea.vmem %s3114, %s3310
                $region107: #{_lambda_.1} parent=101 // loop_footer
                  %s3236 = sadd.s32 %s3234, 1
                $region108: #{_lambda_.1} parent=101 // loop_footer_branch
                  %3233 = sbr.rel target = $region104
                $region109: #{_lambda_.1} parent=101 // loop_exit
                  _
                %s3313 = sshrl.u32 %s3110, 5
                %s3314 = sand.u32 %s3110, 31
                %s3315 = smul.u32 %s3313, 32
                %s3316 = smul.u32 8, %s3315
                %s3317 = scalar_lea.vmem %s3103, %s3316 [#allocation2]
                %s3318 = smul.u32 8, %s3315
                %s3319 = scalar_lea.vmem %s3114, %s3318
                // While loop
                $region110: #{_lambda_.1} parent=101 // loop_pre_header
                  _
                $region111: #{_lambda_.1} parent=101 // loop_header
                  %s3321 = sphi 0, %s3323
                  %p3322 = scmp.ge.s32.totalorder %s3321, %s3314
                  %s3326 = sphi 0, %s3333
                  %s3327 = sphi %s3317, %s3336
                  %s3328 = sphi %s3319, %s3337
                $region112: #{_lambda_.1} parent=101 // loop_header_branch
                  %3325 = sbr.rel (%p3322) target = $region116
                $region113: #{_lambda_.1} parent=101 // loop_body
                  %v3329 = vld [vmem:[%s3327] sm:$0xff]
                  %3330 = vst [vmem:[%s3328] sm:$0xff] %v3329
                  %s3331 = sadd.s32 1, %s3326
                  %p3332 = scmp.ge.s32.totalorder %s3331, %s3314
                  %s3333 = scalar_select %p3332, 0, %s3331
                  %s3334 = smul.u32 %s3333, 8
                  %s3335 = smul.u32 %s3333, 8
                  %s3336 = scalar_lea.vmem %s3317, %s3334 [#allocation2]
                  %s3337 = scalar_lea.vmem %s3319, %s3335
                $region114: #{_lambda_.1} parent=101 // loop_footer
                  %s3323 = sadd.s32 %s3321, 1
                $region115: #{_lambda_.1} parent=101 // loop_footer_branch
                  %3320 = sbr.rel target = $region111
                $region116: #{_lambda_.1} parent=101 // loop_exit
                  _
              $region102: #{_lambda_.1} parent=79 // pred_fallthru
                _
              // Predicated region
              $region117: #{_lambda_.1} parent=79 // pred_check
                _
              $region118: #{_lambda_.1} parent=79 // pred_check_branch
                %3339 = sbr.rel target = $region120
              $region119: #{_lambda_.1} parent=79 // pred_region
                _
              $region120: #{_lambda_.1} parent=79 // pred_fallthru
                _
            $region80: #{_lambda_.1} parent=75 // pred_fallthru
              _
            // Predicated region
            $region81: #{_lambda_.1} parent=75 // pred_check
              _
            $region82: #{_lambda_.1} parent=75 // pred_check_branch
              %3121 = sbr.rel target = $region84
            $region83: #{_lambda_.1} parent=75 // pred_region
              %s3123 = ssub.s32 256, 1
              %s3124 = sshrl.u32 %s3110, 5
              // While loop
              $region85: #{_lambda_.1} parent=83 // loop_pre_header
                _
              $region86: #{_lambda_.1} parent=83 // loop_header
                %s3126 = sphi 0, %s3128
                %p3127 = scmp.ge.s32.totalorder %s3126, %s3124
                %s3131 = sphi 0, %s3200
                %s3132 = sphi %s3103, %s3203
                %s3133 = sphi %s3114, %s3204
              $region87: #{_lambda_.1} parent=83 // loop_header_branch
                %3130 = sbr.rel (%p3127) target = $region91
              $region88: #{_lambda_.1} parent=83 // loop_body
                %v3134 = vld [vmem:[%s3132] sm:%s3123]
                %3135 = vst [vmem:[%s3133] sm:%s3123] %v3134
                %v3136 = vld [vmem:[%s3132 + $0x8] sm:%s3123]
                %3137 = vst [vmem:[%s3133 + $0x8] sm:%s3123] %v3136
                %v3138 = vld [vmem:[%s3132 + $0x10] sm:%s3123]
                %3139 = vst [vmem:[%s3133 + $0x10] sm:%s3123] %v3138
                %v3140 = vld [vmem:[%s3132 + $0x18] sm:%s3123]
                %3141 = vst [vmem:[%s3133 + $0x18] sm:%s3123] %v3140
                %v3142 = vld [vmem:[%s3132 + $0x20] sm:%s3123]
                %3143 = vst [vmem:[%s3133 + $0x20] sm:%s3123] %v3142
                %v3144 = vld [vmem:[%s3132 + $0x28] sm:%s3123]
                %3145 = vst [vmem:[%s3133 + $0x28] sm:%s3123] %v3144
                %v3146 = vld [vmem:[%s3132 + $0x30] sm:%s3123]
                %3147 = vst [vmem:[%s3133 + $0x30] sm:%s3123] %v3146
                %v3148 = vld [vmem:[%s3132 + $0x38] sm:%s3123]
                %3149 = vst [vmem:[%s3133 + $0x38] sm:%s3123] %v3148
                %v3150 = vld [vmem:[%s3132 + $0x40] sm:%s3123]
                %3151 = vst [vmem:[%s3133 + $0x40] sm:%s3123] %v3150
                %v3152 = vld [vmem:[%s3132 + $0x48] sm:%s3123]
                %3153 = vst [vmem:[%s3133 + $0x48] sm:%s3123] %v3152
                %v3154 = vld [vmem:[%s3132 + $0x50] sm:%s3123]
                %3155 = vst [vmem:[%s3133 + $0x50] sm:%s3123] %v3154
                %v3156 = vld [vmem:[%s3132 + $0x58] sm:%s3123]
                %3157 = vst [vmem:[%s3133 + $0x58] sm:%s3123] %v3156
                %v3158 = vld [vmem:[%s3132 + $0x60] sm:%s3123]
                %3159 = vst [vmem:[%s3133 + $0x60] sm:%s3123] %v3158
                %v3160 = vld [vmem:[%s3132 + $0x68] sm:%s3123]
                %3161 = vst [vmem:[%s3133 + $0x68] sm:%s3123] %v3160
                %v3162 = vld [vmem:[%s3132 + $0x70] sm:%s3123]
                %3163 = vst [vmem:[%s3133 + $0x70] sm:%s3123] %v3162
                %v3164 = vld [vmem:[%s3132 + $0x78] sm:%s3123]
                %3165 = vst [vmem:[%s3133 + $0x78] sm:%s3123] %v3164
                %v3166 = vld [vmem:[%s3132 + $0x80] sm:%s3123]
                %3167 = vst [vmem:[%s3133 + $0x80] sm:%s3123] %v3166
                %v3168 = vld [vmem:[%s3132 + $0x88] sm:%s3123]
                %3169 = vst [vmem:[%s3133 + $0x88] sm:%s3123] %v3168
                %v3170 = vld [vmem:[%s3132 + $0x90] sm:%s3123]
                %3171 = vst [vmem:[%s3133 + $0x90] sm:%s3123] %v3170
                %v3172 = vld [vmem:[%s3132 + $0x98] sm:%s3123]
                %3173 = vst [vmem:[%s3133 + $0x98] sm:%s3123] %v3172
                %v3174 = vld [vmem:[%s3132 + $0xa0] sm:%s3123]
                %3175 = vst [vmem:[%s3133 + $0xa0] sm:%s3123] %v3174
                %v3176 = vld [vmem:[%s3132 + $0xa8] sm:%s3123]
                %3177 = vst [vmem:[%s3133 + $0xa8] sm:%s3123] %v3176
                %v3178 = vld [vmem:[%s3132 + $0xb0] sm:%s3123]
                %3179 = vst [vmem:[%s3133 + $0xb0] sm:%s3123] %v3178
                %v3180 = vld [vmem:[%s3132 + $0xb8] sm:%s3123]
                %3181 = vst [vmem:[%s3133 + $0xb8] sm:%s3123] %v3180
                %v3182 = vld [vmem:[%s3132 + $0xc0] sm:%s3123]
                %3183 = vst [vmem:[%s3133 + $0xc0] sm:%s3123] %v3182
                %v3184 = vld [vmem:[%s3132 + $0xc8] sm:%s3123]
                %3185 = vst [vmem:[%s3133 + $0xc8] sm:%s3123] %v3184
                %v3186 = vld [vmem:[%s3132 + $0xd0] sm:%s3123]
                %3187 = vst [vmem:[%s3133 + $0xd0] sm:%s3123] %v3186
                %v3188 = vld [vmem:[%s3132 + $0xd8] sm:%s3123]
                %3189 = vst [vmem:[%s3133 + $0xd8] sm:%s3123] %v3188
                %v3190 = vld [vmem:[%s3132 + $0xe0] sm:%s3123]
                %3191 = vst [vmem:[%s3133 + $0xe0] sm:%s3123] %v3190
                %v3192 = vld [vmem:[%s3132 + $0xe8] sm:%s3123]
                %3193 = vst [vmem:[%s3133 + $0xe8] sm:%s3123] %v3192
                %v3194 = vld [vmem:[%s3132 + $0xf0] sm:%s3123]
                %3195 = vst [vmem:[%s3133 + $0xf0] sm:%s3123] %v3194
                %v3196 = vld [vmem:[%s3132 + $0xf8] sm:%s3123]
                %3197 = vst [vmem:[%s3133 + $0xf8] sm:%s3123] %v3196
                %s3198 = sadd.s32 1, %s3131
                %p3199 = scmp.ge.s32.totalorder %s3198, %s3124
                %s3200 = scalar_select %p3199, 0, %s3198
                %s3201 = smul.u32 %s3200, 256
                %s3202 = smul.u32 %s3200, 256
                %s3203 = scalar_lea.vmem %s3103, %s3201 [#allocation2]
                %s3204 = scalar_lea.vmem %s3114, %s3202
              $region89: #{_lambda_.1} parent=83 // loop_footer
                %s3128 = sadd.s32 %s3126, 1
              $region90: #{_lambda_.1} parent=83 // loop_footer_branch
                %3125 = sbr.rel target = $region86
              $region91: #{_lambda_.1} parent=83 // loop_exit
                _
              %s3205 = sshrl.u32 %s3110, 5
              %s3206 = sand.u32 %s3110, 31
              %s3207 = smul.u32 %s3205, 32
              %s3208 = smul.u32 8, %s3207
              %s3209 = scalar_lea.vmem %s3103, %s3208 [#allocation2]
              %s3210 = smul.u32 8, %s3207
              %s3211 = scalar_lea.vmem %s3114, %s3210
              // While loop
              $region92: #{_lambda_.1} parent=83 // loop_pre_header
                _
              $region93: #{_lambda_.1} parent=83 // loop_header
                %s3213 = sphi 0, %s3215
                %p3214 = scmp.ge.s32.totalorder %s3213, %s3206
                %s3218 = sphi 0, %s3225
                %s3219 = sphi %s3209, %s3228
                %s3220 = sphi %s3211, %s3229
              $region94: #{_lambda_.1} parent=83 // loop_header_branch
                %3217 = sbr.rel (%p3214) target = $region98
              $region95: #{_lambda_.1} parent=83 // loop_body
                %v3221 = vld [vmem:[%s3219] sm:%s3123]
                %3222 = vst [vmem:[%s3220] sm:%s3123] %v3221
                %s3223 = sadd.s32 1, %s3218
                %p3224 = scmp.ge.s32.totalorder %s3223, %s3206
                %s3225 = scalar_select %p3224, 0, %s3223
                %s3226 = smul.u32 %s3225, 8
                %s3227 = smul.u32 %s3225, 8
                %s3228 = scalar_lea.vmem %s3209, %s3226 [#allocation2]
                %s3229 = scalar_lea.vmem %s3211, %s3227
              $region96: #{_lambda_.1} parent=83 // loop_footer
                %s3215 = sadd.s32 %s3213, 1
              $region97: #{_lambda_.1} parent=83 // loop_footer_branch
                %3212 = sbr.rel target = $region93
              $region98: #{_lambda_.1} parent=83 // loop_exit
                _
            $region84: #{_lambda_.1} parent=75 // pred_fallthru
              _
          $region76: #{_lambda_.1} parent=71 // pred_fallthru
            _
          %3340 = vnop
        $region72: #{_lambda_.1} parent=67 // pred_fallthru
          _
      $region68: #{_lambda_.1} parent=5 // pred_fallthru
        _
      %p3341 = scmp.le.s32.totalorder 2, %s18
      // Predicated region
      $region121: #{_lambda_.1} parent=5 // pred_check
        %p3342 = pneg %p3341
      $region122: #{_lambda_.1} parent=5 // pred_check_branch
        %3344 = sbr.rel (%p3342) target = $region124
      $region123: #{_lambda_.1} parent=5 // pred_region
        %s3345 = ssub.s32 %s18, 2
        // Predicated region
        $region125: #{_lambda_.1} parent=123 // pred_check
          %p3346 = pneg %p314
        $region126: #{_lambda_.1} parent=123 // pred_check_branch
          %3348 = sbr.rel (%p3346) target = $region128
        $region127: #{_lambda_.1} parent=123 // pred_region
          %s3349 = sand.u32 %s299, 1
          %s3350 = sand.u32 %s299, 1
          %s3351 = smul.addr %s3350, 256
          %s3352 = scalar_lea.vmem [#allocation2], %s3351
        $region128: #{_lambda_.1} parent=123 // pred_fallthru
          _
      $region124: #{_lambda_.1} parent=5 // pred_fallthru
        _
    $region6: #{_lambda_.1} parent=1 // loop_footer
      %s22 = sadd.s32 1, %s18
    $region7: #{_lambda_.1} parent=1 // loop_footer_branch
      %17 = sbr.rel target = $region3
    $region8: #{_lambda_.1} parent=1 // loop_exit
      _

</llo_original>
